<compile_context>
chip_gen: v6e
topology: v6e:2x2x1
jax: 0.10.0
libtpu: 0.0.40
codegen_flags: <defaults>
</compile_context>

<pallas_src>
import math

import jax
import jax.numpy as jnp
from jax.experimental import pallas as pl
from jax.experimental.pallas import tpu as pltpu


def _sigmoid(z):
    # exp + approx reciprocal both go to the EUP slot; keeps the divide off
    # the VPU critical path of the serial recurrences.
    return pl.reciprocal(1.0 + jnp.exp(-z), approx=True)


def nnn_kernel(x_ref,        # (T, N)      f32, N = S*B, column = s*B + b
               wih1_ref,     # (4*H1, 1)   f32
               whh1_ref,     # (4*H1, H1)  bf16
               b1_ref,       # (4*H1, 1)   f32   (b_ih + b_hh)
               wih2_ref,     # (H1, 4*H2)  bf16  (W_ih2^T)
               whh2_ref,     # (H2, 4*H2)  bf16  (W_hh2^T)
               b2_ref,       # (1, 4*H2)   f32   (b_ih + b_hh)
               wf_ref,       # (H2, 1)     bf16  (Wf1^T @ Wf2^T)
               bf_ref,       # (1, 1)      f32   (bf1 @ Wf2^T + bf2)
               out_ref,      # (B, 1)      f32
               gx_scr):      # VMEM scratch (S, B, 4*H2) f32
    T, N = x_ref.shape
    B = out_ref.shape[0]
    S = N // B
    H1 = whh1_ref.shape[1]     # 8
    H2 = whh2_ref.shape[0]     # 128

    wih1 = wih1_ref[...]
    whh1 = whh1_ref[...]
    b1 = b1_ref[...]

    # ------- LSTM1: column-major state (H1, N), T scalar steps (unrolled) ----
    def step1(t, carry):
        h, c = carry
        xt = x_ref[pl.ds(t, 1), :]                                    # (1, N)
        gates = (wih1 * xt                                            # (4H1, N)
                 + jnp.dot(whh1, h.astype(jnp.bfloat16),
                           preferred_element_type=jnp.float32)
                 + b1)
        i = _sigmoid(gates[0 * H1:1 * H1, :])
        f = _sigmoid(gates[1 * H1:2 * H1, :])
        g = jnp.tanh(gates[2 * H1:3 * H1, :])
        o = _sigmoid(gates[3 * H1:4 * H1, :])
        c = f * c + i * g
        h = o * jnp.tanh(c)
        return h, c

    h0 = jnp.zeros((H1, N), jnp.float32)
    c0 = jnp.zeros((H1, N), jnp.float32)
    h1, _ = jax.lax.fori_loop(0, T, step1, (h0, c0), unroll=True)

    # ------- hoisted LSTM2 input projection (one dense matmul) ---------------
    # rows of gx are indexed by s*B + b; scatter into (S, B, 4*H2) scratch so
    # each serial step below is a cheap leading-axis read.
    gx = jnp.dot(h1.T.astype(jnp.bfloat16), wih2_ref[...],
                 preferred_element_type=jnp.float32) + b2_ref[...]    # (N, 4H2)
    for s in range(S):                                                # static
        gx_scr[s] = gx[s * B:(s + 1) * B, :]

    whh2 = whh2_ref[...]

    # ------- LSTM2: row-major state (B, H2), S steps (unrolled) --------------
    def step2(s, carry):
        h, c = carry
        gates = gx_scr[s] + jnp.dot(h.astype(jnp.bfloat16), whh2,
                                    preferred_element_type=jnp.float32)
        i = _sigmoid(gates[:, 0 * H2:1 * H2])
        f = _sigmoid(gates[:, 1 * H2:2 * H2])
        g = jnp.tanh(gates[:, 2 * H2:3 * H2])
        o = _sigmoid(gates[:, 3 * H2:4 * H2])
        c = f * c + i * g
        h = o * jnp.tanh(c)
        return h, c

    h20 = jnp.zeros((B, H2), jnp.float32)
    c20 = jnp.zeros((B, H2), jnp.float32)
    h2, _ = jax.lax.fori_loop(0, S, step2, (h20, c20), unroll=True)

    # ------- fused fnn1 + fnn2 (folded in the wrapper) ------------------------
    out_ref[...] = jnp.dot(h2.astype(jnp.bfloat16), wf_ref[...],
                           preferred_element_type=jnp.float32) + bf_ref[...]


def nnn_forward(x, params):
    (W_ih1, W_hh1, b_ih1, b_hh1,
     W_ih2, W_hh2, b_ih2, b_hh2,
     Wf1, bf1, Wf2, bf2) = params
    B, S, T = x.shape
    H1 = W_hh1.shape[1]
    H2 = W_hh2.shape[1]
    N = S * B

    # time-major, column index = s*B + b
    x_k = jnp.transpose(x, (2, 1, 0)).reshape(T, N).astype(jnp.float32)

    # fold fnn2 into fnn1 (exact up to rounding)
    wf = (Wf1.T @ Wf2.T).astype(jnp.bfloat16)              # (128, 1)
    bfold = (bf1 @ Wf2.T + bf2).reshape(1, 1)              # (1, 1)

    args = (
        x_k,
        W_ih1.astype(jnp.float32),                         # (32, 1)
        W_hh1.astype(jnp.bfloat16),                        # (32, 8)
        (b_ih1 + b_hh1).reshape(4 * H1, 1),                # (32, 1)
        W_ih2.T.astype(jnp.bfloat16),                      # (8, 512)
        W_hh2.T.astype(jnp.bfloat16),                      # (128, 512)
        (b_ih2 + b_hh2).reshape(1, 4 * H2),                # (1, 512)
        wf,                                                # (128, 1)
        bfold,                                             # (1, 1)
    )

    return pl.pallas_call(
        nnn_kernel,
        out_shape=jax.ShapeDtypeStruct((B, 1), jnp.float32),
        in_specs=[pl.BlockSpec(memory_space=pltpu.MemorySpace.VMEM)
                  for _ in args],
        out_specs=pl.BlockSpec(memory_space=pltpu.MemorySpace.VMEM),
        scratch_shapes=[pltpu.VMEM((S, B, 4 * H2), jnp.float32)],
    )(*args)


# ----------------------------- pure-JAX reference ---------------------------
def _lstm_final_h(x_seq, W_ih, W_hh, b_ih, b_hh):
    # x_seq: (batch, T, in) -> final hidden (batch, H); PyTorch gate order ifgo
    H = W_hh.shape[1]
    nb = x_seq.shape[0]

    def step(carry, xt):
        h, c = carry
        gates = xt @ W_ih.T + h @ W_hh.T + b_ih + b_hh
        i, f, g, o = jnp.split(gates, 4, axis=-1)
        c = jax.nn.sigmoid(f) * c + jax.nn.sigmoid(i) * jnp.tanh(g)
        h = jax.nn.sigmoid(o) * jnp.tanh(c)
        return (h, c), None

    init = (jnp.zeros((nb, H), jnp.float32), jnp.zeros((nb, H), jnp.float32))
    (hT, _), _ = jax.lax.scan(step, init, jnp.swapaxes(x_seq, 0, 1))
    return hT


def nnn_reference(x, params):
    (W_ih1, W_hh1, b_ih1, b_hh1,
     W_ih2, W_hh2, b_ih2, b_hh2,
     Wf1, bf1, Wf2, bf2) = params
    B, S, T = x.shape
    h1 = _lstm_final_h(x.reshape(B * S, T, 1), W_ih1, W_hh1, b_ih1, b_hh1)
    h1 = h1.reshape(B, S, W_hh1.shape[1])
    h2 = _lstm_final_h(h1, W_ih2, W_hh2, b_ih2, b_hh2)      # == output[:, -1, :]
    o3 = h2 @ Wf1.T + bf1
    return o3 @ Wf2.T + bf2


def init_params(key):
    ks = jax.random.split(key, 12)

    def u(k, shape, bound):
        return jax.random.uniform(k, shape, jnp.float32, -bound, bound)

    k1 = 1.0 / math.sqrt(8.0)
    k2 = 1.0 / math.sqrt(128.0)
    kl2 = 1.0 / math.sqrt(64.0)
    return (
        u(ks[0], (32, 1), k1), u(ks[1], (32, 8), k1),
        u(ks[2], (32,), k1), u(ks[3], (32,), k1),
        u(ks[4], (512, 8), k2), u(ks[5], (512, 128), k2),
        u(ks[6], (512,), k2), u(ks[7], (512,), k2),
        u(ks[8], (64, 128), k2), u(ks[9], (64,), k2),
        u(ks[10], (1, 64), kl2), u(ks[11], (1,), kl2),
    )


if __name__ == "__main__":
    key = jax.random.PRNGKey(0)
    k_x, k_p = jax.random.split(key)

    B, S, T = 2, 8, 16                      # batch, "sequence" dim 1, inner dim 2
    x = jax.random.normal(k_x, (B, S, T), jnp.float32)
    params = init_params(k_p)

    out = jax.jit(nnn_forward)(x, params)
    out = jax.block_until_ready(out)

    ref = nnn_reference(x, params)
    err = float(jnp.max(jnp.abs(out - ref)))
    assert out.shape == (B, 1), out.shape
    assert err < 5e-2, f"max abs error {err}"
    print("KERNEL_OK")
</pallas_src>

<mosaic_0001>
module attributes {stable_mosaic.version = 11 : i64} {
  func.func @nnn_kernel(%arg0: memref<16x16xf32, #tpu.memory_space<vmem>>, %arg1: memref<32x1xf32, #tpu.memory_space<vmem>>, %arg2: memref<32x8xbf16, #tpu.memory_space<vmem>>, %arg3: memref<32x1xf32, #tpu.memory_space<vmem>>, %arg4: memref<8x512xbf16, #tpu.memory_space<vmem>>, %arg5: memref<128x512xbf16, #tpu.memory_space<vmem>>, %arg6: memref<1x512xf32, #tpu.memory_space<vmem>>, %arg7: memref<128x1xbf16, #tpu.memory_space<vmem>>, %arg8: memref<1x1xf32, #tpu.memory_space<vmem>>, %arg9: memref<2x1xf32, #tpu.memory_space<vmem>>, %arg10: memref<8x2x512xf32, #tpu.memory_space<vmem>>) attributes {dimension_semantics = [], scalar_prefetch = 0 : i64, scratch_operands = 1 : i64, tpu.core_type = #tpu.core_type<tc>} {
    %c0 = arith.constant 0 : index
    %c0_0 = arith.constant 0 : index
    %0 = vector.load %arg1[%c0, %c0_0] : memref<32x1xf32, #tpu.memory_space<vmem>>, vector<32x1xf32>
    %c0_1 = arith.constant 0 : index
    %c0_2 = arith.constant 0 : index
    %1 = vector.load %arg2[%c0_1, %c0_2] : memref<32x8xbf16, #tpu.memory_space<vmem>>, vector<32x8xbf16>
    %c0_3 = arith.constant 0 : index
    %c0_4 = arith.constant 0 : index
    %2 = vector.load %arg3[%c0_3, %c0_4] : memref<32x1xf32, #tpu.memory_space<vmem>>, vector<32x1xf32>
    %cst = arith.constant 0.000000e+00 : f32
    %3 = vector.broadcast %cst : f32 to vector<8x16xf32>
    %cst_5 = arith.constant 0.000000e+00 : f32
    %4 = vector.broadcast %cst_5 : f32 to vector<8x16xf32>
    %c0_i32 = arith.constant 0 : i32
    %5 = arith.index_cast %c0_i32 : i32 to index
    %c0_6 = arith.constant 0 : index
    %6 = vector.load %arg0[%5, %c0_6] : memref<16x16xf32, #tpu.memory_space<vmem>>, vector<1x16xf32>
    %7 = vector.broadcast %0 : vector<32x1xf32> to vector<32x16xf32>
    %8 = vector.broadcast %6 : vector<1x16xf32> to vector<32x16xf32>
    %9 = arith.mulf %7, %8 : vector<32x16xf32>
    %10 = arith.truncf %3 : vector<8x16xf32> to vector<8x16xbf16>
    %cst_7 = arith.constant dense<0.000000e+00> : vector<32x16xf32>
    %11 = tpu.matmul %1, %10, %cst_7 {dimension_numbers = #tpu.dot_dimension_numbers<[1], [0], [0], [1], [0, 0, 1, 1], [], []>} : vector<32x8xbf16>, vector<8x16xbf16>, vector<32x16xf32> -> vector<32x16xf32>
    %12 = arith.addf %9, %11 : vector<32x16xf32>
    %13 = vector.broadcast %2 : vector<32x1xf32> to vector<32x16xf32>
    %14 = arith.addf %12, %13 : vector<32x16xf32>
    %15 = vector.extract_strided_slice %14 {offsets = [0, 0], sizes = [8, 16], strides = [1, 1]} : vector<32x16xf32> to vector<8x16xf32>
    %cst_8 = arith.constant 0.000000e+00 : f32
    %16 = vector.broadcast %cst_8 : f32 to vector<8x16xf32>
    %17 = arith.subf %16, %15 : vector<8x16xf32>
    %18 = math.exp %17 : vector<8x16xf32>
    %cst_9 = arith.constant 1.000000e+00 : f32
    %19 = vector.broadcast %cst_9 : f32 to vector<8x16xf32>
    %20 = arith.addf %19, %18 : vector<8x16xf32>
    %21 = tpu.reciprocal %20 {approx = true} : vector<8x16xf32> -> vector<8x16xf32>
    %22 = vector.extract_strided_slice %14 {offsets = [8, 0], sizes = [8, 16], strides = [1, 1]} : vector<32x16xf32> to vector<8x16xf32>
    %cst_10 = arith.constant 0.000000e+00 : f32
    %23 = vector.broadcast %cst_10 : f32 to vector<8x16xf32>
    %24 = arith.subf %23, %22 : vector<8x16xf32>
    %25 = math.exp %24 : vector<8x16xf32>
    %cst_11 = arith.constant 1.000000e+00 : f32
    %26 = vector.broadcast %cst_11 : f32 to vector<8x16xf32>
    %27 = arith.addf %26, %25 : vector<8x16xf32>
    %28 = tpu.reciprocal %27 {approx = true} : vector<8x16xf32> -> vector<8x16xf32>
    %29 = vector.extract_strided_slice %14 {offsets = [16, 0], sizes = [8, 16], strides = [1, 1]} : vector<32x16xf32> to vector<8x16xf32>
    %30 = math.tanh %29 : vector<8x16xf32>
    %31 = vector.extract_strided_slice %14 {offsets = [24, 0], sizes = [8, 16], strides = [1, 1]} : vector<32x16xf32> to vector<8x16xf32>
    %cst_12 = arith.constant 0.000000e+00 : f32
    %32 = vector.broadcast %cst_12 : f32 to vector<8x16xf32>
    %33 = arith.subf %32, %31 : vector<8x16xf32>
    %34 = math.exp %33 : vector<8x16xf32>
    %cst_13 = arith.constant 1.000000e+00 : f32
    %35 = vector.broadcast %cst_13 : f32 to vector<8x16xf32>
    %36 = arith.addf %35, %34 : vector<8x16xf32>
    %37 = tpu.reciprocal %36 {approx = true} : vector<8x16xf32> -> vector<8x16xf32>
    %38 = arith.mulf %28, %4 : vector<8x16xf32>
    %39 = arith.mulf %21, %30 : vector<8x16xf32>
    %40 = arith.addf %38, %39 : vector<8x16xf32>
    %41 = math.tanh %40 : vector<8x16xf32>
    %42 = arith.mulf %37, %41 : vector<8x16xf32>
    %c1_i32 = arith.constant 1 : i32
    %43 = arith.index_cast %c1_i32 : i32 to index
    %c0_14 = arith.constant 0 : index
    %44 = vector.load %arg0[%43, %c0_14] : memref<16x16xf32, #tpu.memory_space<vmem>>, vector<1x16xf32>
    %45 = vector.broadcast %0 : vector<32x1xf32> to vector<32x16xf32>
    %46 = vector.broadcast %44 : vector<1x16xf32> to vector<32x16xf32>
    %47 = arith.mulf %45, %46 : vector<32x16xf32>
    %48 = arith.truncf %42 : vector<8x16xf32> to vector<8x16xbf16>
    %cst_15 = arith.constant dense<0.000000e+00> : vector<32x16xf32>
    %49 = tpu.matmul %1, %48, %cst_15 {dimension_numbers = #tpu.dot_dimension_numbers<[1], [0], [0], [1], [0, 0, 1, 1], [], []>} : vector<32x8xbf16>, vector<8x16xbf16>, vector<32x16xf32> -> vector<32x16xf32>
    %50 = arith.addf %47, %49 : vector<32x16xf32>
    %51 = vector.broadcast %2 : vector<32x1xf32> to vector<32x16xf32>
    %52 = arith.addf %50, %51 : vector<32x16xf32>
    %53 = vector.extract_strided_slice %52 {offsets = [0, 0], sizes = [8, 16], strides = [1, 1]} : vector<32x16xf32> to vector<8x16xf32>
    %cst_16 = arith.constant 0.000000e+00 : f32
    %54 = vector.broadcast %cst_16 : f32 to vector<8x16xf32>
    %55 = arith.subf %54, %53 : vector<8x16xf32>
    %56 = math.exp %55 : vector<8x16xf32>
    %cst_17 = arith.constant 1.000000e+00 : f32
    %57 = vector.broadcast %cst_17 : f32 to vector<8x16xf32>
    %58 = arith.addf %57, %56 : vector<8x16xf32>
    %59 = tpu.reciprocal %58 {approx = true} : vector<8x16xf32> -> vector<8x16xf32>
    %60 = vector.extract_strided_slice %52 {offsets = [8, 0], sizes = [8, 16], strides = [1, 1]} : vector<32x16xf32> to vector<8x16xf32>
    %cst_18 = arith.constant 0.000000e+00 : f32
    %61 = vector.broadcast %cst_18 : f32 to vector<8x16xf32>
    %62 = arith.subf %61, %60 : vector<8x16xf32>
    %63 = math.exp %62 : vector<8x16xf32>
    %cst_19 = arith.constant 1.000000e+00 : f32
    %64 = vector.broadcast %cst_19 : f32 to vector<8x16xf32>
    %65 = arith.addf %64, %63 : vector<8x16xf32>
    %66 = tpu.reciprocal %65 {approx = true} : vector<8x16xf32> -> vector<8x16xf32>
    %67 = vector.extract_strided_slice %52 {offsets = [16, 0], sizes = [8, 16], strides = [1, 1]} : vector<32x16xf32> to vector<8x16xf32>
    %68 = math.tanh %67 : vector<8x16xf32>
    %69 = vector.extract_strided_slice %52 {offsets = [24, 0], sizes = [8, 16], strides = [1, 1]} : vector<32x16xf32> to vector<8x16xf32>
    %cst_20 = arith.constant 0.000000e+00 : f32
    %70 = vector.broadcast %cst_20 : f32 to vector<8x16xf32>
    %71 = arith.subf %70, %69 : vector<8x16xf32>
    %72 = math.exp %71 : vector<8x16xf32>
    %cst_21 = arith.constant 1.000000e+00 : f32
    %73 = vector.broadcast %cst_21 : f32 to vector<8x16xf32>
    %74 = arith.addf %73, %72 : vector<8x16xf32>
    %75 = tpu.reciprocal %74 {approx = true} : vector<8x16xf32> -> vector<8x16xf32>
    %76 = arith.mulf %66, %40 : vector<8x16xf32>
    %77 = arith.mulf %59, %68 : vector<8x16xf32>
    %78 = arith.addf %76, %77 : vector<8x16xf32>
    %79 = math.tanh %78 : vector<8x16xf32>
    %80 = arith.mulf %75, %79 : vector<8x16xf32>
    %c2_i32 = arith.constant 2 : i32
    %81 = arith.index_cast %c2_i32 : i32 to index
    %c0_22 = arith.constant 0 : index
    %82 = vector.load %arg0[%81, %c0_22] : memref<16x16xf32, #tpu.memory_space<vmem>>, vector<1x16xf32>
    %83 = vector.broadcast %0 : vector<32x1xf32> to vector<32x16xf32>
    %84 = vector.broadcast %82 : vector<1x16xf32> to vector<32x16xf32>
    %85 = arith.mulf %83, %84 : vector<32x16xf32>
    %86 = arith.truncf %80 : vector<8x16xf32> to vector<8x16xbf16>
    %cst_23 = arith.constant dense<0.000000e+00> : vector<32x16xf32>
    %87 = tpu.matmul %1, %86, %cst_23 {dimension_numbers = #tpu.dot_dimension_numbers<[1], [0], [0], [1], [0, 0, 1, 1], [], []>} : vector<32x8xbf16>, vector<8x16xbf16>, vector<32x16xf32> -> vector<32x16xf32>
    %88 = arith.addf %85, %87 : vector<32x16xf32>
    %89 = vector.broadcast %2 : vector<32x1xf32> to vector<32x16xf32>
    %90 = arith.addf %88, %89 : vector<32x16xf32>
    %91 = vector.extract_strided_slice %90 {offsets = [0, 0], sizes = [8, 16], strides = [1, 1]} : vector<32x16xf32> to vector<8x16xf32>
    %cst_24 = arith.constant 0.000000e+00 : f32
    %92 = vector.broadcast %cst_24 : f32 to vector<8x16xf32>
    %93 = arith.subf %92, %91 : vector<8x16xf32>
    %94 = math.exp %93 : vector<8x16xf32>
    %cst_25 = arith.constant 1.000000e+00 : f32
    %95 = vector.broadcast %cst_25 : f32 to vector<8x16xf32>
    %96 = arith.addf %95, %94 : vector<8x16xf32>
    %97 = tpu.reciprocal %96 {approx = true} : vector<8x16xf32> -> vector<8x16xf32>
    %98 = vector.extract_strided_slice %90 {offsets = [8, 0], sizes = [8, 16], strides = [1, 1]} : vector<32x16xf32> to vector<8x16xf32>
    %cst_26 = arith.constant 0.000000e+00 : f32
    %99 = vector.broadcast %cst_26 : f32 to vector<8x16xf32>
    %100 = arith.subf %99, %98 : vector<8x16xf32>
    %101 = math.exp %100 : vector<8x16xf32>
    %cst_27 = arith.constant 1.000000e+00 : f32
    %102 = vector.broadcast %cst_27 : f32 to vector<8x16xf32>
    %103 = arith.addf %102, %101 : vector<8x16xf32>
    %104 = tpu.reciprocal %103 {approx = true} : vector<8x16xf32> -> vector<8x16xf32>
    %105 = vector.extract_strided_slice %90 {offsets = [16, 0], sizes = [8, 16], strides = [1, 1]} : vector<32x16xf32> to vector<8x16xf32>
    %106 = math.tanh %105 : vector<8x16xf32>
    %107 = vector.extract_strided_slice %90 {offsets = [24, 0], sizes = [8, 16], strides = [1, 1]} : vector<32x16xf32> to vector<8x16xf32>
    %cst_28 = arith.constant 0.000000e+00 : f32
    %108 = vector.broadcast %cst_28 : f32 to vector<8x16xf32>
    %109 = arith.subf %108, %107 : vector<8x16xf32>
    %110 = math.exp %109 : vector<8x16xf32>
    %cst_29 = arith.constant 1.000000e+00 : f32
    %111 = vector.broadcast %cst_29 : f32 to vector<8x16xf32>
    %112 = arith.addf %111, %110 : vector<8x16xf32>
    %113 = tpu.reciprocal %112 {approx = true} : vector<8x16xf32> -> vector<8x16xf32>
    %114 = arith.mulf %104, %78 : vector<8x16xf32>
    %115 = arith.mulf %97, %106 : vector<8x16xf32>
    %116 = arith.addf %114, %115 : vector<8x16xf32>
    %117 = math.tanh %116 : vector<8x16xf32>
    %118 = arith.mulf %113, %117 : vector<8x16xf32>
    %c3_i32 = arith.constant 3 : i32
    %119 = arith.index_cast %c3_i32 : i32 to index
    %c0_30 = arith.constant 0 : index
    %120 = vector.load %arg0[%119, %c0_30] : memref<16x16xf32, #tpu.memory_space<vmem>>, vector<1x16xf32>
    %121 = vector.broadcast %0 : vector<32x1xf32> to vector<32x16xf32>
    %122 = vector.broadcast %120 : vector<1x16xf32> to vector<32x16xf32>
    %123 = arith.mulf %121, %122 : vector<32x16xf32>
    %124 = arith.truncf %118 : vector<8x16xf32> to vector<8x16xbf16>
    %cst_31 = arith.constant dense<0.000000e+00> : vector<32x16xf32>
    %125 = tpu.matmul %1, %124, %cst_31 {dimension_numbers = #tpu.dot_dimension_numbers<[1], [0], [0], [1], [0, 0, 1, 1], [], []>} : vector<32x8xbf16>, vector<8x16xbf16>, vector<32x16xf32> -> vector<32x16xf32>
    %126 = arith.addf %123, %125 : vector<32x16xf32>
    %127 = vector.broadcast %2 : vector<32x1xf32> to vector<32x16xf32>
    %128 = arith.addf %126, %127 : vector<32x16xf32>
    %129 = vector.extract_strided_slice %128 {offsets = [0, 0], sizes = [8, 16], strides = [1, 1]} : vector<32x16xf32> to vector<8x16xf32>
    %cst_32 = arith.constant 0.000000e+00 : f32
    %130 = vector.broadcast %cst_32 : f32 to vector<8x16xf32>
    %131 = arith.subf %130, %129 : vector<8x16xf32>
    %132 = math.exp %131 : vector<8x16xf32>
    %cst_33 = arith.constant 1.000000e+00 : f32
    %133 = vector.broadcast %cst_33 : f32 to vector<8x16xf32>
    %134 = arith.addf %133, %132 : vector<8x16xf32>
    %135 = tpu.reciprocal %134 {approx = true} : vector<8x16xf32> -> vector<8x16xf32>
    %136 = vector.extract_strided_slice %128 {offsets = [8, 0], sizes = [8, 16], strides = [1, 1]} : vector<32x16xf32> to vector<8x16xf32>
    %cst_34 = arith.constant 0.000000e+00 : f32
    %137 = vector.broadcast %cst_34 : f32 to vector<8x16xf32>
    %138 = arith.subf %137, %136 : vector<8x16xf32>
    %139 = math.exp %138 : vector<8x16xf32>
    %cst_35 = arith.constant 1.000000e+00 : f32
    %140 = vector.broadcast %cst_35 : f32 to vector<8x16xf32>
    %141 = arith.addf %140, %139 : vector<8x16xf32>
    %142 = tpu.reciprocal %141 {approx = true} : vector<8x16xf32> -> vector<8x16xf32>
    %143 = vector.extract_strided_slice %128 {offsets = [16, 0], sizes = [8, 16], strides = [1, 1]} : vector<32x16xf32> to vector<8x16xf32>
    %144 = math.tanh %143 : vector<8x16xf32>
    %145 = vector.extract_strided_slice %128 {offsets = [24, 0], sizes = [8, 16], strides = [1, 1]} : vector<32x16xf32> to vector<8x16xf32>
    %cst_36 = arith.constant 0.000000e+00 : f32
    %146 = vector.broadcast %cst_36 : f32 to vector<8x16xf32>
    %147 = arith.subf %146, %145 : vector<8x16xf32>
    %148 = math.exp %147 : vector<8x16xf32>
    %cst_37 = arith.constant 1.000000e+00 : f32
    %149 = vector.broadcast %cst_37 : f32 to vector<8x16xf32>
    %150 = arith.addf %149, %148 : vector<8x16xf32>
    %151 = tpu.reciprocal %150 {approx = true} : vector<8x16xf32> -> vector<8x16xf32>
    %152 = arith.mulf %142, %116 : vector<8x16xf32>
    %153 = arith.mulf %135, %144 : vector<8x16xf32>
    %154 = arith.addf %152, %153 : vector<8x16xf32>
    %155 = math.tanh %154 : vector<8x16xf32>
    %156 = arith.mulf %151, %155 : vector<8x16xf32>
    %c4_i32 = arith.constant 4 : i32
    %157 = arith.index_cast %c4_i32 : i32 to index
    %c0_38 = arith.constant 0 : index
    %158 = vector.load %arg0[%157, %c0_38] : memref<16x16xf32, #tpu.memory_space<vmem>>, vector<1x16xf32>
    %159 = vector.broadcast %0 : vector<32x1xf32> to vector<32x16xf32>
    %160 = vector.broadcast %158 : vector<1x16xf32> to vector<32x16xf32>
    %161 = arith.mulf %159, %160 : vector<32x16xf32>
    %162 = arith.truncf %156 : vector<8x16xf32> to vector<8x16xbf16>
    %cst_39 = arith.constant dense<0.000000e+00> : vector<32x16xf32>
    %163 = tpu.matmul %1, %162, %cst_39 {dimension_numbers = #tpu.dot_dimension_numbers<[1], [0], [0], [1], [0, 0, 1, 1], [], []>} : vector<32x8xbf16>, vector<8x16xbf16>, vector<32x16xf32> -> vector<32x16xf32>
    %164 = arith.addf %161, %163 : vector<32x16xf32>
    %165 = vector.broadcast %2 : vector<32x1xf32> to vector<32x16xf32>
    %166 = arith.addf %164, %165 : vector<32x16xf32>
    %167 = vector.extract_strided_slice %166 {offsets = [0, 0], sizes = [8, 16], strides = [1, 1]} : vector<32x16xf32> to vector<8x16xf32>
    %cst_40 = arith.constant 0.000000e+00 : f32
    %168 = vector.broadcast %cst_40 : f32 to vector<8x16xf32>
    %169 = arith.subf %168, %167 : vector<8x16xf32>
    %170 = math.exp %169 : vector<8x16xf32>
    %cst_41 = arith.constant 1.000000e+00 : f32
    %171 = vector.broadcast %cst_41 : f32 to vector<8x16xf32>
    %172 = arith.addf %171, %170 : vector<8x16xf32>
    %173 = tpu.reciprocal %172 {approx = true} : vector<8x16xf32> -> vector<8x16xf32>
    %174 = vector.extract_strided_slice %166 {offsets = [8, 0], sizes = [8, 16], strides = [1, 1]} : vector<32x16xf32> to vector<8x16xf32>
    %cst_42 = arith.constant 0.000000e+00 : f32
    %175 = vector.broadcast %cst_42 : f32 to vector<8x16xf32>
    %176 = arith.subf %175, %174 : vector<8x16xf32>
    %177 = math.exp %176 : vector<8x16xf32>
    %cst_43 = arith.constant 1.000000e+00 : f32
    %178 = vector.broadcast %cst_43 : f32 to vector<8x16xf32>
    %179 = arith.addf %178, %177 : vector<8x16xf32>
    %180 = tpu.reciprocal %179 {approx = true} : vector<8x16xf32> -> vector<8x16xf32>
    %181 = vector.extract_strided_slice %166 {offsets = [16, 0], sizes = [8, 16], strides = [1, 1]} : vector<32x16xf32> to vector<8x16xf32>
    %182 = math.tanh %181 : vector<8x16xf32>
    %183 = vector.extract_strided_slice %166 {offsets = [24, 0], sizes = [8, 16], strides = [1, 1]} : vector<32x16xf32> to vector<8x16xf32>
    %cst_44 = arith.constant 0.000000e+00 : f32
    %184 = vector.broadcast %cst_44 : f32 to vector<8x16xf32>
    %185 = arith.subf %184, %183 : vector<8x16xf32>
    %186 = math.exp %185 : vector<8x16xf32>
    %cst_45 = arith.constant 1.000000e+00 : f32
    %187 = vector.broadcast %cst_45 : f32 to vector<8x16xf32>
    %188 = arith.addf %187, %186 : vector<8x16xf32>
    %189 = tpu.reciprocal %188 {approx = true} : vector<8x16xf32> -> vector<8x16xf32>
    %190 = arith.mulf %180, %154 : vector<8x16xf32>
    %191 = arith.mulf %173, %182 : vector<8x16xf32>
    %192 = arith.addf %190, %191 : vector<8x16xf32>
    %193 = math.tanh %192 : vector<8x16xf32>
    %194 = arith.mulf %189, %193 : vector<8x16xf32>
    %c5_i32 = arith.constant 5 : i32
    %195 = arith.index_cast %c5_i32 : i32 to index
    %c0_46 = arith.constant 0 : index
    %196 = vector.load %arg0[%195, %c0_46] : memref<16x16xf32, #tpu.memory_space<vmem>>, vector<1x16xf32>
    %197 = vector.broadcast %0 : vector<32x1xf32> to vector<32x16xf32>
    %198 = vector.broadcast %196 : vector<1x16xf32> to vector<32x16xf32>
    %199 = arith.mulf %197, %198 : vector<32x16xf32>
    %200 = arith.truncf %194 : vector<8x16xf32> to vector<8x16xbf16>
    %cst_47 = arith.constant dense<0.000000e+00> : vector<32x16xf32>
    %201 = tpu.matmul %1, %200, %cst_47 {dimension_numbers = #tpu.dot_dimension_numbers<[1], [0], [0], [1], [0, 0, 1, 1], [], []>} : vector<32x8xbf16>, vector<8x16xbf16>, vector<32x16xf32> -> vector<32x16xf32>
    %202 = arith.addf %199, %201 : vector<32x16xf32>
    %203 = vector.broadcast %2 : vector<32x1xf32> to vector<32x16xf32>
    %204 = arith.addf %202, %203 : vector<32x16xf32>
    %205 = vector.extract_strided_slice %204 {offsets = [0, 0], sizes = [8, 16], strides = [1, 1]} : vector<32x16xf32> to vector<8x16xf32>
    %cst_48 = arith.constant 0.000000e+00 : f32
    %206 = vector.broadcast %cst_48 : f32 to vector<8x16xf32>
    %207 = arith.subf %206, %205 : vector<8x16xf32>
    %208 = math.exp %207 : vector<8x16xf32>
    %cst_49 = arith.constant 1.000000e+00 : f32
    %209 = vector.broadcast %cst_49 : f32 to vector<8x16xf32>
    %210 = arith.addf %209, %208 : vector<8x16xf32>
    %211 = tpu.reciprocal %210 {approx = true} : vector<8x16xf32> -> vector<8x16xf32>
    %212 = vector.extract_strided_slice %204 {offsets = [8, 0], sizes = [8, 16], strides = [1, 1]} : vector<32x16xf32> to vector<8x16xf32>
    %cst_50 = arith.constant 0.000000e+00 : f32
    %213 = vector.broadcast %cst_50 : f32 to vector<8x16xf32>
    %214 = arith.subf %213, %212 : vector<8x16xf32>
    %215 = math.exp %214 : vector<8x16xf32>
    %cst_51 = arith.constant 1.000000e+00 : f32
    %216 = vector.broadcast %cst_51 : f32 to vector<8x16xf32>
    %217 = arith.addf %216, %215 : vector<8x16xf32>
    %218 = tpu.reciprocal %217 {approx = true} : vector<8x16xf32> -> vector<8x16xf32>
    %219 = vector.extract_strided_slice %204 {offsets = [16, 0], sizes = [8, 16], strides = [1, 1]} : vector<32x16xf32> to vector<8x16xf32>
    %220 = math.tanh %219 : vector<8x16xf32>
    %221 = vector.extract_strided_slice %204 {offsets = [24, 0], sizes = [8, 16], strides = [1, 1]} : vector<32x16xf32> to vector<8x16xf32>
    %cst_52 = arith.constant 0.000000e+00 : f32
    %222 = vector.broadcast %cst_52 : f32 to vector<8x16xf32>
    %223 = arith.subf %222, %221 : vector<8x16xf32>
    %224 = math.exp %223 : vector<8x16xf32>
    %cst_53 = arith.constant 1.000000e+00 : f32
    %225 = vector.broadcast %cst_53 : f32 to vector<8x16xf32>
    %226 = arith.addf %225, %224 : vector<8x16xf32>
    %227 = tpu.reciprocal %226 {approx = true} : vector<8x16xf32> -> vector<8x16xf32>
    %228 = arith.mulf %218, %192 : vector<8x16xf32>
    %229 = arith.mulf %211, %220 : vector<8x16xf32>
    %230 = arith.addf %228, %229 : vector<8x16xf32>
    %231 = math.tanh %230 : vector<8x16xf32>
    %232 = arith.mulf %227, %231 : vector<8x16xf32>
    %c6_i32 = arith.constant 6 : i32
    %233 = arith.index_cast %c6_i32 : i32 to index
    %c0_54 = arith.constant 0 : index
    %234 = vector.load %arg0[%233, %c0_54] : memref<16x16xf32, #tpu.memory_space<vmem>>, vector<1x16xf32>
    %235 = vector.broadcast %0 : vector<32x1xf32> to vector<32x16xf32>
    %236 = vector.broadcast %234 : vector<1x16xf32> to vector<32x16xf32>
    %237 = arith.mulf %235, %236 : vector<32x16xf32>
    %238 = arith.truncf %232 : vector<8x16xf32> to vector<8x16xbf16>
    %cst_55 = arith.constant dense<0.000000e+00> : vector<32x16xf32>
    %239 = tpu.matmul %1, %238, %cst_55 {dimension_numbers = #tpu.dot_dimension_numbers<[1], [0], [0], [1], [0, 0, 1, 1], [], []>} : vector<32x8xbf16>, vector<8x16xbf16>, vector<32x16xf32> -> vector<32x16xf32>
    %240 = arith.addf %237, %239 : vector<32x16xf32>
    %241 = vector.broadcast %2 : vector<32x1xf32> to vector<32x16xf32>
    %242 = arith.addf %240, %241 : vector<32x16xf32>
    %243 = vector.extract_strided_slice %242 {offsets = [0, 0], sizes = [8, 16], strides = [1, 1]} : vector<32x16xf32> to vector<8x16xf32>
    %cst_56 = arith.constant 0.000000e+00 : f32
    %244 = vector.broadcast %cst_56 : f32 to vector<8x16xf32>
    %245 = arith.subf %244, %243 : vector<8x16xf32>
    %246 = math.exp %245 : vector<8x16xf32>
    %cst_57 = arith.constant 1.000000e+00 : f32
    %247 = vector.broadcast %cst_57 : f32 to vector<8x16xf32>
    %248 = arith.addf %247, %246 : vector<8x16xf32>
    %249 = tpu.reciprocal %248 {approx = true} : vector<8x16xf32> -> vector<8x16xf32>
    %250 = vector.extract_strided_slice %242 {offsets = [8, 0], sizes = [8, 16], strides = [1, 1]} : vector<32x16xf32> to vector<8x16xf32>
    %cst_58 = arith.constant 0.000000e+00 : f32
    %251 = vector.broadcast %cst_58 : f32 to vector<8x16xf32>
    %252 = arith.subf %251, %250 : vector<8x16xf32>
    %253 = math.exp %252 : vector<8x16xf32>
    %cst_59 = arith.constant 1.000000e+00 : f32
    %254 = vector.broadcast %cst_59 : f32 to vector<8x16xf32>
    %255 = arith.addf %254, %253 : vector<8x16xf32>
    %256 = tpu.reciprocal %255 {approx = true} : vector<8x16xf32> -> vector<8x16xf32>
    %257 = vector.extract_strided_slice %242 {offsets = [16, 0], sizes = [8, 16], strides = [1, 1]} : vector<32x16xf32> to vector<8x16xf32>
    %258 = math.tanh %257 : vector<8x16xf32>
    %259 = vector.extract_strided_slice %242 {offsets = [24, 0], sizes = [8, 16], strides = [1, 1]} : vector<32x16xf32> to vector<8x16xf32>
    %cst_60 = arith.constant 0.000000e+00 : f32
    %260 = vector.broadcast %cst_60 : f32 to vector<8x16xf32>
    %261 = arith.subf %260, %259 : vector<8x16xf32>
    %262 = math.exp %261 : vector<8x16xf32>
    %cst_61 = arith.constant 1.000000e+00 : f32
    %263 = vector.broadcast %cst_61 : f32 to vector<8x16xf32>
    %264 = arith.addf %263, %262 : vector<8x16xf32>
    %265 = tpu.reciprocal %264 {approx = true} : vector<8x16xf32> -> vector<8x16xf32>
    %266 = arith.mulf %256, %230 : vector<8x16xf32>
    %267 = arith.mulf %249, %258 : vector<8x16xf32>
    %268 = arith.addf %266, %267 : vector<8x16xf32>
    %269 = math.tanh %268 : vector<8x16xf32>
    %270 = arith.mulf %265, %269 : vector<8x16xf32>
    %c7_i32 = arith.constant 7 : i32
    %271 = arith.index_cast %c7_i32 : i32 to index
    %c0_62 = arith.constant 0 : index
    %272 = vector.load %arg0[%271, %c0_62] : memref<16x16xf32, #tpu.memory_space<vmem>>, vector<1x16xf32>
    %273 = vector.broadcast %0 : vector<32x1xf32> to vector<32x16xf32>
    %274 = vector.broadcast %272 : vector<1x16xf32> to vector<32x16xf32>
    %275 = arith.mulf %273, %274 : vector<32x16xf32>
    %276 = arith.truncf %270 : vector<8x16xf32> to vector<8x16xbf16>
    %cst_63 = arith.constant dense<0.000000e+00> : vector<32x16xf32>
    %277 = tpu.matmul %1, %276, %cst_63 {dimension_numbers = #tpu.dot_dimension_numbers<[1], [0], [0], [1], [0, 0, 1, 1], [], []>} : vector<32x8xbf16>, vector<8x16xbf16>, vector<32x16xf32> -> vector<32x16xf32>
    %278 = arith.addf %275, %277 : vector<32x16xf32>
    %279 = vector.broadcast %2 : vector<32x1xf32> to vector<32x16xf32>
    %280 = arith.addf %278, %279 : vector<32x16xf32>
    %281 = vector.extract_strided_slice %280 {offsets = [0, 0], sizes = [8, 16], strides = [1, 1]} : vector<32x16xf32> to vector<8x16xf32>
    %cst_64 = arith.constant 0.000000e+00 : f32
    %282 = vector.broadcast %cst_64 : f32 to vector<8x16xf32>
    %283 = arith.subf %282, %281 : vector<8x16xf32>
    %284 = math.exp %283 : vector<8x16xf32>
    %cst_65 = arith.constant 1.000000e+00 : f32
    %285 = vector.broadcast %cst_65 : f32 to vector<8x16xf32>
    %286 = arith.addf %285, %284 : vector<8x16xf32>
    %287 = tpu.reciprocal %286 {approx = true} : vector<8x16xf32> -> vector<8x16xf32>
    %288 = vector.extract_strided_slice %280 {offsets = [8, 0], sizes = [8, 16], strides = [1, 1]} : vector<32x16xf32> to vector<8x16xf32>
    %cst_66 = arith.constant 0.000000e+00 : f32
    %289 = vector.broadcast %cst_66 : f32 to vector<8x16xf32>
    %290 = arith.subf %289, %288 : vector<8x16xf32>
    %291 = math.exp %290 : vector<8x16xf32>
    %cst_67 = arith.constant 1.000000e+00 : f32
    %292 = vector.broadcast %cst_67 : f32 to vector<8x16xf32>
    %293 = arith.addf %292, %291 : vector<8x16xf32>
    %294 = tpu.reciprocal %293 {approx = true} : vector<8x16xf32> -> vector<8x16xf32>
    %295 = vector.extract_strided_slice %280 {offsets = [16, 0], sizes = [8, 16], strides = [1, 1]} : vector<32x16xf32> to vector<8x16xf32>
    %296 = math.tanh %295 : vector<8x16xf32>
    %297 = vector.extract_strided_slice %280 {offsets = [24, 0], sizes = [8, 16], strides = [1, 1]} : vector<32x16xf32> to vector<8x16xf32>
    %cst_68 = arith.constant 0.000000e+00 : f32
    %298 = vector.broadcast %cst_68 : f32 to vector<8x16xf32>
    %299 = arith.subf %298, %297 : vector<8x16xf32>
    %300 = math.exp %299 : vector<8x16xf32>
    %cst_69 = arith.constant 1.000000e+00 : f32
    %301 = vector.broadcast %cst_69 : f32 to vector<8x16xf32>
    %302 = arith.addf %301, %300 : vector<8x16xf32>
    %303 = tpu.reciprocal %302 {approx = true} : vector<8x16xf32> -> vector<8x16xf32>
    %304 = arith.mulf %294, %268 : vector<8x16xf32>
    %305 = arith.mulf %287, %296 : vector<8x16xf32>
    %306 = arith.addf %304, %305 : vector<8x16xf32>
    %307 = math.tanh %306 : vector<8x16xf32>
    %308 = arith.mulf %303, %307 : vector<8x16xf32>
    %c8_i32 = arith.constant 8 : i32
    %309 = arith.index_cast %c8_i32 : i32 to index
    %c0_70 = arith.constant 0 : index
    %310 = vector.load %arg0[%309, %c0_70] : memref<16x16xf32, #tpu.memory_space<vmem>>, vector<1x16xf32>
    %311 = vector.broadcast %0 : vector<32x1xf32> to vector<32x16xf32>
    %312 = vector.broadcast %310 : vector<1x16xf32> to vector<32x16xf32>
    %313 = arith.mulf %311, %312 : vector<32x16xf32>
    %314 = arith.truncf %308 : vector<8x16xf32> to vector<8x16xbf16>
    %cst_71 = arith.constant dense<0.000000e+00> : vector<32x16xf32>
    %315 = tpu.matmul %1, %314, %cst_71 {dimension_numbers = #tpu.dot_dimension_numbers<[1], [0], [0], [1], [0, 0, 1, 1], [], []>} : vector<32x8xbf16>, vector<8x16xbf16>, vector<32x16xf32> -> vector<32x16xf32>
    %316 = arith.addf %313, %315 : vector<32x16xf32>
    %317 = vector.broadcast %2 : vector<32x1xf32> to vector<32x16xf32>
    %318 = arith.addf %316, %317 : vector<32x16xf32>
    %319 = vector.extract_strided_slice %318 {offsets = [0, 0], sizes = [8, 16], strides = [1, 1]} : vector<32x16xf32> to vector<8x16xf32>
    %cst_72 = arith.constant 0.000000e+00 : f32
    %320 = vector.broadcast %cst_72 : f32 to vector<8x16xf32>
    %321 = arith.subf %320, %319 : vector<8x16xf32>
    %322 = math.exp %321 : vector<8x16xf32>
    %cst_73 = arith.constant 1.000000e+00 : f32
    %323 = vector.broadcast %cst_73 : f32 to vector<8x16xf32>
    %324 = arith.addf %323, %322 : vector<8x16xf32>
    %325 = tpu.reciprocal %324 {approx = true} : vector<8x16xf32> -> vector<8x16xf32>
    %326 = vector.extract_strided_slice %318 {offsets = [8, 0], sizes = [8, 16], strides = [1, 1]} : vector<32x16xf32> to vector<8x16xf32>
    %cst_74 = arith.constant 0.000000e+00 : f32
    %327 = vector.broadcast %cst_74 : f32 to vector<8x16xf32>
    %328 = arith.subf %327, %326 : vector<8x16xf32>
    %329 = math.exp %328 : vector<8x16xf32>
    %cst_75 = arith.constant 1.000000e+00 : f32
    %330 = vector.broadcast %cst_75 : f32 to vector<8x16xf32>
    %331 = arith.addf %330, %329 : vector<8x16xf32>
    %332 = tpu.reciprocal %331 {approx = true} : vector<8x16xf32> -> vector<8x16xf32>
    %333 = vector.extract_strided_slice %318 {offsets = [16, 0], sizes = [8, 16], strides = [1, 1]} : vector<32x16xf32> to vector<8x16xf32>
    %334 = math.tanh %333 : vector<8x16xf32>
    %335 = vector.extract_strided_slice %318 {offsets = [24, 0], sizes = [8, 16], strides = [1, 1]} : vector<32x16xf32> to vector<8x16xf32>
    %cst_76 = arith.constant 0.000000e+00 : f32
    %336 = vector.broadcast %cst_76 : f32 to vector<8x16xf32>
    %337 = arith.subf %336, %335 : vector<8x16xf32>
    %338 = math.exp %337 : vector<8x16xf32>
    %cst_77 = arith.constant 1.000000e+00 : f32
    %339 = vector.broadcast %cst_77 : f32 to vector<8x16xf32>
    %340 = arith.addf %339, %338 : vector<8x16xf32>
    %341 = tpu.reciprocal %340 {approx = true} : vector<8x16xf32> -> vector<8x16xf32>
    %342 = arith.mulf %332, %306 : vector<8x16xf32>
    %343 = arith.mulf %325, %334 : vector<8x16xf32>
    %344 = arith.addf %342, %343 : vector<8x16xf32>
    %345 = math.tanh %344 : vector<8x16xf32>
    %346 = arith.mulf %341, %345 : vector<8x16xf32>
    %c9_i32 = arith.constant 9 : i32
    %347 = arith.index_cast %c9_i32 : i32 to index
    %c0_78 = arith.constant 0 : index
    %348 = vector.load %arg0[%347, %c0_78] : memref<16x16xf32, #tpu.memory_space<vmem>>, vector<1x16xf32>
    %349 = vector.broadcast %0 : vector<32x1xf32> to vector<32x16xf32>
    %350 = vector.broadcast %348 : vector<1x16xf32> to vector<32x16xf32>
    %351 = arith.mulf %349, %350 : vector<32x16xf32>
    %352 = arith.truncf %346 : vector<8x16xf32> to vector<8x16xbf16>
    %cst_79 = arith.constant dense<0.000000e+00> : vector<32x16xf32>
    %353 = tpu.matmul %1, %352, %cst_79 {dimension_numbers = #tpu.dot_dimension_numbers<[1], [0], [0], [1], [0, 0, 1, 1], [], []>} : vector<32x8xbf16>, vector<8x16xbf16>, vector<32x16xf32> -> vector<32x16xf32>
    %354 = arith.addf %351, %353 : vector<32x16xf32>
    %355 = vector.broadcast %2 : vector<32x1xf32> to vector<32x16xf32>
    %356 = arith.addf %354, %355 : vector<32x16xf32>
    %357 = vector.extract_strided_slice %356 {offsets = [0, 0], sizes = [8, 16], strides = [1, 1]} : vector<32x16xf32> to vector<8x16xf32>
    %cst_80 = arith.constant 0.000000e+00 : f32
    %358 = vector.broadcast %cst_80 : f32 to vector<8x16xf32>
    %359 = arith.subf %358, %357 : vector<8x16xf32>
    %360 = math.exp %359 : vector<8x16xf32>
    %cst_81 = arith.constant 1.000000e+00 : f32
    %361 = vector.broadcast %cst_81 : f32 to vector<8x16xf32>
    %362 = arith.addf %361, %360 : vector<8x16xf32>
    %363 = tpu.reciprocal %362 {approx = true} : vector<8x16xf32> -> vector<8x16xf32>
    %364 = vector.extract_strided_slice %356 {offsets = [8, 0], sizes = [8, 16], strides = [1, 1]} : vector<32x16xf32> to vector<8x16xf32>
    %cst_82 = arith.constant 0.000000e+00 : f32
    %365 = vector.broadcast %cst_82 : f32 to vector<8x16xf32>
    %366 = arith.subf %365, %364 : vector<8x16xf32>
    %367 = math.exp %366 : vector<8x16xf32>
    %cst_83 = arith.constant 1.000000e+00 : f32
    %368 = vector.broadcast %cst_83 : f32 to vector<8x16xf32>
    %369 = arith.addf %368, %367 : vector<8x16xf32>
    %370 = tpu.reciprocal %369 {approx = true} : vector<8x16xf32> -> vector<8x16xf32>
    %371 = vector.extract_strided_slice %356 {offsets = [16, 0], sizes = [8, 16], strides = [1, 1]} : vector<32x16xf32> to vector<8x16xf32>
    %372 = math.tanh %371 : vector<8x16xf32>
    %373 = vector.extract_strided_slice %356 {offsets = [24, 0], sizes = [8, 16], strides = [1, 1]} : vector<32x16xf32> to vector<8x16xf32>
    %cst_84 = arith.constant 0.000000e+00 : f32
    %374 = vector.broadcast %cst_84 : f32 to vector<8x16xf32>
    %375 = arith.subf %374, %373 : vector<8x16xf32>
    %376 = math.exp %375 : vector<8x16xf32>
    %cst_85 = arith.constant 1.000000e+00 : f32
    %377 = vector.broadcast %cst_85 : f32 to vector<8x16xf32>
    %378 = arith.addf %377, %376 : vector<8x16xf32>
    %379 = tpu.reciprocal %378 {approx = true} : vector<8x16xf32> -> vector<8x16xf32>
    %380 = arith.mulf %370, %344 : vector<8x16xf32>
    %381 = arith.mulf %363, %372 : vector<8x16xf32>
    %382 = arith.addf %380, %381 : vector<8x16xf32>
    %383 = math.tanh %382 : vector<8x16xf32>
    %384 = arith.mulf %379, %383 : vector<8x16xf32>
    %c10_i32 = arith.constant 10 : i32
    %385 = arith.index_cast %c10_i32 : i32 to index
    %c0_86 = arith.constant 0 : index
    %386 = vector.load %arg0[%385, %c0_86] : memref<16x16xf32, #tpu.memory_space<vmem>>, vector<1x16xf32>
    %387 = vector.broadcast %0 : vector<32x1xf32> to vector<32x16xf32>
    %388 = vector.broadcast %386 : vector<1x16xf32> to vector<32x16xf32>
    %389 = arith.mulf %387, %388 : vector<32x16xf32>
    %390 = arith.truncf %384 : vector<8x16xf32> to vector<8x16xbf16>
    %cst_87 = arith.constant dense<0.000000e+00> : vector<32x16xf32>
    %391 = tpu.matmul %1, %390, %cst_87 {dimension_numbers = #tpu.dot_dimension_numbers<[1], [0], [0], [1], [0, 0, 1, 1], [], []>} : vector<32x8xbf16>, vector<8x16xbf16>, vector<32x16xf32> -> vector<32x16xf32>
    %392 = arith.addf %389, %391 : vector<32x16xf32>
    %393 = vector.broadcast %2 : vector<32x1xf32> to vector<32x16xf32>
    %394 = arith.addf %392, %393 : vector<32x16xf32>
    %395 = vector.extract_strided_slice %394 {offsets = [0, 0], sizes = [8, 16], strides = [1, 1]} : vector<32x16xf32> to vector<8x16xf32>
    %cst_88 = arith.constant 0.000000e+00 : f32
    %396 = vector.broadcast %cst_88 : f32 to vector<8x16xf32>
    %397 = arith.subf %396, %395 : vector<8x16xf32>
    %398 = math.exp %397 : vector<8x16xf32>
    %cst_89 = arith.constant 1.000000e+00 : f32
    %399 = vector.broadcast %cst_89 : f32 to vector<8x16xf32>
    %400 = arith.addf %399, %398 : vector<8x16xf32>
    %401 = tpu.reciprocal %400 {approx = true} : vector<8x16xf32> -> vector<8x16xf32>
    %402 = vector.extract_strided_slice %394 {offsets = [8, 0], sizes = [8, 16], strides = [1, 1]} : vector<32x16xf32> to vector<8x16xf32>
    %cst_90 = arith.constant 0.000000e+00 : f32
    %403 = vector.broadcast %cst_90 : f32 to vector<8x16xf32>
    %404 = arith.subf %403, %402 : vector<8x16xf32>
    %405 = math.exp %404 : vector<8x16xf32>
    %cst_91 = arith.constant 1.000000e+00 : f32
    %406 = vector.broadcast %cst_91 : f32 to vector<8x16xf32>
    %407 = arith.addf %406, %405 : vector<8x16xf32>
    %408 = tpu.reciprocal %407 {approx = true} : vector<8x16xf32> -> vector<8x16xf32>
    %409 = vector.extract_strided_slice %394 {offsets = [16, 0], sizes = [8, 16], strides = [1, 1]} : vector<32x16xf32> to vector<8x16xf32>
    %410 = math.tanh %409 : vector<8x16xf32>
    %411 = vector.extract_strided_slice %394 {offsets = [24, 0], sizes = [8, 16], strides = [1, 1]} : vector<32x16xf32> to vector<8x16xf32>
    %cst_92 = arith.constant 0.000000e+00 : f32
    %412 = vector.broadcast %cst_92 : f32 to vector<8x16xf32>
    %413 = arith.subf %412, %411 : vector<8x16xf32>
    %414 = math.exp %413 : vector<8x16xf32>
    %cst_93 = arith.constant 1.000000e+00 : f32
    %415 = vector.broadcast %cst_93 : f32 to vector<8x16xf32>
    %416 = arith.addf %415, %414 : vector<8x16xf32>
    %417 = tpu.reciprocal %416 {approx = true} : vector<8x16xf32> -> vector<8x16xf32>
    %418 = arith.mulf %408, %382 : vector<8x16xf32>
    %419 = arith.mulf %401, %410 : vector<8x16xf32>
    %420 = arith.addf %418, %419 : vector<8x16xf32>
    %421 = math.tanh %420 : vector<8x16xf32>
    %422 = arith.mulf %417, %421 : vector<8x16xf32>
    %c11_i32 = arith.constant 11 : i32
    %423 = arith.index_cast %c11_i32 : i32 to index
    %c0_94 = arith.constant 0 : index
    %424 = vector.load %arg0[%423, %c0_94] : memref<16x16xf32, #tpu.memory_space<vmem>>, vector<1x16xf32>
    %425 = vector.broadcast %0 : vector<32x1xf32> to vector<32x16xf32>
    %426 = vector.broadcast %424 : vector<1x16xf32> to vector<32x16xf32>
    %427 = arith.mulf %425, %426 : vector<32x16xf32>
    %428 = arith.truncf %422 : vector<8x16xf32> to vector<8x16xbf16>
    %cst_95 = arith.constant dense<0.000000e+00> : vector<32x16xf32>
    %429 = tpu.matmul %1, %428, %cst_95 {dimension_numbers = #tpu.dot_dimension_numbers<[1], [0], [0], [1], [0, 0, 1, 1], [], []>} : vector<32x8xbf16>, vector<8x16xbf16>, vector<32x16xf32> -> vector<32x16xf32>
    %430 = arith.addf %427, %429 : vector<32x16xf32>
    %431 = vector.broadcast %2 : vector<32x1xf32> to vector<32x16xf32>
    %432 = arith.addf %430, %431 : vector<32x16xf32>
    %433 = vector.extract_strided_slice %432 {offsets = [0, 0], sizes = [8, 16], strides = [1, 1]} : vector<32x16xf32> to vector<8x16xf32>
    %cst_96 = arith.constant 0.000000e+00 : f32
    %434 = vector.broadcast %cst_96 : f32 to vector<8x16xf32>
    %435 = arith.subf %434, %433 : vector<8x16xf32>
    %436 = math.exp %435 : vector<8x16xf32>
    %cst_97 = arith.constant 1.000000e+00 : f32
    %437 = vector.broadcast %cst_97 : f32 to vector<8x16xf32>
    %438 = arith.addf %437, %436 : vector<8x16xf32>
    %439 = tpu.reciprocal %438 {approx = true} : vector<8x16xf32> -> vector<8x16xf32>
    %440 = vector.extract_strided_slice %432 {offsets = [8, 0], sizes = [8, 16], strides = [1, 1]} : vector<32x16xf32> to vector<8x16xf32>
    %cst_98 = arith.constant 0.000000e+00 : f32
    %441 = vector.broadcast %cst_98 : f32 to vector<8x16xf32>
    %442 = arith.subf %441, %440 : vector<8x16xf32>
    %443 = math.exp %442 : vector<8x16xf32>
    %cst_99 = arith.constant 1.000000e+00 : f32
    %444 = vector.broadcast %cst_99 : f32 to vector<8x16xf32>
    %445 = arith.addf %444, %443 : vector<8x16xf32>
    %446 = tpu.reciprocal %445 {approx = true} : vector<8x16xf32> -> vector<8x16xf32>
    %447 = vector.extract_strided_slice %432 {offsets = [16, 0], sizes = [8, 16], strides = [1, 1]} : vector<32x16xf32> to vector<8x16xf32>
    %448 = math.tanh %447 : vector<8x16xf32>
    %449 = vector.extract_strided_slice %432 {offsets = [24, 0], sizes = [8, 16], strides = [1, 1]} : vector<32x16xf32> to vector<8x16xf32>
    %cst_100 = arith.constant 0.000000e+00 : f32
    %450 = vector.broadcast %cst_100 : f32 to vector<8x16xf32>
    %451 = arith.subf %450, %449 : vector<8x16xf32>
    %452 = math.exp %451 : vector<8x16xf32>
    %cst_101 = arith.constant 1.000000e+00 : f32
    %453 = vector.broadcast %cst_101 : f32 to vector<8x16xf32>
    %454 = arith.addf %453, %452 : vector<8x16xf32>
    %455 = tpu.reciprocal %454 {approx = true} : vector<8x16xf32> -> vector<8x16xf32>
    %456 = arith.mulf %446, %420 : vector<8x16xf32>
    %457 = arith.mulf %439, %448 : vector<8x16xf32>
    %458 = arith.addf %456, %457 : vector<8x16xf32>
    %459 = math.tanh %458 : vector<8x16xf32>
    %460 = arith.mulf %455, %459 : vector<8x16xf32>
    %c12_i32 = arith.constant 12 : i32
    %461 = arith.index_cast %c12_i32 : i32 to index
    %c0_102 = arith.constant 0 : index
    %462 = vector.load %arg0[%461, %c0_102] : memref<16x16xf32, #tpu.memory_space<vmem>>, vector<1x16xf32>
    %463 = vector.broadcast %0 : vector<32x1xf32> to vector<32x16xf32>
    %464 = vector.broadcast %462 : vector<1x16xf32> to vector<32x16xf32>
    %465 = arith.mulf %463, %464 : vector<32x16xf32>
    %466 = arith.truncf %460 : vector<8x16xf32> to vector<8x16xbf16>
    %cst_103 = arith.constant dense<0.000000e+00> : vector<32x16xf32>
    %467 = tpu.matmul %1, %466, %cst_103 {dimension_numbers = #tpu.dot_dimension_numbers<[1], [0], [0], [1], [0, 0, 1, 1], [], []>} : vector<32x8xbf16>, vector<8x16xbf16>, vector<32x16xf32> -> vector<32x16xf32>
    %468 = arith.addf %465, %467 : vector<32x16xf32>
    %469 = vector.broadcast %2 : vector<32x1xf32> to vector<32x16xf32>
    %470 = arith.addf %468, %469 : vector<32x16xf32>
    %471 = vector.extract_strided_slice %470 {offsets = [0, 0], sizes = [8, 16], strides = [1, 1]} : vector<32x16xf32> to vector<8x16xf32>
    %cst_104 = arith.constant 0.000000e+00 : f32
    %472 = vector.broadcast %cst_104 : f32 to vector<8x16xf32>
    %473 = arith.subf %472, %471 : vector<8x16xf32>
    %474 = math.exp %473 : vector<8x16xf32>
    %cst_105 = arith.constant 1.000000e+00 : f32
    %475 = vector.broadcast %cst_105 : f32 to vector<8x16xf32>
    %476 = arith.addf %475, %474 : vector<8x16xf32>
    %477 = tpu.reciprocal %476 {approx = true} : vector<8x16xf32> -> vector<8x16xf32>
    %478 = vector.extract_strided_slice %470 {offsets = [8, 0], sizes = [8, 16], strides = [1, 1]} : vector<32x16xf32> to vector<8x16xf32>
    %cst_106 = arith.constant 0.000000e+00 : f32
    %479 = vector.broadcast %cst_106 : f32 to vector<8x16xf32>
    %480 = arith.subf %479, %478 : vector<8x16xf32>
    %481 = math.exp %480 : vector<8x16xf32>
    %cst_107 = arith.constant 1.000000e+00 : f32
    %482 = vector.broadcast %cst_107 : f32 to vector<8x16xf32>
    %483 = arith.addf %482, %481 : vector<8x16xf32>
    %484 = tpu.reciprocal %483 {approx = true} : vector<8x16xf32> -> vector<8x16xf32>
    %485 = vector.extract_strided_slice %470 {offsets = [16, 0], sizes = [8, 16], strides = [1, 1]} : vector<32x16xf32> to vector<8x16xf32>
    %486 = math.tanh %485 : vector<8x16xf32>
    %487 = vector.extract_strided_slice %470 {offsets = [24, 0], sizes = [8, 16], strides = [1, 1]} : vector<32x16xf32> to vector<8x16xf32>
    %cst_108 = arith.constant 0.000000e+00 : f32
    %488 = vector.broadcast %cst_108 : f32 to vector<8x16xf32>
    %489 = arith.subf %488, %487 : vector<8x16xf32>
    %490 = math.exp %489 : vector<8x16xf32>
    %cst_109 = arith.constant 1.000000e+00 : f32
    %491 = vector.broadcast %cst_109 : f32 to vector<8x16xf32>
    %492 = arith.addf %491, %490 : vector<8x16xf32>
    %493 = tpu.reciprocal %492 {approx = true} : vector<8x16xf32> -> vector<8x16xf32>
    %494 = arith.mulf %484, %458 : vector<8x16xf32>
    %495 = arith.mulf %477, %486 : vector<8x16xf32>
    %496 = arith.addf %494, %495 : vector<8x16xf32>
    %497 = math.tanh %496 : vector<8x16xf32>
    %498 = arith.mulf %493, %497 : vector<8x16xf32>
    %c13_i32 = arith.constant 13 : i32
    %499 = arith.index_cast %c13_i32 : i32 to index
    %c0_110 = arith.constant 0 : index
    %500 = vector.load %arg0[%499, %c0_110] : memref<16x16xf32, #tpu.memory_space<vmem>>, vector<1x16xf32>
    %501 = vector.broadcast %0 : vector<32x1xf32> to vector<32x16xf32>
    %502 = vector.broadcast %500 : vector<1x16xf32> to vector<32x16xf32>
    %503 = arith.mulf %501, %502 : vector<32x16xf32>
    %504 = arith.truncf %498 : vector<8x16xf32> to vector<8x16xbf16>
    %cst_111 = arith.constant dense<0.000000e+00> : vector<32x16xf32>
    %505 = tpu.matmul %1, %504, %cst_111 {dimension_numbers = #tpu.dot_dimension_numbers<[1], [0], [0], [1], [0, 0, 1, 1], [], []>} : vector<32x8xbf16>, vector<8x16xbf16>, vector<32x16xf32> -> vector<32x16xf32>
    %506 = arith.addf %503, %505 : vector<32x16xf32>
    %507 = vector.broadcast %2 : vector<32x1xf32> to vector<32x16xf32>
    %508 = arith.addf %506, %507 : vector<32x16xf32>
    %509 = vector.extract_strided_slice %508 {offsets = [0, 0], sizes = [8, 16], strides = [1, 1]} : vector<32x16xf32> to vector<8x16xf32>
    %cst_112 = arith.constant 0.000000e+00 : f32
    %510 = vector.broadcast %cst_112 : f32 to vector<8x16xf32>
    %511 = arith.subf %510, %509 : vector<8x16xf32>
    %512 = math.exp %511 : vector<8x16xf32>
    %cst_113 = arith.constant 1.000000e+00 : f32
    %513 = vector.broadcast %cst_113 : f32 to vector<8x16xf32>
    %514 = arith.addf %513, %512 : vector<8x16xf32>
    %515 = tpu.reciprocal %514 {approx = true} : vector<8x16xf32> -> vector<8x16xf32>
    %516 = vector.extract_strided_slice %508 {offsets = [8, 0], sizes = [8, 16], strides = [1, 1]} : vector<32x16xf32> to vector<8x16xf32>
    %cst_114 = arith.constant 0.000000e+00 : f32
    %517 = vector.broadcast %cst_114 : f32 to vector<8x16xf32>
    %518 = arith.subf %517, %516 : vector<8x16xf32>
    %519 = math.exp %518 : vector<8x16xf32>
    %cst_115 = arith.constant 1.000000e+00 : f32
    %520 = vector.broadcast %cst_115 : f32 to vector<8x16xf32>
    %521 = arith.addf %520, %519 : vector<8x16xf32>
    %522 = tpu.reciprocal %521 {approx = true} : vector<8x16xf32> -> vector<8x16xf32>
    %523 = vector.extract_strided_slice %508 {offsets = [16, 0], sizes = [8, 16], strides = [1, 1]} : vector<32x16xf32> to vector<8x16xf32>
    %524 = math.tanh %523 : vector<8x16xf32>
    %525 = vector.extract_strided_slice %508 {offsets = [24, 0], sizes = [8, 16], strides = [1, 1]} : vector<32x16xf32> to vector<8x16xf32>
    %cst_116 = arith.constant 0.000000e+00 : f32
    %526 = vector.broadcast %cst_116 : f32 to vector<8x16xf32>
    %527 = arith.subf %526, %525 : vector<8x16xf32>
    %528 = math.exp %527 : vector<8x16xf32>
    %cst_117 = arith.constant 1.000000e+00 : f32
    %529 = vector.broadcast %cst_117 : f32 to vector<8x16xf32>
    %530 = arith.addf %529, %528 : vector<8x16xf32>
    %531 = tpu.reciprocal %530 {approx = true} : vector<8x16xf32> -> vector<8x16xf32>
    %532 = arith.mulf %522, %496 : vector<8x16xf32>
    %533 = arith.mulf %515, %524 : vector<8x16xf32>
    %534 = arith.addf %532, %533 : vector<8x16xf32>
    %535 = math.tanh %534 : vector<8x16xf32>
    %536 = arith.mulf %531, %535 : vector<8x16xf32>
    %c14_i32 = arith.constant 14 : i32
    %537 = arith.index_cast %c14_i32 : i32 to index
    %c0_118 = arith.constant 0 : index
    %538 = vector.load %arg0[%537, %c0_118] : memref<16x16xf32, #tpu.memory_space<vmem>>, vector<1x16xf32>
    %539 = vector.broadcast %0 : vector<32x1xf32> to vector<32x16xf32>
    %540 = vector.broadcast %538 : vector<1x16xf32> to vector<32x16xf32>
    %541 = arith.mulf %539, %540 : vector<32x16xf32>
    %542 = arith.truncf %536 : vector<8x16xf32> to vector<8x16xbf16>
    %cst_119 = arith.constant dense<0.000000e+00> : vector<32x16xf32>
    %543 = tpu.matmul %1, %542, %cst_119 {dimension_numbers = #tpu.dot_dimension_numbers<[1], [0], [0], [1], [0, 0, 1, 1], [], []>} : vector<32x8xbf16>, vector<8x16xbf16>, vector<32x16xf32> -> vector<32x16xf32>
    %544 = arith.addf %541, %543 : vector<32x16xf32>
    %545 = vector.broadcast %2 : vector<32x1xf32> to vector<32x16xf32>
    %546 = arith.addf %544, %545 : vector<32x16xf32>
    %547 = vector.extract_strided_slice %546 {offsets = [0, 0], sizes = [8, 16], strides = [1, 1]} : vector<32x16xf32> to vector<8x16xf32>
    %cst_120 = arith.constant 0.000000e+00 : f32
    %548 = vector.broadcast %cst_120 : f32 to vector<8x16xf32>
    %549 = arith.subf %548, %547 : vector<8x16xf32>
    %550 = math.exp %549 : vector<8x16xf32>
    %cst_121 = arith.constant 1.000000e+00 : f32
    %551 = vector.broadcast %cst_121 : f32 to vector<8x16xf32>
    %552 = arith.addf %551, %550 : vector<8x16xf32>
    %553 = tpu.reciprocal %552 {approx = true} : vector<8x16xf32> -> vector<8x16xf32>
    %554 = vector.extract_strided_slice %546 {offsets = [8, 0], sizes = [8, 16], strides = [1, 1]} : vector<32x16xf32> to vector<8x16xf32>
    %cst_122 = arith.constant 0.000000e+00 : f32
    %555 = vector.broadcast %cst_122 : f32 to vector<8x16xf32>
    %556 = arith.subf %555, %554 : vector<8x16xf32>
    %557 = math.exp %556 : vector<8x16xf32>
    %cst_123 = arith.constant 1.000000e+00 : f32
    %558 = vector.broadcast %cst_123 : f32 to vector<8x16xf32>
    %559 = arith.addf %558, %557 : vector<8x16xf32>
    %560 = tpu.reciprocal %559 {approx = true} : vector<8x16xf32> -> vector<8x16xf32>
    %561 = vector.extract_strided_slice %546 {offsets = [16, 0], sizes = [8, 16], strides = [1, 1]} : vector<32x16xf32> to vector<8x16xf32>
    %562 = math.tanh %561 : vector<8x16xf32>
    %563 = vector.extract_strided_slice %546 {offsets = [24, 0], sizes = [8, 16], strides = [1, 1]} : vector<32x16xf32> to vector<8x16xf32>
    %cst_124 = arith.constant 0.000000e+00 : f32
    %564 = vector.broadcast %cst_124 : f32 to vector<8x16xf32>
    %565 = arith.subf %564, %563 : vector<8x16xf32>
    %566 = math.exp %565 : vector<8x16xf32>
    %cst_125 = arith.constant 1.000000e+00 : f32
    %567 = vector.broadcast %cst_125 : f32 to vector<8x16xf32>
    %568 = arith.addf %567, %566 : vector<8x16xf32>
    %569 = tpu.reciprocal %568 {approx = true} : vector<8x16xf32> -> vector<8x16xf32>
    %570 = arith.mulf %560, %534 : vector<8x16xf32>
    %571 = arith.mulf %553, %562 : vector<8x16xf32>
    %572 = arith.addf %570, %571 : vector<8x16xf32>
    %573 = math.tanh %572 : vector<8x16xf32>
    %574 = arith.mulf %569, %573 : vector<8x16xf32>
    %c15_i32 = arith.constant 15 : i32
    %575 = arith.index_cast %c15_i32 : i32 to index
    %c0_126 = arith.constant 0 : index
    %576 = vector.load %arg0[%575, %c0_126] : memref<16x16xf32, #tpu.memory_space<vmem>>, vector<1x16xf32>
    %577 = vector.broadcast %0 : vector<32x1xf32> to vector<32x16xf32>
    %578 = vector.broadcast %576 : vector<1x16xf32> to vector<32x16xf32>
    %579 = arith.mulf %577, %578 : vector<32x16xf32>
    %580 = arith.truncf %574 : vector<8x16xf32> to vector<8x16xbf16>
    %cst_127 = arith.constant dense<0.000000e+00> : vector<32x16xf32>
    %581 = tpu.matmul %1, %580, %cst_127 {dimension_numbers = #tpu.dot_dimension_numbers<[1], [0], [0], [1], [0, 0, 1, 1], [], []>} : vector<32x8xbf16>, vector<8x16xbf16>, vector<32x16xf32> -> vector<32x16xf32>
    %582 = arith.addf %579, %581 : vector<32x16xf32>
    %583 = vector.broadcast %2 : vector<32x1xf32> to vector<32x16xf32>
    %584 = arith.addf %582, %583 : vector<32x16xf32>
    %585 = vector.extract_strided_slice %584 {offsets = [0, 0], sizes = [8, 16], strides = [1, 1]} : vector<32x16xf32> to vector<8x16xf32>
    %cst_128 = arith.constant 0.000000e+00 : f32
    %586 = vector.broadcast %cst_128 : f32 to vector<8x16xf32>
    %587 = arith.subf %586, %585 : vector<8x16xf32>
    %588 = math.exp %587 : vector<8x16xf32>
    %cst_129 = arith.constant 1.000000e+00 : f32
    %589 = vector.broadcast %cst_129 : f32 to vector<8x16xf32>
    %590 = arith.addf %589, %588 : vector<8x16xf32>
    %591 = tpu.reciprocal %590 {approx = true} : vector<8x16xf32> -> vector<8x16xf32>
    %592 = vector.extract_strided_slice %584 {offsets = [8, 0], sizes = [8, 16], strides = [1, 1]} : vector<32x16xf32> to vector<8x16xf32>
    %cst_130 = arith.constant 0.000000e+00 : f32
    %593 = vector.broadcast %cst_130 : f32 to vector<8x16xf32>
    %594 = arith.subf %593, %592 : vector<8x16xf32>
    %595 = math.exp %594 : vector<8x16xf32>
    %cst_131 = arith.constant 1.000000e+00 : f32
    %596 = vector.broadcast %cst_131 : f32 to vector<8x16xf32>
    %597 = arith.addf %596, %595 : vector<8x16xf32>
    %598 = tpu.reciprocal %597 {approx = true} : vector<8x16xf32> -> vector<8x16xf32>
    %599 = vector.extract_strided_slice %584 {offsets = [16, 0], sizes = [8, 16], strides = [1, 1]} : vector<32x16xf32> to vector<8x16xf32>
    %600 = math.tanh %599 : vector<8x16xf32>
    %601 = vector.extract_strided_slice %584 {offsets = [24, 0], sizes = [8, 16], strides = [1, 1]} : vector<32x16xf32> to vector<8x16xf32>
    %cst_132 = arith.constant 0.000000e+00 : f32
    %602 = vector.broadcast %cst_132 : f32 to vector<8x16xf32>
    %603 = arith.subf %602, %601 : vector<8x16xf32>
    %604 = math.exp %603 : vector<8x16xf32>
    %cst_133 = arith.constant 1.000000e+00 : f32
    %605 = vector.broadcast %cst_133 : f32 to vector<8x16xf32>
    %606 = arith.addf %605, %604 : vector<8x16xf32>
    %607 = tpu.reciprocal %606 {approx = true} : vector<8x16xf32> -> vector<8x16xf32>
    %608 = arith.mulf %598, %572 : vector<8x16xf32>
    %609 = arith.mulf %591, %600 : vector<8x16xf32>
    %610 = arith.addf %608, %609 : vector<8x16xf32>
    %611 = math.tanh %610 : vector<8x16xf32>
    %612 = arith.mulf %607, %611 : vector<8x16xf32>
    %c16_i32 = arith.constant 16 : i32
    %613 = tpu.transpose %612, [1, 0] : vector<8x16xf32> -> vector<16x8xf32>
    %614 = arith.truncf %613 : vector<16x8xf32> to vector<16x8xbf16>
    %c0_134 = arith.constant 0 : index
    %c0_135 = arith.constant 0 : index
    %615 = vector.load %arg4[%c0_134, %c0_135] : memref<8x512xbf16, #tpu.memory_space<vmem>>, vector<8x512xbf16>
    %cst_136 = arith.constant dense<0.000000e+00> : vector<16x512xf32>
    %616 = tpu.matmul %614, %615, %cst_136 {dimension_numbers = #tpu.dot_dimension_numbers<[1], [0], [0], [1], [0, 0, 1, 1], [], []>} : vector<16x8xbf16>, vector<8x512xbf16>, vector<16x512xf32> -> vector<16x512xf32>
    %c0_137 = arith.constant 0 : index
    %c0_138 = arith.constant 0 : index
    %617 = vector.load %arg6[%c0_137, %c0_138] : memref<1x512xf32, #tpu.memory_space<vmem>>, vector<1x512xf32>
    %618 = vector.broadcast %617 : vector<1x512xf32> to vector<16x512xf32>
    %619 = arith.addf %616, %618 : vector<16x512xf32>
    %620 = vector.extract_strided_slice %619 {offsets = [0, 0], sizes = [2, 512], strides = [1, 1]} : vector<16x512xf32> to vector<2x512xf32>
    %c0_139 = arith.constant 0 : index
    %c0_140 = arith.constant 0 : index
    %c0_141 = arith.constant 0 : index
    %621 = vector.load %arg10[%c0_139, %c0_140, %c0_141] : memref<8x2x512xf32, #tpu.memory_space<vmem>>, vector<1x2x512xf32>
    %622 = vector.shape_cast %621 : vector<1x2x512xf32> to vector<2x512xf32>
    %623 = vector.shape_cast %620 : vector<2x512xf32> to vector<1x2x512xf32>
    tpu.vector_store %arg10[%c0_139, %c0_140, %c0_141], %623 {strides = array<i32>} : memref<8x2x512xf32, #tpu.memory_space<vmem>>, vector<1x2x512xf32>,
    %624 = vector.extract_strided_slice %619 {offsets = [2, 0], sizes = [2, 512], strides = [1, 1]} : vector<16x512xf32> to vector<2x512xf32>
    %c1 = arith.constant 1 : index
    %c0_142 = arith.constant 0 : index
    %c0_143 = arith.constant 0 : index
    %625 = vector.load %arg10[%c1, %c0_142, %c0_143] : memref<8x2x512xf32, #tpu.memory_space<vmem>>, vector<1x2x512xf32>
    %626 = vector.shape_cast %625 : vector<1x2x512xf32> to vector<2x512xf32>
    %627 = vector.shape_cast %624 : vector<2x512xf32> to vector<1x2x512xf32>
    tpu.vector_store %arg10[%c1, %c0_142, %c0_143], %627 {strides = array<i32>} : memref<8x2x512xf32, #tpu.memory_space<vmem>>, vector<1x2x512xf32>,
    %628 = vector.extract_strided_slice %619 {offsets = [4, 0], sizes = [2, 512], strides = [1, 1]} : vector<16x512xf32> to vector<2x512xf32>
    %c2 = arith.constant 2 : index
    %c0_144 = arith.constant 0 : index
    %c0_145 = arith.constant 0 : index
    %629 = vector.load %arg10[%c2, %c0_144, %c0_145] : memref<8x2x512xf32, #tpu.memory_space<vmem>>, vector<1x2x512xf32>
    %630 = vector.shape_cast %629 : vector<1x2x512xf32> to vector<2x512xf32>
    %631 = vector.shape_cast %628 : vector<2x512xf32> to vector<1x2x512xf32>
    tpu.vector_store %arg10[%c2, %c0_144, %c0_145], %631 {strides = array<i32>} : memref<8x2x512xf32, #tpu.memory_space<vmem>>, vector<1x2x512xf32>,
    %632 = vector.extract_strided_slice %619 {offsets = [6, 0], sizes = [2, 512], strides = [1, 1]} : vector<16x512xf32> to vector<2x512xf32>
    %c3 = arith.constant 3 : index
    %c0_146 = arith.constant 0 : index
    %c0_147 = arith.constant 0 : index
    %633 = vector.load %arg10[%c3, %c0_146, %c0_147] : memref<8x2x512xf32, #tpu.memory_space<vmem>>, vector<1x2x512xf32>
    %634 = vector.shape_cast %633 : vector<1x2x512xf32> to vector<2x512xf32>
    %635 = vector.shape_cast %632 : vector<2x512xf32> to vector<1x2x512xf32>
    tpu.vector_store %arg10[%c3, %c0_146, %c0_147], %635 {strides = array<i32>} : memref<8x2x512xf32, #tpu.memory_space<vmem>>, vector<1x2x512xf32>,
    %636 = vector.extract_strided_slice %619 {offsets = [8, 0], sizes = [2, 512], strides = [1, 1]} : vector<16x512xf32> to vector<2x512xf32>
    %c4 = arith.constant 4 : index
    %c0_148 = arith.constant 0 : index
    %c0_149 = arith.constant 0 : index
    %637 = vector.load %arg10[%c4, %c0_148, %c0_149] : memref<8x2x512xf32, #tpu.memory_space<vmem>>, vector<1x2x512xf32>
    %638 = vector.shape_cast %637 : vector<1x2x512xf32> to vector<2x512xf32>
    %639 = vector.shape_cast %636 : vector<2x512xf32> to vector<1x2x512xf32>
    tpu.vector_store %arg10[%c4, %c0_148, %c0_149], %639 {strides = array<i32>} : memref<8x2x512xf32, #tpu.memory_space<vmem>>, vector<1x2x512xf32>,
    %640 = vector.extract_strided_slice %619 {offsets = [10, 0], sizes = [2, 512], strides = [1, 1]} : vector<16x512xf32> to vector<2x512xf32>
    %c5 = arith.constant 5 : index
    %c0_150 = arith.constant 0 : index
    %c0_151 = arith.constant 0 : index
    %641 = vector.load %arg10[%c5, %c0_150, %c0_151] : memref<8x2x512xf32, #tpu.memory_space<vmem>>, vector<1x2x512xf32>
    %642 = vector.shape_cast %641 : vector<1x2x512xf32> to vector<2x512xf32>
    %643 = vector.shape_cast %640 : vector<2x512xf32> to vector<1x2x512xf32>
    tpu.vector_store %arg10[%c5, %c0_150, %c0_151], %643 {strides = array<i32>} : memref<8x2x512xf32, #tpu.memory_space<vmem>>, vector<1x2x512xf32>,
    %644 = vector.extract_strided_slice %619 {offsets = [12, 0], sizes = [2, 512], strides = [1, 1]} : vector<16x512xf32> to vector<2x512xf32>
    %c6 = arith.constant 6 : index
    %c0_152 = arith.constant 0 : index
    %c0_153 = arith.constant 0 : index
    %645 = vector.load %arg10[%c6, %c0_152, %c0_153] : memref<8x2x512xf32, #tpu.memory_space<vmem>>, vector<1x2x512xf32>
    %646 = vector.shape_cast %645 : vector<1x2x512xf32> to vector<2x512xf32>
    %647 = vector.shape_cast %644 : vector<2x512xf32> to vector<1x2x512xf32>
    tpu.vector_store %arg10[%c6, %c0_152, %c0_153], %647 {strides = array<i32>} : memref<8x2x512xf32, #tpu.memory_space<vmem>>, vector<1x2x512xf32>,
    %648 = vector.extract_strided_slice %619 {offsets = [14, 0], sizes = [2, 512], strides = [1, 1]} : vector<16x512xf32> to vector<2x512xf32>
    %c7 = arith.constant 7 : index
    %c0_154 = arith.constant 0 : index
    %c0_155 = arith.constant 0 : index
    %649 = vector.load %arg10[%c7, %c0_154, %c0_155] : memref<8x2x512xf32, #tpu.memory_space<vmem>>, vector<1x2x512xf32>
    %650 = vector.shape_cast %649 : vector<1x2x512xf32> to vector<2x512xf32>
    %651 = vector.shape_cast %648 : vector<2x512xf32> to vector<1x2x512xf32>
    tpu.vector_store %arg10[%c7, %c0_154, %c0_155], %651 {strides = array<i32>} : memref<8x2x512xf32, #tpu.memory_space<vmem>>, vector<1x2x512xf32>,
    %c0_156 = arith.constant 0 : index
    %c0_157 = arith.constant 0 : index
    %652 = vector.load %arg5[%c0_156, %c0_157] : memref<128x512xbf16, #tpu.memory_space<vmem>>, vector<128x512xbf16>
    %cst_158 = arith.constant 0.000000e+00 : f32
    %653 = vector.broadcast %cst_158 : f32 to vector<2x128xf32>
    %cst_159 = arith.constant 0.000000e+00 : f32
    %654 = vector.broadcast %cst_159 : f32 to vector<2x128xf32>
    %c0_i32_160 = arith.constant 0 : i32
    %655 = arith.index_cast %c0_i32_160 : i32 to index
    %c0_161 = arith.constant 0 : index
    %c0_162 = arith.constant 0 : index
    %656 = vector.load %arg10[%655, %c0_161, %c0_162] : memref<8x2x512xf32, #tpu.memory_space<vmem>>, vector<1x2x512xf32>
    %657 = vector.shape_cast %656 : vector<1x2x512xf32> to vector<2x512xf32>
    %658 = arith.truncf %653 : vector<2x128xf32> to vector<2x128xbf16>
    %cst_163 = arith.constant dense<0.000000e+00> : vector<2x512xf32>
    %659 = tpu.matmul %658, %652, %cst_163 {dimension_numbers = #tpu.dot_dimension_numbers<[1], [0], [0], [1], [0, 0, 1, 1], [], []>} : vector<2x128xbf16>, vector<128x512xbf16>, vector<2x512xf32> -> vector<2x512xf32>
    %660 = arith.addf %657, %659 : vector<2x512xf32>
    %661 = vector.extract_strided_slice %660 {offsets = [0, 0], sizes = [2, 128], strides = [1, 1]} : vector<2x512xf32> to vector<2x128xf32>
    %cst_164 = arith.constant 0.000000e+00 : f32
    %662 = vector.broadcast %cst_164 : f32 to vector<2x128xf32>
    %663 = arith.subf %662, %661 : vector<2x128xf32>
    %664 = math.exp %663 : vector<2x128xf32>
    %cst_165 = arith.constant 1.000000e+00 : f32
    %665 = vector.broadcast %cst_165 : f32 to vector<2x128xf32>
    %666 = arith.addf %665, %664 : vector<2x128xf32>
    %667 = tpu.reciprocal %666 {approx = true} : vector<2x128xf32> -> vector<2x128xf32>
    %668 = vector.extract_strided_slice %660 {offsets = [0, 128], sizes = [2, 128], strides = [1, 1]} : vector<2x512xf32> to vector<2x128xf32>
    %cst_166 = arith.constant 0.000000e+00 : f32
    %669 = vector.broadcast %cst_166 : f32 to vector<2x128xf32>
    %670 = arith.subf %669, %668 : vector<2x128xf32>
    %671 = math.exp %670 : vector<2x128xf32>
    %cst_167 = arith.constant 1.000000e+00 : f32
    %672 = vector.broadcast %cst_167 : f32 to vector<2x128xf32>
    %673 = arith.addf %672, %671 : vector<2x128xf32>
    %674 = tpu.reciprocal %673 {approx = true} : vector<2x128xf32> -> vector<2x128xf32>
    %675 = vector.extract_strided_slice %660 {offsets = [0, 256], sizes = [2, 128], strides = [1, 1]} : vector<2x512xf32> to vector<2x128xf32>
    %676 = math.tanh %675 : vector<2x128xf32>
    %677 = vector.extract_strided_slice %660 {offsets = [0, 384], sizes = [2, 128], strides = [1, 1]} : vector<2x512xf32> to vector<2x128xf32>
    %cst_168 = arith.constant 0.000000e+00 : f32
    %678 = vector.broadcast %cst_168 : f32 to vector<2x128xf32>
    %679 = arith.subf %678, %677 : vector<2x128xf32>
    %680 = math.exp %679 : vector<2x128xf32>
    %cst_169 = arith.constant 1.000000e+00 : f32
    %681 = vector.broadcast %cst_169 : f32 to vector<2x128xf32>
    %682 = arith.addf %681, %680 : vector<2x128xf32>
    %683 = tpu.reciprocal %682 {approx = true} : vector<2x128xf32> -> vector<2x128xf32>
    %684 = arith.mulf %674, %654 : vector<2x128xf32>
    %685 = arith.mulf %667, %676 : vector<2x128xf32>
    %686 = arith.addf %684, %685 : vector<2x128xf32>
    %687 = math.tanh %686 : vector<2x128xf32>
    %688 = arith.mulf %683, %687 : vector<2x128xf32>
    %c1_i32_170 = arith.constant 1 : i32
    %689 = arith.index_cast %c1_i32_170 : i32 to index
    %c0_171 = arith.constant 0 : index
    %c0_172 = arith.constant 0 : index
    %690 = vector.load %arg10[%689, %c0_171, %c0_172] : memref<8x2x512xf32, #tpu.memory_space<vmem>>, vector<1x2x512xf32>
    %691 = vector.shape_cast %690 : vector<1x2x512xf32> to vector<2x512xf32>
    %692 = arith.truncf %688 : vector<2x128xf32> to vector<2x128xbf16>
    %cst_173 = arith.constant dense<0.000000e+00> : vector<2x512xf32>
    %693 = tpu.matmul %692, %652, %cst_173 {dimension_numbers = #tpu.dot_dimension_numbers<[1], [0], [0], [1], [0, 0, 1, 1], [], []>} : vector<2x128xbf16>, vector<128x512xbf16>, vector<2x512xf32> -> vector<2x512xf32>
    %694 = arith.addf %691, %693 : vector<2x512xf32>
    %695 = vector.extract_strided_slice %694 {offsets = [0, 0], sizes = [2, 128], strides = [1, 1]} : vector<2x512xf32> to vector<2x128xf32>
    %cst_174 = arith.constant 0.000000e+00 : f32
    %696 = vector.broadcast %cst_174 : f32 to vector<2x128xf32>
    %697 = arith.subf %696, %695 : vector<2x128xf32>
    %698 = math.exp %697 : vector<2x128xf32>
    %cst_175 = arith.constant 1.000000e+00 : f32
    %699 = vector.broadcast %cst_175 : f32 to vector<2x128xf32>
    %700 = arith.addf %699, %698 : vector<2x128xf32>
    %701 = tpu.reciprocal %700 {approx = true} : vector<2x128xf32> -> vector<2x128xf32>
    %702 = vector.extract_strided_slice %694 {offsets = [0, 128], sizes = [2, 128], strides = [1, 1]} : vector<2x512xf32> to vector<2x128xf32>
    %cst_176 = arith.constant 0.000000e+00 : f32
    %703 = vector.broadcast %cst_176 : f32 to vector<2x128xf32>
    %704 = arith.subf %703, %702 : vector<2x128xf32>
    %705 = math.exp %704 : vector<2x128xf32>
    %cst_177 = arith.constant 1.000000e+00 : f32
    %706 = vector.broadcast %cst_177 : f32 to vector<2x128xf32>
    %707 = arith.addf %706, %705 : vector<2x128xf32>
    %708 = tpu.reciprocal %707 {approx = true} : vector<2x128xf32> -> vector<2x128xf32>
    %709 = vector.extract_strided_slice %694 {offsets = [0, 256], sizes = [2, 128], strides = [1, 1]} : vector<2x512xf32> to vector<2x128xf32>
    %710 = math.tanh %709 : vector<2x128xf32>
    %711 = vector.extract_strided_slice %694 {offsets = [0, 384], sizes = [2, 128], strides = [1, 1]} : vector<2x512xf32> to vector<2x128xf32>
    %cst_178 = arith.constant 0.000000e+00 : f32
    %712 = vector.broadcast %cst_178 : f32 to vector<2x128xf32>
    %713 = arith.subf %712, %711 : vector<2x128xf32>
    %714 = math.exp %713 : vector<2x128xf32>
    %cst_179 = arith.constant 1.000000e+00 : f32
    %715 = vector.broadcast %cst_179 : f32 to vector<2x128xf32>
    %716 = arith.addf %715, %714 : vector<2x128xf32>
    %717 = tpu.reciprocal %716 {approx = true} : vector<2x128xf32> -> vector<2x128xf32>
    %718 = arith.mulf %708, %686 : vector<2x128xf32>
    %719 = arith.mulf %701, %710 : vector<2x128xf32>
    %720 = arith.addf %718, %719 : vector<2x128xf32>
    %721 = math.tanh %720 : vector<2x128xf32>
    %722 = arith.mulf %717, %721 : vector<2x128xf32>
    %c2_i32_180 = arith.constant 2 : i32
    %723 = arith.index_cast %c2_i32_180 : i32 to index
    %c0_181 = arith.constant 0 : index
    %c0_182 = arith.constant 0 : index
    %724 = vector.load %arg10[%723, %c0_181, %c0_182] : memref<8x2x512xf32, #tpu.memory_space<vmem>>, vector<1x2x512xf32>
    %725 = vector.shape_cast %724 : vector<1x2x512xf32> to vector<2x512xf32>
    %726 = arith.truncf %722 : vector<2x128xf32> to vector<2x128xbf16>
    %cst_183 = arith.constant dense<0.000000e+00> : vector<2x512xf32>
    %727 = tpu.matmul %726, %652, %cst_183 {dimension_numbers = #tpu.dot_dimension_numbers<[1], [0], [0], [1], [0, 0, 1, 1], [], []>} : vector<2x128xbf16>, vector<128x512xbf16>, vector<2x512xf32> -> vector<2x512xf32>
    %728 = arith.addf %725, %727 : vector<2x512xf32>
    %729 = vector.extract_strided_slice %728 {offsets = [0, 0], sizes = [2, 128], strides = [1, 1]} : vector<2x512xf32> to vector<2x128xf32>
    %cst_184 = arith.constant 0.000000e+00 : f32
    %730 = vector.broadcast %cst_184 : f32 to vector<2x128xf32>
    %731 = arith.subf %730, %729 : vector<2x128xf32>
    %732 = math.exp %731 : vector<2x128xf32>
    %cst_185 = arith.constant 1.000000e+00 : f32
    %733 = vector.broadcast %cst_185 : f32 to vector<2x128xf32>
    %734 = arith.addf %733, %732 : vector<2x128xf32>
    %735 = tpu.reciprocal %734 {approx = true} : vector<2x128xf32> -> vector<2x128xf32>
    %736 = vector.extract_strided_slice %728 {offsets = [0, 128], sizes = [2, 128], strides = [1, 1]} : vector<2x512xf32> to vector<2x128xf32>
    %cst_186 = arith.constant 0.000000e+00 : f32
    %737 = vector.broadcast %cst_186 : f32 to vector<2x128xf32>
    %738 = arith.subf %737, %736 : vector<2x128xf32>
    %739 = math.exp %738 : vector<2x128xf32>
    %cst_187 = arith.constant 1.000000e+00 : f32
    %740 = vector.broadcast %cst_187 : f32 to vector<2x128xf32>
    %741 = arith.addf %740, %739 : vector<2x128xf32>
    %742 = tpu.reciprocal %741 {approx = true} : vector<2x128xf32> -> vector<2x128xf32>
    %743 = vector.extract_strided_slice %728 {offsets = [0, 256], sizes = [2, 128], strides = [1, 1]} : vector<2x512xf32> to vector<2x128xf32>
    %744 = math.tanh %743 : vector<2x128xf32>
    %745 = vector.extract_strided_slice %728 {offsets = [0, 384], sizes = [2, 128], strides = [1, 1]} : vector<2x512xf32> to vector<2x128xf32>
    %cst_188 = arith.constant 0.000000e+00 : f32
    %746 = vector.broadcast %cst_188 : f32 to vector<2x128xf32>
    %747 = arith.subf %746, %745 : vector<2x128xf32>
    %748 = math.exp %747 : vector<2x128xf32>
    %cst_189 = arith.constant 1.000000e+00 : f32
    %749 = vector.broadcast %cst_189 : f32 to vector<2x128xf32>
    %750 = arith.addf %749, %748 : vector<2x128xf32>
    %751 = tpu.reciprocal %750 {approx = true} : vector<2x128xf32> -> vector<2x128xf32>
    %752 = arith.mulf %742, %720 : vector<2x128xf32>
    %753 = arith.mulf %735, %744 : vector<2x128xf32>
    %754 = arith.addf %752, %753 : vector<2x128xf32>
    %755 = math.tanh %754 : vector<2x128xf32>
    %756 = arith.mulf %751, %755 : vector<2x128xf32>
    %c3_i32_190 = arith.constant 3 : i32
    %757 = arith.index_cast %c3_i32_190 : i32 to index
    %c0_191 = arith.constant 0 : index
    %c0_192 = arith.constant 0 : index
    %758 = vector.load %arg10[%757, %c0_191, %c0_192] : memref<8x2x512xf32, #tpu.memory_space<vmem>>, vector<1x2x512xf32>
    %759 = vector.shape_cast %758 : vector<1x2x512xf32> to vector<2x512xf32>
    %760 = arith.truncf %756 : vector<2x128xf32> to vector<2x128xbf16>
    %cst_193 = arith.constant dense<0.000000e+00> : vector<2x512xf32>
    %761 = tpu.matmul %760, %652, %cst_193 {dimension_numbers = #tpu.dot_dimension_numbers<[1], [0], [0], [1], [0, 0, 1, 1], [], []>} : vector<2x128xbf16>, vector<128x512xbf16>, vector<2x512xf32> -> vector<2x512xf32>
    %762 = arith.addf %759, %761 : vector<2x512xf32>
    %763 = vector.extract_strided_slice %762 {offsets = [0, 0], sizes = [2, 128], strides = [1, 1]} : vector<2x512xf32> to vector<2x128xf32>
    %cst_194 = arith.constant 0.000000e+00 : f32
    %764 = vector.broadcast %cst_194 : f32 to vector<2x128xf32>
    %765 = arith.subf %764, %763 : vector<2x128xf32>
    %766 = math.exp %765 : vector<2x128xf32>
    %cst_195 = arith.constant 1.000000e+00 : f32
    %767 = vector.broadcast %cst_195 : f32 to vector<2x128xf32>
    %768 = arith.addf %767, %766 : vector<2x128xf32>
    %769 = tpu.reciprocal %768 {approx = true} : vector<2x128xf32> -> vector<2x128xf32>
    %770 = vector.extract_strided_slice %762 {offsets = [0, 128], sizes = [2, 128], strides = [1, 1]} : vector<2x512xf32> to vector<2x128xf32>
    %cst_196 = arith.constant 0.000000e+00 : f32
    %771 = vector.broadcast %cst_196 : f32 to vector<2x128xf32>
    %772 = arith.subf %771, %770 : vector<2x128xf32>
    %773 = math.exp %772 : vector<2x128xf32>
    %cst_197 = arith.constant 1.000000e+00 : f32
    %774 = vector.broadcast %cst_197 : f32 to vector<2x128xf32>
    %775 = arith.addf %774, %773 : vector<2x128xf32>
    %776 = tpu.reciprocal %775 {approx = true} : vector<2x128xf32> -> vector<2x128xf32>
    %777 = vector.extract_strided_slice %762 {offsets = [0, 256], sizes = [2, 128], strides = [1, 1]} : vector<2x512xf32> to vector<2x128xf32>
    %778 = math.tanh %777 : vector<2x128xf32>
    %779 = vector.extract_strided_slice %762 {offsets = [0, 384], sizes = [2, 128], strides = [1, 1]} : vector<2x512xf32> to vector<2x128xf32>
    %cst_198 = arith.constant 0.000000e+00 : f32
    %780 = vector.broadcast %cst_198 : f32 to vector<2x128xf32>
    %781 = arith.subf %780, %779 : vector<2x128xf32>
    %782 = math.exp %781 : vector<2x128xf32>
    %cst_199 = arith.constant 1.000000e+00 : f32
    %783 = vector.broadcast %cst_199 : f32 to vector<2x128xf32>
    %784 = arith.addf %783, %782 : vector<2x128xf32>
    %785 = tpu.reciprocal %784 {approx = true} : vector<2x128xf32> -> vector<2x128xf32>
    %786 = arith.mulf %776, %754 : vector<2x128xf32>
    %787 = arith.mulf %769, %778 : vector<2x128xf32>
    %788 = arith.addf %786, %787 : vector<2x128xf32>
    %789 = math.tanh %788 : vector<2x128xf32>
    %790 = arith.mulf %785, %789 : vector<2x128xf32>
    %c4_i32_200 = arith.constant 4 : i32
    %791 = arith.index_cast %c4_i32_200 : i32 to index
    %c0_201 = arith.constant 0 : index
    %c0_202 = arith.constant 0 : index
    %792 = vector.load %arg10[%791, %c0_201, %c0_202] : memref<8x2x512xf32, #tpu.memory_space<vmem>>, vector<1x2x512xf32>
    %793 = vector.shape_cast %792 : vector<1x2x512xf32> to vector<2x512xf32>
    %794 = arith.truncf %790 : vector<2x128xf32> to vector<2x128xbf16>
    %cst_203 = arith.constant dense<0.000000e+00> : vector<2x512xf32>
    %795 = tpu.matmul %794, %652, %cst_203 {dimension_numbers = #tpu.dot_dimension_numbers<[1], [0], [0], [1], [0, 0, 1, 1], [], []>} : vector<2x128xbf16>, vector<128x512xbf16>, vector<2x512xf32> -> vector<2x512xf32>
    %796 = arith.addf %793, %795 : vector<2x512xf32>
    %797 = vector.extract_strided_slice %796 {offsets = [0, 0], sizes = [2, 128], strides = [1, 1]} : vector<2x512xf32> to vector<2x128xf32>
    %cst_204 = arith.constant 0.000000e+00 : f32
    %798 = vector.broadcast %cst_204 : f32 to vector<2x128xf32>
    %799 = arith.subf %798, %797 : vector<2x128xf32>
    %800 = math.exp %799 : vector<2x128xf32>
    %cst_205 = arith.constant 1.000000e+00 : f32
    %801 = vector.broadcast %cst_205 : f32 to vector<2x128xf32>
    %802 = arith.addf %801, %800 : vector<2x128xf32>
    %803 = tpu.reciprocal %802 {approx = true} : vector<2x128xf32> -> vector<2x128xf32>
    %804 = vector.extract_strided_slice %796 {offsets = [0, 128], sizes = [2, 128], strides = [1, 1]} : vector<2x512xf32> to vector<2x128xf32>
    %cst_206 = arith.constant 0.000000e+00 : f32
    %805 = vector.broadcast %cst_206 : f32 to vector<2x128xf32>
    %806 = arith.subf %805, %804 : vector<2x128xf32>
    %807 = math.exp %806 : vector<2x128xf32>
    %cst_207 = arith.constant 1.000000e+00 : f32
    %808 = vector.broadcast %cst_207 : f32 to vector<2x128xf32>
    %809 = arith.addf %808, %807 : vector<2x128xf32>
    %810 = tpu.reciprocal %809 {approx = true} : vector<2x128xf32> -> vector<2x128xf32>
    %811 = vector.extract_strided_slice %796 {offsets = [0, 256], sizes = [2, 128], strides = [1, 1]} : vector<2x512xf32> to vector<2x128xf32>
    %812 = math.tanh %811 : vector<2x128xf32>
    %813 = vector.extract_strided_slice %796 {offsets = [0, 384], sizes = [2, 128], strides = [1, 1]} : vector<2x512xf32> to vector<2x128xf32>
    %cst_208 = arith.constant 0.000000e+00 : f32
    %814 = vector.broadcast %cst_208 : f32 to vector<2x128xf32>
    %815 = arith.subf %814, %813 : vector<2x128xf32>
    %816 = math.exp %815 : vector<2x128xf32>
    %cst_209 = arith.constant 1.000000e+00 : f32
    %817 = vector.broadcast %cst_209 : f32 to vector<2x128xf32>
    %818 = arith.addf %817, %816 : vector<2x128xf32>
    %819 = tpu.reciprocal %818 {approx = true} : vector<2x128xf32> -> vector<2x128xf32>
    %820 = arith.mulf %810, %788 : vector<2x128xf32>
    %821 = arith.mulf %803, %812 : vector<2x128xf32>
    %822 = arith.addf %820, %821 : vector<2x128xf32>
    %823 = math.tanh %822 : vector<2x128xf32>
    %824 = arith.mulf %819, %823 : vector<2x128xf32>
    %c5_i32_210 = arith.constant 5 : i32
    %825 = arith.index_cast %c5_i32_210 : i32 to index
    %c0_211 = arith.constant 0 : index
    %c0_212 = arith.constant 0 : index
    %826 = vector.load %arg10[%825, %c0_211, %c0_212] : memref<8x2x512xf32, #tpu.memory_space<vmem>>, vector<1x2x512xf32>
    %827 = vector.shape_cast %826 : vector<1x2x512xf32> to vector<2x512xf32>
    %828 = arith.truncf %824 : vector<2x128xf32> to vector<2x128xbf16>
    %cst_213 = arith.constant dense<0.000000e+00> : vector<2x512xf32>
    %829 = tpu.matmul %828, %652, %cst_213 {dimension_numbers = #tpu.dot_dimension_numbers<[1], [0], [0], [1], [0, 0, 1, 1], [], []>} : vector<2x128xbf16>, vector<128x512xbf16>, vector<2x512xf32> -> vector<2x512xf32>
    %830 = arith.addf %827, %829 : vector<2x512xf32>
    %831 = vector.extract_strided_slice %830 {offsets = [0, 0], sizes = [2, 128], strides = [1, 1]} : vector<2x512xf32> to vector<2x128xf32>
    %cst_214 = arith.constant 0.000000e+00 : f32
    %832 = vector.broadcast %cst_214 : f32 to vector<2x128xf32>
    %833 = arith.subf %832, %831 : vector<2x128xf32>
    %834 = math.exp %833 : vector<2x128xf32>
    %cst_215 = arith.constant 1.000000e+00 : f32
    %835 = vector.broadcast %cst_215 : f32 to vector<2x128xf32>
    %836 = arith.addf %835, %834 : vector<2x128xf32>
    %837 = tpu.reciprocal %836 {approx = true} : vector<2x128xf32> -> vector<2x128xf32>
    %838 = vector.extract_strided_slice %830 {offsets = [0, 128], sizes = [2, 128], strides = [1, 1]} : vector<2x512xf32> to vector<2x128xf32>
    %cst_216 = arith.constant 0.000000e+00 : f32
    %839 = vector.broadcast %cst_216 : f32 to vector<2x128xf32>
    %840 = arith.subf %839, %838 : vector<2x128xf32>
    %841 = math.exp %840 : vector<2x128xf32>
    %cst_217 = arith.constant 1.000000e+00 : f32
    %842 = vector.broadcast %cst_217 : f32 to vector<2x128xf32>
    %843 = arith.addf %842, %841 : vector<2x128xf32>
    %844 = tpu.reciprocal %843 {approx = true} : vector<2x128xf32> -> vector<2x128xf32>
    %845 = vector.extract_strided_slice %830 {offsets = [0, 256], sizes = [2, 128], strides = [1, 1]} : vector<2x512xf32> to vector<2x128xf32>
    %846 = math.tanh %845 : vector<2x128xf32>
    %847 = vector.extract_strided_slice %830 {offsets = [0, 384], sizes = [2, 128], strides = [1, 1]} : vector<2x512xf32> to vector<2x128xf32>
    %cst_218 = arith.constant 0.000000e+00 : f32
    %848 = vector.broadcast %cst_218 : f32 to vector<2x128xf32>
    %849 = arith.subf %848, %847 : vector<2x128xf32>
    %850 = math.exp %849 : vector<2x128xf32>
    %cst_219 = arith.constant 1.000000e+00 : f32
    %851 = vector.broadcast %cst_219 : f32 to vector<2x128xf32>
    %852 = arith.addf %851, %850 : vector<2x128xf32>
    %853 = tpu.reciprocal %852 {approx = true} : vector<2x128xf32> -> vector<2x128xf32>
    %854 = arith.mulf %844, %822 : vector<2x128xf32>
    %855 = arith.mulf %837, %846 : vector<2x128xf32>
    %856 = arith.addf %854, %855 : vector<2x128xf32>
    %857 = math.tanh %856 : vector<2x128xf32>
    %858 = arith.mulf %853, %857 : vector<2x128xf32>
    %c6_i32_220 = arith.constant 6 : i32
    %859 = arith.index_cast %c6_i32_220 : i32 to index
    %c0_221 = arith.constant 0 : index
    %c0_222 = arith.constant 0 : index
    %860 = vector.load %arg10[%859, %c0_221, %c0_222] : memref<8x2x512xf32, #tpu.memory_space<vmem>>, vector<1x2x512xf32>
    %861 = vector.shape_cast %860 : vector<1x2x512xf32> to vector<2x512xf32>
    %862 = arith.truncf %858 : vector<2x128xf32> to vector<2x128xbf16>
    %cst_223 = arith.constant dense<0.000000e+00> : vector<2x512xf32>
    %863 = tpu.matmul %862, %652, %cst_223 {dimension_numbers = #tpu.dot_dimension_numbers<[1], [0], [0], [1], [0, 0, 1, 1], [], []>} : vector<2x128xbf16>, vector<128x512xbf16>, vector<2x512xf32> -> vector<2x512xf32>
    %864 = arith.addf %861, %863 : vector<2x512xf32>
    %865 = vector.extract_strided_slice %864 {offsets = [0, 0], sizes = [2, 128], strides = [1, 1]} : vector<2x512xf32> to vector<2x128xf32>
    %cst_224 = arith.constant 0.000000e+00 : f32
    %866 = vector.broadcast %cst_224 : f32 to vector<2x128xf32>
    %867 = arith.subf %866, %865 : vector<2x128xf32>
    %868 = math.exp %867 : vector<2x128xf32>
    %cst_225 = arith.constant 1.000000e+00 : f32
    %869 = vector.broadcast %cst_225 : f32 to vector<2x128xf32>
    %870 = arith.addf %869, %868 : vector<2x128xf32>
    %871 = tpu.reciprocal %870 {approx = true} : vector<2x128xf32> -> vector<2x128xf32>
    %872 = vector.extract_strided_slice %864 {offsets = [0, 128], sizes = [2, 128], strides = [1, 1]} : vector<2x512xf32> to vector<2x128xf32>
    %cst_226 = arith.constant 0.000000e+00 : f32
    %873 = vector.broadcast %cst_226 : f32 to vector<2x128xf32>
    %874 = arith.subf %873, %872 : vector<2x128xf32>
    %875 = math.exp %874 : vector<2x128xf32>
    %cst_227 = arith.constant 1.000000e+00 : f32
    %876 = vector.broadcast %cst_227 : f32 to vector<2x128xf32>
    %877 = arith.addf %876, %875 : vector<2x128xf32>
    %878 = tpu.reciprocal %877 {approx = true} : vector<2x128xf32> -> vector<2x128xf32>
    %879 = vector.extract_strided_slice %864 {offsets = [0, 256], sizes = [2, 128], strides = [1, 1]} : vector<2x512xf32> to vector<2x128xf32>
    %880 = math.tanh %879 : vector<2x128xf32>
    %881 = vector.extract_strided_slice %864 {offsets = [0, 384], sizes = [2, 128], strides = [1, 1]} : vector<2x512xf32> to vector<2x128xf32>
    %cst_228 = arith.constant 0.000000e+00 : f32
    %882 = vector.broadcast %cst_228 : f32 to vector<2x128xf32>
    %883 = arith.subf %882, %881 : vector<2x128xf32>
    %884 = math.exp %883 : vector<2x128xf32>
    %cst_229 = arith.constant 1.000000e+00 : f32
    %885 = vector.broadcast %cst_229 : f32 to vector<2x128xf32>
    %886 = arith.addf %885, %884 : vector<2x128xf32>
    %887 = tpu.reciprocal %886 {approx = true} : vector<2x128xf32> -> vector<2x128xf32>
    %888 = arith.mulf %878, %856 : vector<2x128xf32>
    %889 = arith.mulf %871, %880 : vector<2x128xf32>
    %890 = arith.addf %888, %889 : vector<2x128xf32>
    %891 = math.tanh %890 : vector<2x128xf32>
    %892 = arith.mulf %887, %891 : vector<2x128xf32>
    %c7_i32_230 = arith.constant 7 : i32
    %893 = arith.index_cast %c7_i32_230 : i32 to index
    %c0_231 = arith.constant 0 : index
    %c0_232 = arith.constant 0 : index
    %894 = vector.load %arg10[%893, %c0_231, %c0_232] : memref<8x2x512xf32, #tpu.memory_space<vmem>>, vector<1x2x512xf32>
    %895 = vector.shape_cast %894 : vector<1x2x512xf32> to vector<2x512xf32>
    %896 = arith.truncf %892 : vector<2x128xf32> to vector<2x128xbf16>
    %cst_233 = arith.constant dense<0.000000e+00> : vector<2x512xf32>
    %897 = tpu.matmul %896, %652, %cst_233 {dimension_numbers = #tpu.dot_dimension_numbers<[1], [0], [0], [1], [0, 0, 1, 1], [], []>} : vector<2x128xbf16>, vector<128x512xbf16>, vector<2x512xf32> -> vector<2x512xf32>
    %898 = arith.addf %895, %897 : vector<2x512xf32>
    %899 = vector.extract_strided_slice %898 {offsets = [0, 0], sizes = [2, 128], strides = [1, 1]} : vector<2x512xf32> to vector<2x128xf32>
    %cst_234 = arith.constant 0.000000e+00 : f32
    %900 = vector.broadcast %cst_234 : f32 to vector<2x128xf32>
    %901 = arith.subf %900, %899 : vector<2x128xf32>
    %902 = math.exp %901 : vector<2x128xf32>
    %cst_235 = arith.constant 1.000000e+00 : f32
    %903 = vector.broadcast %cst_235 : f32 to vector<2x128xf32>
    %904 = arith.addf %903, %902 : vector<2x128xf32>
    %905 = tpu.reciprocal %904 {approx = true} : vector<2x128xf32> -> vector<2x128xf32>
    %906 = vector.extract_strided_slice %898 {offsets = [0, 128], sizes = [2, 128], strides = [1, 1]} : vector<2x512xf32> to vector<2x128xf32>
    %cst_236 = arith.constant 0.000000e+00 : f32
    %907 = vector.broadcast %cst_236 : f32 to vector<2x128xf32>
    %908 = arith.subf %907, %906 : vector<2x128xf32>
    %909 = math.exp %908 : vector<2x128xf32>
    %cst_237 = arith.constant 1.000000e+00 : f32
    %910 = vector.broadcast %cst_237 : f32 to vector<2x128xf32>
    %911 = arith.addf %910, %909 : vector<2x128xf32>
    %912 = tpu.reciprocal %911 {approx = true} : vector<2x128xf32> -> vector<2x128xf32>
    %913 = vector.extract_strided_slice %898 {offsets = [0, 256], sizes = [2, 128], strides = [1, 1]} : vector<2x512xf32> to vector<2x128xf32>
    %914 = math.tanh %913 : vector<2x128xf32>
    %915 = vector.extract_strided_slice %898 {offsets = [0, 384], sizes = [2, 128], strides = [1, 1]} : vector<2x512xf32> to vector<2x128xf32>
    %cst_238 = arith.constant 0.000000e+00 : f32
    %916 = vector.broadcast %cst_238 : f32 to vector<2x128xf32>
    %917 = arith.subf %916, %915 : vector<2x128xf32>
    %918 = math.exp %917 : vector<2x128xf32>
    %cst_239 = arith.constant 1.000000e+00 : f32
    %919 = vector.broadcast %cst_239 : f32 to vector<2x128xf32>
    %920 = arith.addf %919, %918 : vector<2x128xf32>
    %921 = tpu.reciprocal %920 {approx = true} : vector<2x128xf32> -> vector<2x128xf32>
    %922 = arith.mulf %912, %890 : vector<2x128xf32>
    %923 = arith.mulf %905, %914 : vector<2x128xf32>
    %924 = arith.addf %922, %923 : vector<2x128xf32>
    %925 = math.tanh %924 : vector<2x128xf32>
    %926 = arith.mulf %921, %925 : vector<2x128xf32>
    %c8_i32_240 = arith.constant 8 : i32
    %927 = arith.truncf %926 : vector<2x128xf32> to vector<2x128xbf16>
    %c0_241 = arith.constant 0 : index
    %c0_242 = arith.constant 0 : index
    %928 = vector.load %arg7[%c0_241, %c0_242] : memref<128x1xbf16, #tpu.memory_space<vmem>>, vector<128x1xbf16>
    %cst_243 = arith.constant dense<0.000000e+00> : vector<2x1xf32>
    %929 = tpu.matmul %927, %928, %cst_243 {dimension_numbers = #tpu.dot_dimension_numbers<[1], [0], [0], [1], [0, 0, 1, 1], [], []>} : vector<2x128xbf16>, vector<128x1xbf16>, vector<2x1xf32> -> vector<2x1xf32>
    %c0_244 = arith.constant 0 : index
    %c0_245 = arith.constant 0 : index
    %930 = vector.load %arg8[%c0_244, %c0_245] : memref<1x1xf32, #tpu.memory_space<vmem>>, vector<1x1xf32>
    %931 = vector.broadcast %930 : vector<1x1xf32> to vector<2x1xf32>
    %932 = arith.addf %929, %931 : vector<2x1xf32>
    %c0_246 = arith.constant 0 : index
    %c0_247 = arith.constant 0 : index
    %933 = vector.load %arg9[%c0_246, %c0_247] : memref<2x1xf32, #tpu.memory_space<vmem>>, vector<2x1xf32>
    tpu.vector_store %arg9[%c0_246, %c0_247], %932 {strides = array<i32>} : memref<2x1xf32, #tpu.memory_space<vmem>>, vector<2x1xf32>,
    return
  }
}

</mosaic_0001>

<llo_original>
// kernel: nnn_forward.1
$region0: #{nnn_forward.1}
  #allocation0 [shape = 'u32[]', space=smem, size = 0x4, offset = 0x4, fixed_abs, tag = 'smem constant byte address 0x4 - core index']
  #allocation1 [shape = 'u32[144,128]{1,0:T(1,128)}', space=vmem, size = 0x12000, scoped, tag = 'internal scratch']
  #allocation2 [shape = 'f32[8,2,512]{2,1,0:T(2,128)}', space=vmem, size = 0x8000, scoped, tag = 'scratch operand']
  #allocation3 [shape = 'f32[1,1]{1,0:T(1,128)S(1)}', space=vmem, size = 0x200, scoped, tag = 'scoped memory for nnn_forward.1']
  %s0 = inlined_call_operand.vmem [shape: f32[16,16], index: 0, kind: input, shape index: {}]
  %s1 = inlined_call_operand.vmem [shape: f32[32,1], index: 1, kind: input, shape index: {}]
  %s2 = inlined_call_operand.vmem [shape: bf16[32,8], index: 2, kind: input, shape index: {}]
  %s3 = inlined_call_operand.vmem [shape: f32[32,1], index: 3, kind: input, shape index: {}]
  %s4 = inlined_call_operand.vmem [shape: bf16[8,512], index: 4, kind: input, shape index: {}]
  %s5 = inlined_call_operand.vmem [shape: bf16[128,512], index: 5, kind: input, shape index: {}]
  %s6 = inlined_call_operand.vmem [shape: f32[1,512], index: 6, kind: input, shape index: {}]
  %s7 = inlined_call_operand.vmem [shape: bf16[128,1], index: 7, kind: input, shape index: {}]
  %s8 = inlined_call_operand.<no memory space> [shape: f32[1,1], index: 8, kind: input, shape index: {}]
  %s9 = inlined_call_operand.vmem [shape: f32[2,1], index: 9, kind: output, shape index: {}]
  %s10 = sld [smem:[#allocation0]]
  $region46: #{nnn_forward.1} parent=0
    _
  %s12 = ssub.s32 1, %s10
  %s13 = scalar_select 0, %s12, %s10
  %v14 = vstv %s8
  %15 = vst [vmem:[#allocation3] sm:$0x1] %v14
  // Predicated region
  $region2: #{nnn_forward.1} parent=0 // pred_check
    _
  $region3: #{nnn_forward.1} parent=0 // pred_check_branch
    %17 = sbr.rel (0) target = $region5
  $region4: #{nnn_forward.1} parent=0 // pred_region
    _
  $region5: #{nnn_forward.1} parent=0 // pred_fallthru
    _
  // Predicated region
  $region6: #{nnn_forward.1} parent=0 // pred_check
    _
  $region7: #{nnn_forward.1} parent=0 // pred_check_branch
    %19 = sbr.rel (0) target = $region9
  $region8: #{nnn_forward.1} parent=0 // pred_region
    _
  $region9: #{nnn_forward.1} parent=0 // pred_fallthru
    _
  // Predicated region
  $region10: #{nnn_forward.1} parent=0 // pred_check
    _
  $region11: #{nnn_forward.1} parent=0 // pred_check_branch
    %21 = sbr.rel (0) target = $region13
  $region12: #{nnn_forward.1} parent=0 // pred_region
    _
  $region13: #{nnn_forward.1} parent=0 // pred_fallthru
    _
  // Predicated region
  $region14: #{nnn_forward.1} parent=0 // pred_check
    _
  $region15: #{nnn_forward.1} parent=0 // pred_check_branch
    %23 = sbr.rel (0) target = $region17
  $region16: #{nnn_forward.1} parent=0 // pred_region
    _
  $region17: #{nnn_forward.1} parent=0 // pred_fallthru
    _
  // Predicated region
  $region18: #{nnn_forward.1} parent=0 // pred_check
    _
  $region19: #{nnn_forward.1} parent=0 // pred_check_branch
    %25 = sbr.rel (0) target = $region21
  $region20: #{nnn_forward.1} parent=0 // pred_region
    _
  $region21: #{nnn_forward.1} parent=0 // pred_fallthru
    _
  // Predicated region
  $region22: #{nnn_forward.1} parent=0 // pred_check
    _
  $region23: #{nnn_forward.1} parent=0 // pred_check_branch
    %27 = sbr.rel (0) target = $region25
  $region24: #{nnn_forward.1} parent=0 // pred_region
    _
  $region25: #{nnn_forward.1} parent=0 // pred_fallthru
    _
  // Predicated region
  $region26: #{nnn_forward.1} parent=0 // pred_check
    _
  $region27: #{nnn_forward.1} parent=0 // pred_check_branch
    %29 = sbr.rel (0) target = $region29
  $region28: #{nnn_forward.1} parent=0 // pred_region
    _
  $region29: #{nnn_forward.1} parent=0 // pred_fallthru
    _
  // Predicated region
  $region30: #{nnn_forward.1} parent=0 // pred_check
    _
  $region31: #{nnn_forward.1} parent=0 // pred_check_branch
    %31 = sbr.rel (0) target = $region33
  $region32: #{nnn_forward.1} parent=0 // pred_region
    _
  $region33: #{nnn_forward.1} parent=0 // pred_fallthru
    _
  // Predicated region
  $region34: #{nnn_forward.1} parent=0 // pred_check
    _
  $region35: #{nnn_forward.1} parent=0 // pred_check_branch
    %33 = sbr.rel (0) target = $region37
  $region36: #{nnn_forward.1} parent=0 // pred_region
    _
  $region37: #{nnn_forward.1} parent=0 // pred_fallthru
    _
  %v35 = vld [vmem:[%s1] sm:$0xff]
  %v36 = vld [vmem:[%s1 + $0x8] sm:$0xff]
  %v37 = vld [vmem:[%s1 + $0x10] sm:$0xff]
  %v38 = vld [vmem:[%s1 + $0x18] sm:$0xff]
  %v39 = vld [vmem:[%s2] sm:$0xf]
  %v40 = vld [vmem:[%s2 + $0x4] sm:$0xf]
  %v41 = vld [vmem:[%s2 + $0x8] sm:$0xf]
  %v42 = vld [vmem:[%s2 + $0xc] sm:$0xf]
  %v43 = vld [vmem:[%s3] sm:$0xff]
  %v44 = vld [vmem:[%s3 + $0x8] sm:$0xff]
  %v45 = vld [vmem:[%s3 + $0x10] sm:$0xff]
  %v46 = vld [vmem:[%s3 + $0x18] sm:$0xff]
  %v47 = vld [vmem:[%s0] sm:$0x1]
  %49 = vset.pattern.permute.xlu0 0
  %50 = vperm.xlu0 %49, %v35
  %v51 = vpop.permute.xlu0 %50
  %54 = vset.pattern.permute.xlu0 0
  %55 = vperm.xlu0 %54, %v36
  %v56 = vpop.permute.xlu0 %55
  %59 = vset.pattern.permute.xlu0 0
  %60 = vperm.xlu0 %59, %v37
  %v61 = vpop.permute.xlu0 %60
  %64 = vset.pattern.permute.xlu0 0
  %65 = vperm.xlu0 %64, %v38
  %v66 = vpop.permute.xlu0 %65
  %v68 = vlaneseq
  %v69 = vshrl.u32 %v68, 7
  %v70 = vsub.s32 0, %v69
  %v71 = vrot.slane %v47, %v70
  %v72 = vmul.f32 %v51, %v71
  %v73 = vmul.f32 %v56, %v71
  %v74 = vmul.f32 %v61, %v71
  %v75 = vmul.f32 %v66, %v71
  %v80 = vunpack.c.l.b16 %v39
  %v81 = vunpack.c.l.b16 %v40
  %v82 = vunpack.c.l.b16 %v41
  %v83 = vunpack.c.l.b16 %v42
  %v84 = vpack.c.b16 %v81, %v80
  %v85 = vpack.c.b16 %v83, %v82
  %vm86 = vcmask 64512
  %v88 = vsel %vm86, %v84, 0
  %v91 = vsel %vm86, %v85, 0
  %vm93 = vcmask 1043456
  %v95 = vsel %vm93, 0, 0
  %97 = vmatprep.subr.bf16.mxu0 0
  %98 = vmatpush1.bf16.msra.mxu0 0
  %99 = vmatprep.subr.bf16.mxu0 0
  %100 = vmatpush1.bf16.msra.mxu0 0
  %101 = vmatprep.subr.bf16.mxu0 0
  %102 = vmatpush1.bf16.msra.mxu0 0
  %103 = vmatprep.subr.bf16.mxu0 0
  %104 = vmatpush1.bf16.msra.mxu0 0
  %105 = vmatprep.subr.bf16.mxu0 0
  %106 = vmatpush1.bf16.msra.mxu0 0
  %107 = vmatprep.subr.bf16.mxu0 0
  %108 = vmatpush1.bf16.msra.mxu0 0
  %109 = vmatprep.subr.bf16.mxu0 0
  %110 = vmatpush1.bf16.msra.mxu0 0
  %111 = vmatprep.subr.bf16.mxu0 0
  %112 = vmatpush1.bf16.msra.mxu0 %v95
  %113 = vmatprep.subr.bf16.mxu0 0
  %114 = vmatpush2.bf16.msra.mxu0 0
  %115 = vmatprep.subr.bf16.mxu0 0
  %116 = vmatpush2.bf16.msra.mxu0 0
  %117 = vmatprep.subr.bf16.mxu0 0
  %118 = vmatpush2.bf16.msra.mxu0 0
  %119 = vmatprep.subr.bf16.mxu0 0
  %120 = vmatpush2.bf16.msra.mxu0 0
  %121 = vmatprep.subr.bf16.mxu0 0
  %122 = vmatpush2.bf16.msra.mxu0 0
  %123 = vmatprep.subr.bf16.mxu0 0
  %124 = vmatpush2.bf16.msra.mxu0 0
  %125 = vmatprep.subr.bf16.mxu0 0
  %126 = vmatpush2.bf16.msra.mxu0 0
  %127 = vmatprep.subr.bf16.mxu0 0
  %128 = vmatpush2.bf16.msra.mxu0 0
  %129 = vmatprep.mubr.bf16.mxu0 0
  %130 = vmatmul.mubr.bf16.gmra.mxu0 %v88
  %v131 = vpop.f32.mrf.mxu0
  %v132 = vadd.f32 0.0, %v131
  %v133 = vpop.f32.mrf.mxu0
  %v134 = vpop.f32.mrf.mxu0
  %v135 = vadd.f32 0.0, %v134
  %v136 = vpop.f32.mrf.mxu0
  %137 = vmatprep.mubr.bf16.mxu0 0
  %138 = vmatmul.mubr.bf16.gmra.mxu0 %v91
  %v139 = vpop.f32.mrf.mxu0
  %v140 = vadd.f32 0.0, %v139
  %v141 = vpop.f32.mrf.mxu0
  %v142 = vpop.f32.mrf.mxu0
  %v143 = vadd.f32 0.0, %v142
  %v144 = vpop.f32.mrf.mxu0
  %145 = vdwg.mxu0
  %v146 = vadd.f32 %v72, %v132
  %v147 = vadd.f32 %v73, %v135
  %v148 = vadd.f32 %v74, %v140
  %v149 = vadd.f32 %v75, %v143
  %151 = vset.pattern.permute.xlu0 0
  %152 = vperm.xlu0 %151, %v43
  %v153 = vpop.permute.xlu0 %152
  %156 = vset.pattern.permute.xlu0 0
  %157 = vperm.xlu0 %156, %v44
  %v158 = vpop.permute.xlu0 %157
  %161 = vset.pattern.permute.xlu0 0
  %162 = vperm.xlu0 %161, %v45
  %v163 = vpop.permute.xlu0 %162
  %166 = vset.pattern.permute.xlu0 0
  %167 = vperm.xlu0 %166, %v46
  %v168 = vpop.permute.xlu0 %167
  %v170 = vadd.f32 %v146, %v153
  %v171 = vadd.f32 %v147, %v158
  %v172 = vadd.f32 %v148, %v163
  %v173 = vadd.f32 %v149, %v168
  %v174 = vsub.f32 0.0, %v170
  %v175 = vmul.f32 %v174, 1.442695
  %v176 = vpow.pop %v175
  %v177 = vadd.f32 %v176, 1.0
  %v178 = vrcp.pop %v177
  %v179 = vsub.f32 0.0, %v171
  %v180 = vmul.f32 %v179, 1.442695
  %v181 = vpow.pop %v180
  %v182 = vadd.f32 %v181, 1.0
  %v183 = vrcp.pop %v182
  %v184 = vtanh.pop %v172
  %v185 = vsub.f32 0.0, %v173
  %v186 = vmul.f32 %v185, 1.442695
  %v187 = vpow.pop %v186
  %v188 = vadd.f32 %v187, 1.0
  %v189 = vrcp.pop %v188
  %v190 = vmul.f32 %v183, 0.0
  %v191 = vmul.f32 %v178, %v184
  %v192 = vadd.f32 %v190, %v191
  %v193 = vtanh.pop %v192
  %v194 = vmul.f32 %v189, %v193
  %v195 = vld [vmem:[%s0 + $0x1] sm:$0x1]
  %v196 = vlaneseq
  %v197 = vshrl.u32 %v196, 7
  %v198 = vsub.s32 0, %v197
  %v199 = vrot.slane %v195, %v198
  %v200 = vmul.f32 %v51, %v199
  %v201 = vmul.f32 %v56, %v199
  %v202 = vmul.f32 %v61, %v199
  %v203 = vmul.f32 %v66, %v199
  %v204 = vpack.c.bf16 %v194, %v194
  %v206 = vsel %vm93, %v204, 0
  %208 = vmatprep.subr.bf16.mxu0 0
  %209 = vmatpush1.bf16.msra.mxu0 0
  %210 = vmatprep.subr.bf16.mxu0 0
  %211 = vmatpush1.bf16.msra.mxu0 0
  %212 = vmatprep.subr.bf16.mxu0 0
  %213 = vmatpush1.bf16.msra.mxu0 0
  %214 = vmatprep.subr.bf16.mxu0 0
  %215 = vmatpush1.bf16.msra.mxu0 0
  %216 = vmatprep.subr.bf16.mxu0 0
  %217 = vmatpush1.bf16.msra.mxu0 0
  %218 = vmatprep.subr.bf16.mxu0 0
  %219 = vmatpush1.bf16.msra.mxu0 0
  %220 = vmatprep.subr.bf16.mxu0 0
  %221 = vmatpush1.bf16.msra.mxu0 0
  %222 = vmatprep.subr.bf16.mxu0 0
  %223 = vmatpush1.bf16.msra.mxu0 %v206
  %224 = vmatprep.subr.bf16.mxu0 0
  %225 = vmatpush2.bf16.msra.mxu0 0
  %226 = vmatprep.subr.bf16.mxu0 0
  %227 = vmatpush2.bf16.msra.mxu0 0
  %228 = vmatprep.subr.bf16.mxu0 0
  %229 = vmatpush2.bf16.msra.mxu0 0
  %230 = vmatprep.subr.bf16.mxu0 0
  %231 = vmatpush2.bf16.msra.mxu0 0
  %232 = vmatprep.subr.bf16.mxu0 0
  %233 = vmatpush2.bf16.msra.mxu0 0
  %234 = vmatprep.subr.bf16.mxu0 0
  %235 = vmatpush2.bf16.msra.mxu0 0
  %236 = vmatprep.subr.bf16.mxu0 0
  %237 = vmatpush2.bf16.msra.mxu0 0
  %238 = vmatprep.subr.bf16.mxu0 0
  %239 = vmatpush2.bf16.msra.mxu0 0
  %240 = vmatprep.mubr.bf16.mxu0 0
  %241 = vmatmul.mubr.bf16.gmra.mxu0 %v88
  %v242 = vpop.f32.mrf.mxu0
  %v243 = vadd.f32 0.0, %v242
  %v244 = vpop.f32.mrf.mxu0
  %v245 = vpop.f32.mrf.mxu0
  %v246 = vadd.f32 0.0, %v245
  %v247 = vpop.f32.mrf.mxu0
  %248 = vmatprep.mubr.bf16.mxu0 0
  %249 = vmatmul.mubr.bf16.gmra.mxu0 %v91
  %v250 = vpop.f32.mrf.mxu0
  %v251 = vadd.f32 0.0, %v250
  %v252 = vpop.f32.mrf.mxu0
  %v253 = vpop.f32.mrf.mxu0
  %v254 = vadd.f32 0.0, %v253
  %v255 = vpop.f32.mrf.mxu0
  %256 = vdwg.mxu0
  %v257 = vadd.f32 %v200, %v243
  %v258 = vadd.f32 %v201, %v246
  %v259 = vadd.f32 %v202, %v251
  %v260 = vadd.f32 %v203, %v254
  %v261 = vadd.f32 %v257, %v153
  %v262 = vadd.f32 %v258, %v158
  %v263 = vadd.f32 %v259, %v163
  %v264 = vadd.f32 %v260, %v168
  %v265 = vsub.f32 0.0, %v261
  %v266 = vmul.f32 %v265, 1.442695
  %v267 = vpow.pop %v266
  %v268 = vadd.f32 %v267, 1.0
  %v269 = vrcp.pop %v268
  %v270 = vsub.f32 0.0, %v262
  %v271 = vmul.f32 %v270, 1.442695
  %v272 = vpow.pop %v271
  %v273 = vadd.f32 %v272, 1.0
  %v274 = vrcp.pop %v273
  %v275 = vtanh.pop %v263
  %v276 = vsub.f32 0.0, %v264
  %v277 = vmul.f32 %v276, 1.442695
  %v278 = vpow.pop %v277
  %v279 = vadd.f32 %v278, 1.0
  %v280 = vrcp.pop %v279
  %v281 = vmul.f32 %v274, %v192
  %v282 = vmul.f32 %v269, %v275
  %v283 = vadd.f32 %v281, %v282
  %v284 = vtanh.pop %v283
  %v285 = vmul.f32 %v280, %v284
  %v286 = vld [vmem:[%s0 + $0x2] sm:$0x1]
  %v287 = vlaneseq
  %v288 = vshrl.u32 %v287, 7
  %v289 = vsub.s32 0, %v288
  %v290 = vrot.slane %v286, %v289
  %v291 = vmul.f32 %v51, %v290
  %v292 = vmul.f32 %v56, %v290
  %v293 = vmul.f32 %v61, %v290
  %v294 = vmul.f32 %v66, %v290
  %v295 = vpack.c.bf16 %v285, %v285
  %v297 = vsel %vm93, %v295, 0
  %299 = vmatprep.subr.bf16.mxu0 0
  %300 = vmatpush1.bf16.msra.mxu0 0
  %301 = vmatprep.subr.bf16.mxu0 0
  %302 = vmatpush1.bf16.msra.mxu0 0
  %303 = vmatprep.subr.bf16.mxu0 0
  %304 = vmatpush1.bf16.msra.mxu0 0
  %305 = vmatprep.subr.bf16.mxu0 0
  %306 = vmatpush1.bf16.msra.mxu0 0
  %307 = vmatprep.subr.bf16.mxu0 0
  %308 = vmatpush1.bf16.msra.mxu0 0
  %309 = vmatprep.subr.bf16.mxu0 0
  %310 = vmatpush1.bf16.msra.mxu0 0
  %311 = vmatprep.subr.bf16.mxu0 0
  %312 = vmatpush1.bf16.msra.mxu0 0
  %313 = vmatprep.subr.bf16.mxu0 0
  %314 = vmatpush1.bf16.msra.mxu0 %v297
  %315 = vmatprep.subr.bf16.mxu0 0
  %316 = vmatpush2.bf16.msra.mxu0 0
  %317 = vmatprep.subr.bf16.mxu0 0
  %318 = vmatpush2.bf16.msra.mxu0 0
  %319 = vmatprep.subr.bf16.mxu0 0
  %320 = vmatpush2.bf16.msra.mxu0 0
  %321 = vmatprep.subr.bf16.mxu0 0
  %322 = vmatpush2.bf16.msra.mxu0 0
  %323 = vmatprep.subr.bf16.mxu0 0
  %324 = vmatpush2.bf16.msra.mxu0 0
  %325 = vmatprep.subr.bf16.mxu0 0
  %326 = vmatpush2.bf16.msra.mxu0 0
  %327 = vmatprep.subr.bf16.mxu0 0
  %328 = vmatpush2.bf16.msra.mxu0 0
  %329 = vmatprep.subr.bf16.mxu0 0
  %330 = vmatpush2.bf16.msra.mxu0 0
  %331 = vmatprep.mubr.bf16.mxu0 0
  %332 = vmatmul.mubr.bf16.gmra.mxu0 %v88
  %v333 = vpop.f32.mrf.mxu0
  %v334 = vadd.f32 0.0, %v333
  %v335 = vpop.f32.mrf.mxu0
  %v336 = vpop.f32.mrf.mxu0
  %v337 = vadd.f32 0.0, %v336
  %v338 = vpop.f32.mrf.mxu0
  %339 = vmatprep.mubr.bf16.mxu0 0
  %340 = vmatmul.mubr.bf16.gmra.mxu0 %v91
  %v341 = vpop.f32.mrf.mxu0
  %v342 = vadd.f32 0.0, %v341
  %v343 = vpop.f32.mrf.mxu0
  %v344 = vpop.f32.mrf.mxu0
  %v345 = vadd.f32 0.0, %v344
  %v346 = vpop.f32.mrf.mxu0
  %347 = vdwg.mxu0
  %v348 = vadd.f32 %v291, %v334
  %v349 = vadd.f32 %v292, %v337
  %v350 = vadd.f32 %v293, %v342
  %v351 = vadd.f32 %v294, %v345
  %v352 = vadd.f32 %v348, %v153
  %v353 = vadd.f32 %v349, %v158
  %v354 = vadd.f32 %v350, %v163
  %v355 = vadd.f32 %v351, %v168
  %v356 = vsub.f32 0.0, %v352
  %v357 = vmul.f32 %v356, 1.442695
  %v358 = vpow.pop %v357
  %v359 = vadd.f32 %v358, 1.0
  %v360 = vrcp.pop %v359
  %v361 = vsub.f32 0.0, %v353
  %v362 = vmul.f32 %v361, 1.442695
  %v363 = vpow.pop %v362
  %v364 = vadd.f32 %v363, 1.0
  %v365 = vrcp.pop %v364
  %v366 = vtanh.pop %v354
  %v367 = vsub.f32 0.0, %v355
  %v368 = vmul.f32 %v367, 1.442695
  %v369 = vpow.pop %v368
  %v370 = vadd.f32 %v369, 1.0
  %v371 = vrcp.pop %v370
  %v372 = vmul.f32 %v365, %v283
  %v373 = vmul.f32 %v360, %v366
  %v374 = vadd.f32 %v372, %v373
  %v375 = vtanh.pop %v374
  %v376 = vmul.f32 %v371, %v375
  %v377 = vld [vmem:[%s0 + $0x3] sm:$0x1]
  %v378 = vlaneseq
  %v379 = vshrl.u32 %v378, 7
  %v380 = vsub.s32 0, %v379
  %v381 = vrot.slane %v377, %v380
  %v382 = vmul.f32 %v51, %v381
  %v383 = vmul.f32 %v56, %v381
  %v384 = vmul.f32 %v61, %v381
  %v385 = vmul.f32 %v66, %v381
  %v386 = vpack.c.bf16 %v376, %v376
  %v388 = vsel %vm93, %v386, 0
  %390 = vmatprep.subr.bf16.mxu0 0
  %391 = vmatpush1.bf16.msra.mxu0 0
  %392 = vmatprep.subr.bf16.mxu0 0
  %393 = vmatpush1.bf16.msra.mxu0 0
  %394 = vmatprep.subr.bf16.mxu0 0
  %395 = vmatpush1.bf16.msra.mxu0 0
  %396 = vmatprep.subr.bf16.mxu0 0
  %397 = vmatpush1.bf16.msra.mxu0 0
  %398 = vmatprep.subr.bf16.mxu0 0
  %399 = vmatpush1.bf16.msra.mxu0 0
  %400 = vmatprep.subr.bf16.mxu0 0
  %401 = vmatpush1.bf16.msra.mxu0 0
  %402 = vmatprep.subr.bf16.mxu0 0
  %403 = vmatpush1.bf16.msra.mxu0 0
  %404 = vmatprep.subr.bf16.mxu0 0
  %405 = vmatpush1.bf16.msra.mxu0 %v388
  %406 = vmatprep.subr.bf16.mxu0 0
  %407 = vmatpush2.bf16.msra.mxu0 0
  %408 = vmatprep.subr.bf16.mxu0 0
  %409 = vmatpush2.bf16.msra.mxu0 0
  %410 = vmatprep.subr.bf16.mxu0 0
  %411 = vmatpush2.bf16.msra.mxu0 0
  %412 = vmatprep.subr.bf16.mxu0 0
  %413 = vmatpush2.bf16.msra.mxu0 0
  %414 = vmatprep.subr.bf16.mxu0 0
  %415 = vmatpush2.bf16.msra.mxu0 0
  %416 = vmatprep.subr.bf16.mxu0 0
  %417 = vmatpush2.bf16.msra.mxu0 0
  %418 = vmatprep.subr.bf16.mxu0 0
  %419 = vmatpush2.bf16.msra.mxu0 0
  %420 = vmatprep.subr.bf16.mxu0 0
  %421 = vmatpush2.bf16.msra.mxu0 0
  %422 = vmatprep.mubr.bf16.mxu0 0
  %423 = vmatmul.mubr.bf16.gmra.mxu0 %v88
  %v424 = vpop.f32.mrf.mxu0
  %v425 = vadd.f32 0.0, %v424
  %v426 = vpop.f32.mrf.mxu0
  %v427 = vpop.f32.mrf.mxu0
  %v428 = vadd.f32 0.0, %v427
  %v429 = vpop.f32.mrf.mxu0
  %430 = vmatprep.mubr.bf16.mxu0 0
  %431 = vmatmul.mubr.bf16.gmra.mxu0 %v91
  %v432 = vpop.f32.mrf.mxu0
  %v433 = vadd.f32 0.0, %v432
  %v434 = vpop.f32.mrf.mxu0
  %v435 = vpop.f32.mrf.mxu0
  %v436 = vadd.f32 0.0, %v435
  %v437 = vpop.f32.mrf.mxu0
  %438 = vdwg.mxu0
  %v439 = vadd.f32 %v382, %v425
  %v440 = vadd.f32 %v383, %v428
  %v441 = vadd.f32 %v384, %v433
  %v442 = vadd.f32 %v385, %v436
  %v443 = vadd.f32 %v439, %v153
  %v444 = vadd.f32 %v440, %v158
  %v445 = vadd.f32 %v441, %v163
  %v446 = vadd.f32 %v442, %v168
  %v447 = vsub.f32 0.0, %v443
  %v448 = vmul.f32 %v447, 1.442695
  %v449 = vpow.pop %v448
  %v450 = vadd.f32 %v449, 1.0
  %v451 = vrcp.pop %v450
  %v452 = vsub.f32 0.0, %v444
  %v453 = vmul.f32 %v452, 1.442695
  %v454 = vpow.pop %v453
  %v455 = vadd.f32 %v454, 1.0
  %v456 = vrcp.pop %v455
  %v457 = vtanh.pop %v445
  %v458 = vsub.f32 0.0, %v446
  %v459 = vmul.f32 %v458, 1.442695
  %v460 = vpow.pop %v459
  %v461 = vadd.f32 %v460, 1.0
  %v462 = vrcp.pop %v461
  %v463 = vmul.f32 %v456, %v374
  %v464 = vmul.f32 %v451, %v457
  %v465 = vadd.f32 %v463, %v464
  %v466 = vtanh.pop %v465
  %v467 = vmul.f32 %v462, %v466
  %v468 = vld [vmem:[%s0 + $0x4] sm:$0x1]
  %v469 = vlaneseq
  %v470 = vshrl.u32 %v469, 7
  %v471 = vsub.s32 0, %v470
  %v472 = vrot.slane %v468, %v471
  %v473 = vmul.f32 %v51, %v472
  %v474 = vmul.f32 %v56, %v472
  %v475 = vmul.f32 %v61, %v472
  %v476 = vmul.f32 %v66, %v472
  %v477 = vpack.c.bf16 %v467, %v467
  %v479 = vsel %vm93, %v477, 0
  %481 = vmatprep.subr.bf16.mxu0 0
  %482 = vmatpush1.bf16.msra.mxu0 0
  %483 = vmatprep.subr.bf16.mxu0 0
  %484 = vmatpush1.bf16.msra.mxu0 0
  %485 = vmatprep.subr.bf16.mxu0 0
  %486 = vmatpush1.bf16.msra.mxu0 0
  %487 = vmatprep.subr.bf16.mxu0 0
  %488 = vmatpush1.bf16.msra.mxu0 0
  %489 = vmatprep.subr.bf16.mxu0 0
  %490 = vmatpush1.bf16.msra.mxu0 0
  %491 = vmatprep.subr.bf16.mxu0 0
  %492 = vmatpush1.bf16.msra.mxu0 0
  %493 = vmatprep.subr.bf16.mxu0 0
  %494 = vmatpush1.bf16.msra.mxu0 0
  %495 = vmatprep.subr.bf16.mxu0 0
  %496 = vmatpush1.bf16.msra.mxu0 %v479
  %497 = vmatprep.subr.bf16.mxu0 0
  %498 = vmatpush2.bf16.msra.mxu0 0
  %499 = vmatprep.subr.bf16.mxu0 0
  %500 = vmatpush2.bf16.msra.mxu0 0
  %501 = vmatprep.subr.bf16.mxu0 0
  %502 = vmatpush2.bf16.msra.mxu0 0
  %503 = vmatprep.subr.bf16.mxu0 0
  %504 = vmatpush2.bf16.msra.mxu0 0
  %505 = vmatprep.subr.bf16.mxu0 0
  %506 = vmatpush2.bf16.msra.mxu0 0
  %507 = vmatprep.subr.bf16.mxu0 0
  %508 = vmatpush2.bf16.msra.mxu0 0
  %509 = vmatprep.subr.bf16.mxu0 0
  %510 = vmatpush2.bf16.msra.mxu0 0
  %511 = vmatprep.subr.bf16.mxu0 0
  %512 = vmatpush2.bf16.msra.mxu0 0
  %513 = vmatprep.mubr.bf16.mxu0 0
  %514 = vmatmul.mubr.bf16.gmra.mxu0 %v88
  %v515 = vpop.f32.mrf.mxu0
  %v516 = vadd.f32 0.0, %v515
  %v517 = vpop.f32.mrf.mxu0
  %v518 = vpop.f32.mrf.mxu0
  %v519 = vadd.f32 0.0, %v518
  %v520 = vpop.f32.mrf.mxu0
  %521 = vmatprep.mubr.bf16.mxu0 0
  %522 = vmatmul.mubr.bf16.gmra.mxu0 %v91
  %v523 = vpop.f32.mrf.mxu0
  %v524 = vadd.f32 0.0, %v523
  %v525 = vpop.f32.mrf.mxu0
  %v526 = vpop.f32.mrf.mxu0
  %v527 = vadd.f32 0.0, %v526
  %v528 = vpop.f32.mrf.mxu0
  %529 = vdwg.mxu0
  %v530 = vadd.f32 %v473, %v516
  %v531 = vadd.f32 %v474, %v519
  %v532 = vadd.f32 %v475, %v524
  %v533 = vadd.f32 %v476, %v527
  %v534 = vadd.f32 %v530, %v153
  %v535 = vadd.f32 %v531, %v158
  %v536 = vadd.f32 %v532, %v163
  %v537 = vadd.f32 %v533, %v168
  %v538 = vsub.f32 0.0, %v534
  %v539 = vmul.f32 %v538, 1.442695
  %v540 = vpow.pop %v539
  %v541 = vadd.f32 %v540, 1.0
  %v542 = vrcp.pop %v541
  %v543 = vsub.f32 0.0, %v535
  %v544 = vmul.f32 %v543, 1.442695
  %v545 = vpow.pop %v544
  %v546 = vadd.f32 %v545, 1.0
  %v547 = vrcp.pop %v546
  %v548 = vtanh.pop %v536
  %v549 = vsub.f32 0.0, %v537
  %v550 = vmul.f32 %v549, 1.442695
  %v551 = vpow.pop %v550
  %v552 = vadd.f32 %v551, 1.0
  %v553 = vrcp.pop %v552
  %v554 = vmul.f32 %v547, %v465
  %v555 = vmul.f32 %v542, %v548
  %v556 = vadd.f32 %v554, %v555
  %v557 = vtanh.pop %v556
  %v558 = vmul.f32 %v553, %v557
  %v559 = vld [vmem:[%s0 + $0x5] sm:$0x1]
  %v560 = vlaneseq
  %v561 = vshrl.u32 %v560, 7
  %v562 = vsub.s32 0, %v561
  %v563 = vrot.slane %v559, %v562
  %v564 = vmul.f32 %v51, %v563
  %v565 = vmul.f32 %v56, %v563
  %v566 = vmul.f32 %v61, %v563
  %v567 = vmul.f32 %v66, %v563
  %v568 = vpack.c.bf16 %v558, %v558
  %v570 = vsel %vm93, %v568, 0
  %572 = vmatprep.subr.bf16.mxu0 0
  %573 = vmatpush1.bf16.msra.mxu0 0
  %574 = vmatprep.subr.bf16.mxu0 0
  %575 = vmatpush1.bf16.msra.mxu0 0
  %576 = vmatprep.subr.bf16.mxu0 0
  %577 = vmatpush1.bf16.msra.mxu0 0
  %578 = vmatprep.subr.bf16.mxu0 0
  %579 = vmatpush1.bf16.msra.mxu0 0
  %580 = vmatprep.subr.bf16.mxu0 0
  %581 = vmatpush1.bf16.msra.mxu0 0
  %582 = vmatprep.subr.bf16.mxu0 0
  %583 = vmatpush1.bf16.msra.mxu0 0
  %584 = vmatprep.subr.bf16.mxu0 0
  %585 = vmatpush1.bf16.msra.mxu0 0
  %586 = vmatprep.subr.bf16.mxu0 0
  %587 = vmatpush1.bf16.msra.mxu0 %v570
  %588 = vmatprep.subr.bf16.mxu0 0
  %589 = vmatpush2.bf16.msra.mxu0 0
  %590 = vmatprep.subr.bf16.mxu0 0
  %591 = vmatpush2.bf16.msra.mxu0 0
  %592 = vmatprep.subr.bf16.mxu0 0
  %593 = vmatpush2.bf16.msra.mxu0 0
  %594 = vmatprep.subr.bf16.mxu0 0
  %595 = vmatpush2.bf16.msra.mxu0 0
  %596 = vmatprep.subr.bf16.mxu0 0
  %597 = vmatpush2.bf16.msra.mxu0 0
  %598 = vmatprep.subr.bf16.mxu0 0
  %599 = vmatpush2.bf16.msra.mxu0 0
  %600 = vmatprep.subr.bf16.mxu0 0
  %601 = vmatpush2.bf16.msra.mxu0 0
  %602 = vmatprep.subr.bf16.mxu0 0
  %603 = vmatpush2.bf16.msra.mxu0 0
  %604 = vmatprep.mubr.bf16.mxu0 0
  %605 = vmatmul.mubr.bf16.gmra.mxu0 %v88
  %v606 = vpop.f32.mrf.mxu0
  %v607 = vadd.f32 0.0, %v606
  %v608 = vpop.f32.mrf.mxu0
  %v609 = vpop.f32.mrf.mxu0
  %v610 = vadd.f32 0.0, %v609
  %v611 = vpop.f32.mrf.mxu0
  %612 = vmatprep.mubr.bf16.mxu0 0
  %613 = vmatmul.mubr.bf16.gmra.mxu0 %v91
  %v614 = vpop.f32.mrf.mxu0
  %v615 = vadd.f32 0.0, %v614
  %v616 = vpop.f32.mrf.mxu0
  %v617 = vpop.f32.mrf.mxu0
  %v618 = vadd.f32 0.0, %v617
  %v619 = vpop.f32.mrf.mxu0
  %620 = vdwg.mxu0
  %v621 = vadd.f32 %v564, %v607
  %v622 = vadd.f32 %v565, %v610
  %v623 = vadd.f32 %v566, %v615
  %v624 = vadd.f32 %v567, %v618
  %v625 = vadd.f32 %v621, %v153
  %v626 = vadd.f32 %v622, %v158
  %v627 = vadd.f32 %v623, %v163
  %v628 = vadd.f32 %v624, %v168
  %v629 = vsub.f32 0.0, %v625
  %v630 = vmul.f32 %v629, 1.442695
  %v631 = vpow.pop %v630
  %v632 = vadd.f32 %v631, 1.0
  %v633 = vrcp.pop %v632
  %v634 = vsub.f32 0.0, %v626
  %v635 = vmul.f32 %v634, 1.442695
  %v636 = vpow.pop %v635
  %v637 = vadd.f32 %v636, 1.0
  %v638 = vrcp.pop %v637
  %v639 = vtanh.pop %v627
  %v640 = vsub.f32 0.0, %v628
  %v641 = vmul.f32 %v640, 1.442695
  %v642 = vpow.pop %v641
  %v643 = vadd.f32 %v642, 1.0
  %v644 = vrcp.pop %v643
  %v645 = vmul.f32 %v638, %v556
  %v646 = vmul.f32 %v633, %v639
  %v647 = vadd.f32 %v645, %v646
  %v648 = vtanh.pop %v647
  %v649 = vmul.f32 %v644, %v648
  %v650 = vld [vmem:[%s0 + $0x6] sm:$0x1]
  %v651 = vlaneseq
  %v652 = vshrl.u32 %v651, 7
  %v653 = vsub.s32 0, %v652
  %v654 = vrot.slane %v650, %v653
  %v655 = vmul.f32 %v51, %v654
  %v656 = vmul.f32 %v56, %v654
  %v657 = vmul.f32 %v61, %v654
  %v658 = vmul.f32 %v66, %v654
  %v659 = vpack.c.bf16 %v649, %v649
  %v661 = vsel %vm93, %v659, 0
  %663 = vmatprep.subr.bf16.mxu0 0
  %664 = vmatpush1.bf16.msra.mxu0 0
  %665 = vmatprep.subr.bf16.mxu0 0
  %666 = vmatpush1.bf16.msra.mxu0 0
  %667 = vmatprep.subr.bf16.mxu0 0
  %668 = vmatpush1.bf16.msra.mxu0 0
  %669 = vmatprep.subr.bf16.mxu0 0
  %670 = vmatpush1.bf16.msra.mxu0 0
  %671 = vmatprep.subr.bf16.mxu0 0
  %672 = vmatpush1.bf16.msra.mxu0 0
  %673 = vmatprep.subr.bf16.mxu0 0
  %674 = vmatpush1.bf16.msra.mxu0 0
  %675 = vmatprep.subr.bf16.mxu0 0
  %676 = vmatpush1.bf16.msra.mxu0 0
  %677 = vmatprep.subr.bf16.mxu0 0
  %678 = vmatpush1.bf16.msra.mxu0 %v661
  %679 = vmatprep.subr.bf16.mxu0 0
  %680 = vmatpush2.bf16.msra.mxu0 0
  %681 = vmatprep.subr.bf16.mxu0 0
  %682 = vmatpush2.bf16.msra.mxu0 0
  %683 = vmatprep.subr.bf16.mxu0 0
  %684 = vmatpush2.bf16.msra.mxu0 0
  %685 = vmatprep.subr.bf16.mxu0 0
  %686 = vmatpush2.bf16.msra.mxu0 0
  %687 = vmatprep.subr.bf16.mxu0 0
  %688 = vmatpush2.bf16.msra.mxu0 0
  %689 = vmatprep.subr.bf16.mxu0 0
  %690 = vmatpush2.bf16.msra.mxu0 0
  %691 = vmatprep.subr.bf16.mxu0 0
  %692 = vmatpush2.bf16.msra.mxu0 0
  %693 = vmatprep.subr.bf16.mxu0 0
  %694 = vmatpush2.bf16.msra.mxu0 0
  %695 = vmatprep.mubr.bf16.mxu0 0
  %696 = vmatmul.mubr.bf16.gmra.mxu0 %v88
  %v697 = vpop.f32.mrf.mxu0
  %v698 = vadd.f32 0.0, %v697
  %v699 = vpop.f32.mrf.mxu0
  %v700 = vpop.f32.mrf.mxu0
  %v701 = vadd.f32 0.0, %v700
  %v702 = vpop.f32.mrf.mxu0
  %703 = vmatprep.mubr.bf16.mxu0 0
  %704 = vmatmul.mubr.bf16.gmra.mxu0 %v91
  %v705 = vpop.f32.mrf.mxu0
  %v706 = vadd.f32 0.0, %v705
  %v707 = vpop.f32.mrf.mxu0
  %v708 = vpop.f32.mrf.mxu0
  %v709 = vadd.f32 0.0, %v708
  %v710 = vpop.f32.mrf.mxu0
  %711 = vdwg.mxu0
  %v712 = vadd.f32 %v655, %v698
  %v713 = vadd.f32 %v656, %v701
  %v714 = vadd.f32 %v657, %v706
  %v715 = vadd.f32 %v658, %v709
  %v716 = vadd.f32 %v712, %v153
  %v717 = vadd.f32 %v713, %v158
  %v718 = vadd.f32 %v714, %v163
  %v719 = vadd.f32 %v715, %v168
  %v720 = vsub.f32 0.0, %v716
  %v721 = vmul.f32 %v720, 1.442695
  %v722 = vpow.pop %v721
  %v723 = vadd.f32 %v722, 1.0
  %v724 = vrcp.pop %v723
  %v725 = vsub.f32 0.0, %v717
  %v726 = vmul.f32 %v725, 1.442695
  %v727 = vpow.pop %v726
  %v728 = vadd.f32 %v727, 1.0
  %v729 = vrcp.pop %v728
  %v730 = vtanh.pop %v718
  %v731 = vsub.f32 0.0, %v719
  %v732 = vmul.f32 %v731, 1.442695
  %v733 = vpow.pop %v732
  %v734 = vadd.f32 %v733, 1.0
  %v735 = vrcp.pop %v734
  %v736 = vmul.f32 %v729, %v647
  %v737 = vmul.f32 %v724, %v730
  %v738 = vadd.f32 %v736, %v737
  %v739 = vtanh.pop %v738
  %v740 = vmul.f32 %v735, %v739
  %v741 = vld [vmem:[%s0 + $0x7] sm:$0x1]
  %v742 = vlaneseq
  %v743 = vshrl.u32 %v742, 7
  %v744 = vsub.s32 0, %v743
  %v745 = vrot.slane %v741, %v744
  %v746 = vmul.f32 %v51, %v745
  %v747 = vmul.f32 %v56, %v745
  %v748 = vmul.f32 %v61, %v745
  %v749 = vmul.f32 %v66, %v745
  %v750 = vpack.c.bf16 %v740, %v740
  %v752 = vsel %vm93, %v750, 0
  %754 = vmatprep.subr.bf16.mxu0 0
  %755 = vmatpush1.bf16.msra.mxu0 0
  %756 = vmatprep.subr.bf16.mxu0 0
  %757 = vmatpush1.bf16.msra.mxu0 0
  %758 = vmatprep.subr.bf16.mxu0 0
  %759 = vmatpush1.bf16.msra.mxu0 0
  %760 = vmatprep.subr.bf16.mxu0 0
  %761 = vmatpush1.bf16.msra.mxu0 0
  %762 = vmatprep.subr.bf16.mxu0 0
  %763 = vmatpush1.bf16.msra.mxu0 0
  %764 = vmatprep.subr.bf16.mxu0 0
  %765 = vmatpush1.bf16.msra.mxu0 0
  %766 = vmatprep.subr.bf16.mxu0 0
  %767 = vmatpush1.bf16.msra.mxu0 0
  %768 = vmatprep.subr.bf16.mxu0 0
  %769 = vmatpush1.bf16.msra.mxu0 %v752
  %770 = vmatprep.subr.bf16.mxu0 0
  %771 = vmatpush2.bf16.msra.mxu0 0
  %772 = vmatprep.subr.bf16.mxu0 0
  %773 = vmatpush2.bf16.msra.mxu0 0
  %774 = vmatprep.subr.bf16.mxu0 0
  %775 = vmatpush2.bf16.msra.mxu0 0
  %776 = vmatprep.subr.bf16.mxu0 0
  %777 = vmatpush2.bf16.msra.mxu0 0
  %778 = vmatprep.subr.bf16.mxu0 0
  %779 = vmatpush2.bf16.msra.mxu0 0
  %780 = vmatprep.subr.bf16.mxu0 0
  %781 = vmatpush2.bf16.msra.mxu0 0
  %782 = vmatprep.subr.bf16.mxu0 0
  %783 = vmatpush2.bf16.msra.mxu0 0
  %784 = vmatprep.subr.bf16.mxu0 0
  %785 = vmatpush2.bf16.msra.mxu0 0
  %786 = vmatprep.mubr.bf16.mxu0 0
  %787 = vmatmul.mubr.bf16.gmra.mxu0 %v88
  %v788 = vpop.f32.mrf.mxu0
  %v789 = vadd.f32 0.0, %v788
  %v790 = vpop.f32.mrf.mxu0
  %v791 = vpop.f32.mrf.mxu0
  %v792 = vadd.f32 0.0, %v791
  %v793 = vpop.f32.mrf.mxu0
  %794 = vmatprep.mubr.bf16.mxu0 0
  %795 = vmatmul.mubr.bf16.gmra.mxu0 %v91
  %v796 = vpop.f32.mrf.mxu0
  %v797 = vadd.f32 0.0, %v796
  %v798 = vpop.f32.mrf.mxu0
  %v799 = vpop.f32.mrf.mxu0
  %v800 = vadd.f32 0.0, %v799
  %v801 = vpop.f32.mrf.mxu0
  %802 = vdwg.mxu0
  %v803 = vadd.f32 %v746, %v789
  %v804 = vadd.f32 %v747, %v792
  %v805 = vadd.f32 %v748, %v797
  %v806 = vadd.f32 %v749, %v800
  %v807 = vadd.f32 %v803, %v153
  %v808 = vadd.f32 %v804, %v158
  %v809 = vadd.f32 %v805, %v163
  %v810 = vadd.f32 %v806, %v168
  %v811 = vsub.f32 0.0, %v807
  %v812 = vmul.f32 %v811, 1.442695
  %v813 = vpow.pop %v812
  %v814 = vadd.f32 %v813, 1.0
  %v815 = vrcp.pop %v814
  %v816 = vsub.f32 0.0, %v808
  %v817 = vmul.f32 %v816, 1.442695
  %v818 = vpow.pop %v817
  %v819 = vadd.f32 %v818, 1.0
  %v820 = vrcp.pop %v819
  %v821 = vtanh.pop %v809
  %v822 = vsub.f32 0.0, %v810
  %v823 = vmul.f32 %v822, 1.442695
  %v824 = vpow.pop %v823
  %v825 = vadd.f32 %v824, 1.0
  %v826 = vrcp.pop %v825
  %v827 = vmul.f32 %v820, %v738
  %v828 = vmul.f32 %v815, %v821
  %v829 = vadd.f32 %v827, %v828
  %v830 = vtanh.pop %v829
  %v831 = vmul.f32 %v826, %v830
  %v832 = vld [vmem:[%s0 + $0x8] sm:$0x1]
  %v833 = vlaneseq
  %v834 = vshrl.u32 %v833, 7
  %v835 = vsub.s32 0, %v834
  %v836 = vrot.slane %v832, %v835
  %v837 = vmul.f32 %v51, %v836
  %v838 = vmul.f32 %v56, %v836
  %v839 = vmul.f32 %v61, %v836
  %v840 = vmul.f32 %v66, %v836
  %v841 = vpack.c.bf16 %v831, %v831
  %v843 = vsel %vm93, %v841, 0
  %845 = vmatprep.subr.bf16.mxu0 0
  %846 = vmatpush1.bf16.msra.mxu0 0
  %847 = vmatprep.subr.bf16.mxu0 0
  %848 = vmatpush1.bf16.msra.mxu0 0
  %849 = vmatprep.subr.bf16.mxu0 0
  %850 = vmatpush1.bf16.msra.mxu0 0
  %851 = vmatprep.subr.bf16.mxu0 0
  %852 = vmatpush1.bf16.msra.mxu0 0
  %853 = vmatprep.subr.bf16.mxu0 0
  %854 = vmatpush1.bf16.msra.mxu0 0
  %855 = vmatprep.subr.bf16.mxu0 0
  %856 = vmatpush1.bf16.msra.mxu0 0
  %857 = vmatprep.subr.bf16.mxu0 0
  %858 = vmatpush1.bf16.msra.mxu0 0
  %859 = vmatprep.subr.bf16.mxu0 0
  %860 = vmatpush1.bf16.msra.mxu0 %v843
  %861 = vmatprep.subr.bf16.mxu0 0
  %862 = vmatpush2.bf16.msra.mxu0 0
  %863 = vmatprep.subr.bf16.mxu0 0
  %864 = vmatpush2.bf16.msra.mxu0 0
  %865 = vmatprep.subr.bf16.mxu0 0
  %866 = vmatpush2.bf16.msra.mxu0 0
  %867 = vmatprep.subr.bf16.mxu0 0
  %868 = vmatpush2.bf16.msra.mxu0 0
  %869 = vmatprep.subr.bf16.mxu0 0
  %870 = vmatpush2.bf16.msra.mxu0 0
  %871 = vmatprep.subr.bf16.mxu0 0
  %872 = vmatpush2.bf16.msra.mxu0 0
  %873 = vmatprep.subr.bf16.mxu0 0
  %874 = vmatpush2.bf16.msra.mxu0 0
  %875 = vmatprep.subr.bf16.mxu0 0
  %876 = vmatpush2.bf16.msra.mxu0 0
  %877 = vmatprep.mubr.bf16.mxu0 0
  %878 = vmatmul.mubr.bf16.gmra.mxu0 %v88
  %v879 = vpop.f32.mrf.mxu0
  %v880 = vadd.f32 0.0, %v879
  %v881 = vpop.f32.mrf.mxu0
  %v882 = vpop.f32.mrf.mxu0
  %v883 = vadd.f32 0.0, %v882
  %v884 = vpop.f32.mrf.mxu0
  %885 = vmatprep.mubr.bf16.mxu0 0
  %886 = vmatmul.mubr.bf16.gmra.mxu0 %v91
  %v887 = vpop.f32.mrf.mxu0
  %v888 = vadd.f32 0.0, %v887
  %v889 = vpop.f32.mrf.mxu0
  %v890 = vpop.f32.mrf.mxu0
  %v891 = vadd.f32 0.0, %v890
  %v892 = vpop.f32.mrf.mxu0
  %893 = vdwg.mxu0
  %v894 = vadd.f32 %v837, %v880
  %v895 = vadd.f32 %v838, %v883
  %v896 = vadd.f32 %v839, %v888
  %v897 = vadd.f32 %v840, %v891
  %v898 = vadd.f32 %v894, %v153
  %v899 = vadd.f32 %v895, %v158
  %v900 = vadd.f32 %v896, %v163
  %v901 = vadd.f32 %v897, %v168
  %v902 = vsub.f32 0.0, %v898
  %v903 = vmul.f32 %v902, 1.442695
  %v904 = vpow.pop %v903
  %v905 = vadd.f32 %v904, 1.0
  %v906 = vrcp.pop %v905
  %v907 = vsub.f32 0.0, %v899
  %v908 = vmul.f32 %v907, 1.442695
  %v909 = vpow.pop %v908
  %v910 = vadd.f32 %v909, 1.0
  %v911 = vrcp.pop %v910
  %v912 = vtanh.pop %v900
  %v913 = vsub.f32 0.0, %v901
  %v914 = vmul.f32 %v913, 1.442695
  %v915 = vpow.pop %v914
  %v916 = vadd.f32 %v915, 1.0
  %v917 = vrcp.pop %v916
  %v918 = vmul.f32 %v911, %v829
  %v919 = vmul.f32 %v906, %v912
  %v920 = vadd.f32 %v918, %v919
  %v921 = vtanh.pop %v920
  %v922 = vmul.f32 %v917, %v921
  %v923 = vld [vmem:[%s0 + $0x9] sm:$0x1]
  %v924 = vlaneseq
  %v925 = vshrl.u32 %v924, 7
  %v926 = vsub.s32 0, %v925
  %v927 = vrot.slane %v923, %v926
  %v928 = vmul.f32 %v51, %v927
  %v929 = vmul.f32 %v56, %v927
  %v930 = vmul.f32 %v61, %v927
  %v931 = vmul.f32 %v66, %v927
  %v932 = vpack.c.bf16 %v922, %v922
  %v934 = vsel %vm93, %v932, 0
  %936 = vmatprep.subr.bf16.mxu0 0
  %937 = vmatpush1.bf16.msra.mxu0 0
  %938 = vmatprep.subr.bf16.mxu0 0
  %939 = vmatpush1.bf16.msra.mxu0 0
  %940 = vmatprep.subr.bf16.mxu0 0
  %941 = vmatpush1.bf16.msra.mxu0 0
  %942 = vmatprep.subr.bf16.mxu0 0
  %943 = vmatpush1.bf16.msra.mxu0 0
  %944 = vmatprep.subr.bf16.mxu0 0
  %945 = vmatpush1.bf16.msra.mxu0 0
  %946 = vmatprep.subr.bf16.mxu0 0
  %947 = vmatpush1.bf16.msra.mxu0 0
  %948 = vmatprep.subr.bf16.mxu0 0
  %949 = vmatpush1.bf16.msra.mxu0 0
  %950 = vmatprep.subr.bf16.mxu0 0
  %951 = vmatpush1.bf16.msra.mxu0 %v934
  %952 = vmatprep.subr.bf16.mxu0 0
  %953 = vmatpush2.bf16.msra.mxu0 0
  %954 = vmatprep.subr.bf16.mxu0 0
  %955 = vmatpush2.bf16.msra.mxu0 0
  %956 = vmatprep.subr.bf16.mxu0 0
  %957 = vmatpush2.bf16.msra.mxu0 0
  %958 = vmatprep.subr.bf16.mxu0 0
  %959 = vmatpush2.bf16.msra.mxu0 0
  %960 = vmatprep.subr.bf16.mxu0 0
  %961 = vmatpush2.bf16.msra.mxu0 0
  %962 = vmatprep.subr.bf16.mxu0 0
  %963 = vmatpush2.bf16.msra.mxu0 0
  %964 = vmatprep.subr.bf16.mxu0 0
  %965 = vmatpush2.bf16.msra.mxu0 0
  %966 = vmatprep.subr.bf16.mxu0 0
  %967 = vmatpush2.bf16.msra.mxu0 0
  %968 = vmatprep.mubr.bf16.mxu0 0
  %969 = vmatmul.mubr.bf16.gmra.mxu0 %v88
  %v970 = vpop.f32.mrf.mxu0
  %v971 = vadd.f32 0.0, %v970
  %v972 = vpop.f32.mrf.mxu0
  %v973 = vpop.f32.mrf.mxu0
  %v974 = vadd.f32 0.0, %v973
  %v975 = vpop.f32.mrf.mxu0
  %976 = vmatprep.mubr.bf16.mxu0 0
  %977 = vmatmul.mubr.bf16.gmra.mxu0 %v91
  %v978 = vpop.f32.mrf.mxu0
  %v979 = vadd.f32 0.0, %v978
  %v980 = vpop.f32.mrf.mxu0
  %v981 = vpop.f32.mrf.mxu0
  %v982 = vadd.f32 0.0, %v981
  %v983 = vpop.f32.mrf.mxu0
  %984 = vdwg.mxu0
  %v985 = vadd.f32 %v928, %v971
  %v986 = vadd.f32 %v929, %v974
  %v987 = vadd.f32 %v930, %v979
  %v988 = vadd.f32 %v931, %v982
  %v989 = vadd.f32 %v985, %v153
  %v990 = vadd.f32 %v986, %v158
  %v991 = vadd.f32 %v987, %v163
  %v992 = vadd.f32 %v988, %v168
  %v993 = vsub.f32 0.0, %v989
  %v994 = vmul.f32 %v993, 1.442695
  %v995 = vpow.pop %v994
  %v996 = vadd.f32 %v995, 1.0
  %v997 = vrcp.pop %v996
  %v998 = vsub.f32 0.0, %v990
  %v999 = vmul.f32 %v998, 1.442695
  %v1000 = vpow.pop %v999
  %v1001 = vadd.f32 %v1000, 1.0
  %v1002 = vrcp.pop %v1001
  %v1003 = vtanh.pop %v991
  %v1004 = vsub.f32 0.0, %v992
  %v1005 = vmul.f32 %v1004, 1.442695
  %v1006 = vpow.pop %v1005
  %v1007 = vadd.f32 %v1006, 1.0
  %v1008 = vrcp.pop %v1007
  %v1009 = vmul.f32 %v1002, %v920
  %v1010 = vmul.f32 %v997, %v1003
  %v1011 = vadd.f32 %v1009, %v1010
  %v1012 = vtanh.pop %v1011
  %v1013 = vmul.f32 %v1008, %v1012
  %v1014 = vld [vmem:[%s0 + $0xa] sm:$0x1]
  %v1015 = vlaneseq
  %v1016 = vshrl.u32 %v1015, 7
  %v1017 = vsub.s32 0, %v1016
  %v1018 = vrot.slane %v1014, %v1017
  %v1019 = vmul.f32 %v51, %v1018
  %v1020 = vmul.f32 %v56, %v1018
  %v1021 = vmul.f32 %v61, %v1018
  %v1022 = vmul.f32 %v66, %v1018
  %v1023 = vpack.c.bf16 %v1013, %v1013
  %v1025 = vsel %vm93, %v1023, 0
  %1027 = vmatprep.subr.bf16.mxu0 0
  %1028 = vmatpush1.bf16.msra.mxu0 0
  %1029 = vmatprep.subr.bf16.mxu0 0
  %1030 = vmatpush1.bf16.msra.mxu0 0
  %1031 = vmatprep.subr.bf16.mxu0 0
  %1032 = vmatpush1.bf16.msra.mxu0 0
  %1033 = vmatprep.subr.bf16.mxu0 0
  %1034 = vmatpush1.bf16.msra.mxu0 0
  %1035 = vmatprep.subr.bf16.mxu0 0
  %1036 = vmatpush1.bf16.msra.mxu0 0
  %1037 = vmatprep.subr.bf16.mxu0 0
  %1038 = vmatpush1.bf16.msra.mxu0 0
  %1039 = vmatprep.subr.bf16.mxu0 0
  %1040 = vmatpush1.bf16.msra.mxu0 0
  %1041 = vmatprep.subr.bf16.mxu0 0
  %1042 = vmatpush1.bf16.msra.mxu0 %v1025
  %1043 = vmatprep.subr.bf16.mxu0 0
  %1044 = vmatpush2.bf16.msra.mxu0 0
  %1045 = vmatprep.subr.bf16.mxu0 0
  %1046 = vmatpush2.bf16.msra.mxu0 0
  %1047 = vmatprep.subr.bf16.mxu0 0
  %1048 = vmatpush2.bf16.msra.mxu0 0
  %1049 = vmatprep.subr.bf16.mxu0 0
  %1050 = vmatpush2.bf16.msra.mxu0 0
  %1051 = vmatprep.subr.bf16.mxu0 0
  %1052 = vmatpush2.bf16.msra.mxu0 0
  %1053 = vmatprep.subr.bf16.mxu0 0
  %1054 = vmatpush2.bf16.msra.mxu0 0
  %1055 = vmatprep.subr.bf16.mxu0 0
  %1056 = vmatpush2.bf16.msra.mxu0 0
  %1057 = vmatprep.subr.bf16.mxu0 0
  %1058 = vmatpush2.bf16.msra.mxu0 0
  %1059 = vmatprep.mubr.bf16.mxu0 0
  %1060 = vmatmul.mubr.bf16.gmra.mxu0 %v88
  %v1061 = vpop.f32.mrf.mxu0
  %v1062 = vadd.f32 0.0, %v1061
  %v1063 = vpop.f32.mrf.mxu0
  %v1064 = vpop.f32.mrf.mxu0
  %v1065 = vadd.f32 0.0, %v1064
  %v1066 = vpop.f32.mrf.mxu0
  %1067 = vmatprep.mubr.bf16.mxu0 0
  %1068 = vmatmul.mubr.bf16.gmra.mxu0 %v91
  %v1069 = vpop.f32.mrf.mxu0
  %v1070 = vadd.f32 0.0, %v1069
  %v1071 = vpop.f32.mrf.mxu0
  %v1072 = vpop.f32.mrf.mxu0
  %v1073 = vadd.f32 0.0, %v1072
  %v1074 = vpop.f32.mrf.mxu0
  %1075 = vdwg.mxu0
  %v1076 = vadd.f32 %v1019, %v1062
  %v1077 = vadd.f32 %v1020, %v1065
  %v1078 = vadd.f32 %v1021, %v1070
  %v1079 = vadd.f32 %v1022, %v1073
  %v1080 = vadd.f32 %v1076, %v153
  %v1081 = vadd.f32 %v1077, %v158
  %v1082 = vadd.f32 %v1078, %v163
  %v1083 = vadd.f32 %v1079, %v168
  %v1084 = vsub.f32 0.0, %v1080
  %v1085 = vmul.f32 %v1084, 1.442695
  %v1086 = vpow.pop %v1085
  %v1087 = vadd.f32 %v1086, 1.0
  %v1088 = vrcp.pop %v1087
  %v1089 = vsub.f32 0.0, %v1081
  %v1090 = vmul.f32 %v1089, 1.442695
  %v1091 = vpow.pop %v1090
  %v1092 = vadd.f32 %v1091, 1.0
  %v1093 = vrcp.pop %v1092
  %v1094 = vtanh.pop %v1082
  %v1095 = vsub.f32 0.0, %v1083
  %v1096 = vmul.f32 %v1095, 1.442695
  %v1097 = vpow.pop %v1096
  %v1098 = vadd.f32 %v1097, 1.0
  %v1099 = vrcp.pop %v1098
  %v1100 = vmul.f32 %v1093, %v1011
  %v1101 = vmul.f32 %v1088, %v1094
  %v1102 = vadd.f32 %v1100, %v1101
  %v1103 = vtanh.pop %v1102
  %v1104 = vmul.f32 %v1099, %v1103
  %v1105 = vld [vmem:[%s0 + $0xb] sm:$0x1]
  %v1106 = vlaneseq
  %v1107 = vshrl.u32 %v1106, 7
  %v1108 = vsub.s32 0, %v1107
  %v1109 = vrot.slane %v1105, %v1108
  %v1110 = vmul.f32 %v51, %v1109
  %v1111 = vmul.f32 %v56, %v1109
  %v1112 = vmul.f32 %v61, %v1109
  %v1113 = vmul.f32 %v66, %v1109
  %v1114 = vpack.c.bf16 %v1104, %v1104
  %v1116 = vsel %vm93, %v1114, 0
  %1118 = vmatprep.subr.bf16.mxu0 0
  %1119 = vmatpush1.bf16.msra.mxu0 0
  %1120 = vmatprep.subr.bf16.mxu0 0
  %1121 = vmatpush1.bf16.msra.mxu0 0
  %1122 = vmatprep.subr.bf16.mxu0 0
  %1123 = vmatpush1.bf16.msra.mxu0 0
  %1124 = vmatprep.subr.bf16.mxu0 0
  %1125 = vmatpush1.bf16.msra.mxu0 0
  %1126 = vmatprep.subr.bf16.mxu0 0
  %1127 = vmatpush1.bf16.msra.mxu0 0
  %1128 = vmatprep.subr.bf16.mxu0 0
  %1129 = vmatpush1.bf16.msra.mxu0 0
  %1130 = vmatprep.subr.bf16.mxu0 0
  %1131 = vmatpush1.bf16.msra.mxu0 0
  %1132 = vmatprep.subr.bf16.mxu0 0
  %1133 = vmatpush1.bf16.msra.mxu0 %v1116
  %1134 = vmatprep.subr.bf16.mxu0 0
  %1135 = vmatpush2.bf16.msra.mxu0 0
  %1136 = vmatprep.subr.bf16.mxu0 0
  %1137 = vmatpush2.bf16.msra.mxu0 0
  %1138 = vmatprep.subr.bf16.mxu0 0
  %1139 = vmatpush2.bf16.msra.mxu0 0
  %1140 = vmatprep.subr.bf16.mxu0 0
  %1141 = vmatpush2.bf16.msra.mxu0 0
  %1142 = vmatprep.subr.bf16.mxu0 0
  %1143 = vmatpush2.bf16.msra.mxu0 0
  %1144 = vmatprep.subr.bf16.mxu0 0
  %1145 = vmatpush2.bf16.msra.mxu0 0
  %1146 = vmatprep.subr.bf16.mxu0 0
  %1147 = vmatpush2.bf16.msra.mxu0 0
  %1148 = vmatprep.subr.bf16.mxu0 0
  %1149 = vmatpush2.bf16.msra.mxu0 0
  %1150 = vmatprep.mubr.bf16.mxu0 0
  %1151 = vmatmul.mubr.bf16.gmra.mxu0 %v88
  %v1152 = vpop.f32.mrf.mxu0
  %v1153 = vadd.f32 0.0, %v1152
  %v1154 = vpop.f32.mrf.mxu0
  %v1155 = vpop.f32.mrf.mxu0
  %v1156 = vadd.f32 0.0, %v1155
  %v1157 = vpop.f32.mrf.mxu0
  %1158 = vmatprep.mubr.bf16.mxu0 0
  %1159 = vmatmul.mubr.bf16.gmra.mxu0 %v91
  %v1160 = vpop.f32.mrf.mxu0
  %v1161 = vadd.f32 0.0, %v1160
  %v1162 = vpop.f32.mrf.mxu0
  %v1163 = vpop.f32.mrf.mxu0
  %v1164 = vadd.f32 0.0, %v1163
  %v1165 = vpop.f32.mrf.mxu0
  %1166 = vdwg.mxu0
  %v1167 = vadd.f32 %v1110, %v1153
  %v1168 = vadd.f32 %v1111, %v1156
  %v1169 = vadd.f32 %v1112, %v1161
  %v1170 = vadd.f32 %v1113, %v1164
  %v1171 = vadd.f32 %v1167, %v153
  %v1172 = vadd.f32 %v1168, %v158
  %v1173 = vadd.f32 %v1169, %v163
  %v1174 = vadd.f32 %v1170, %v168
  %v1175 = vsub.f32 0.0, %v1171
  %v1176 = vmul.f32 %v1175, 1.442695
  %v1177 = vpow.pop %v1176
  %v1178 = vadd.f32 %v1177, 1.0
  %v1179 = vrcp.pop %v1178
  %v1180 = vsub.f32 0.0, %v1172
  %v1181 = vmul.f32 %v1180, 1.442695
  %v1182 = vpow.pop %v1181
  %v1183 = vadd.f32 %v1182, 1.0
  %v1184 = vrcp.pop %v1183
  %v1185 = vtanh.pop %v1173
  %v1186 = vsub.f32 0.0, %v1174
  %v1187 = vmul.f32 %v1186, 1.442695
  %v1188 = vpow.pop %v1187
  %v1189 = vadd.f32 %v1188, 1.0
  %v1190 = vrcp.pop %v1189
  %v1191 = vmul.f32 %v1184, %v1102
  %v1192 = vmul.f32 %v1179, %v1185
  %v1193 = vadd.f32 %v1191, %v1192
  %v1194 = vtanh.pop %v1193
  %v1195 = vmul.f32 %v1190, %v1194
  %v1196 = vld [vmem:[%s0 + $0xc] sm:$0x1]
  %v1197 = vlaneseq
  %v1198 = vshrl.u32 %v1197, 7
  %v1199 = vsub.s32 0, %v1198
  %v1200 = vrot.slane %v1196, %v1199
  %v1201 = vmul.f32 %v51, %v1200
  %v1202 = vmul.f32 %v56, %v1200
  %v1203 = vmul.f32 %v61, %v1200
  %v1204 = vmul.f32 %v66, %v1200
  %v1205 = vpack.c.bf16 %v1195, %v1195
  %v1207 = vsel %vm93, %v1205, 0
  %1209 = vmatprep.subr.bf16.mxu0 0
  %1210 = vmatpush1.bf16.msra.mxu0 0
  %1211 = vmatprep.subr.bf16.mxu0 0
  %1212 = vmatpush1.bf16.msra.mxu0 0
  %1213 = vmatprep.subr.bf16.mxu0 0
  %1214 = vmatpush1.bf16.msra.mxu0 0
  %1215 = vmatprep.subr.bf16.mxu0 0
  %1216 = vmatpush1.bf16.msra.mxu0 0
  %1217 = vmatprep.subr.bf16.mxu0 0
  %1218 = vmatpush1.bf16.msra.mxu0 0
  %1219 = vmatprep.subr.bf16.mxu0 0
  %1220 = vmatpush1.bf16.msra.mxu0 0
  %1221 = vmatprep.subr.bf16.mxu0 0
  %1222 = vmatpush1.bf16.msra.mxu0 0
  %1223 = vmatprep.subr.bf16.mxu0 0
  %1224 = vmatpush1.bf16.msra.mxu0 %v1207
  %1225 = vmatprep.subr.bf16.mxu0 0
  %1226 = vmatpush2.bf16.msra.mxu0 0
  %1227 = vmatprep.subr.bf16.mxu0 0
  %1228 = vmatpush2.bf16.msra.mxu0 0
  %1229 = vmatprep.subr.bf16.mxu0 0
  %1230 = vmatpush2.bf16.msra.mxu0 0
  %1231 = vmatprep.subr.bf16.mxu0 0
  %1232 = vmatpush2.bf16.msra.mxu0 0
  %1233 = vmatprep.subr.bf16.mxu0 0
  %1234 = vmatpush2.bf16.msra.mxu0 0
  %1235 = vmatprep.subr.bf16.mxu0 0
  %1236 = vmatpush2.bf16.msra.mxu0 0
  %1237 = vmatprep.subr.bf16.mxu0 0
  %1238 = vmatpush2.bf16.msra.mxu0 0
  %1239 = vmatprep.subr.bf16.mxu0 0
  %1240 = vmatpush2.bf16.msra.mxu0 0
  %1241 = vmatprep.mubr.bf16.mxu0 0
  %1242 = vmatmul.mubr.bf16.gmra.mxu0 %v88
  %v1243 = vpop.f32.mrf.mxu0
  %v1244 = vadd.f32 0.0, %v1243
  %v1245 = vpop.f32.mrf.mxu0
  %v1246 = vpop.f32.mrf.mxu0
  %v1247 = vadd.f32 0.0, %v1246
  %v1248 = vpop.f32.mrf.mxu0
  %1249 = vmatprep.mubr.bf16.mxu0 0
  %1250 = vmatmul.mubr.bf16.gmra.mxu0 %v91
  %v1251 = vpop.f32.mrf.mxu0
  %v1252 = vadd.f32 0.0, %v1251
  %v1253 = vpop.f32.mrf.mxu0
  %v1254 = vpop.f32.mrf.mxu0
  %v1255 = vadd.f32 0.0, %v1254
  %v1256 = vpop.f32.mrf.mxu0
  %1257 = vdwg.mxu0
  %v1258 = vadd.f32 %v1201, %v1244
  %v1259 = vadd.f32 %v1202, %v1247
  %v1260 = vadd.f32 %v1203, %v1252
  %v1261 = vadd.f32 %v1204, %v1255
  %v1262 = vadd.f32 %v1258, %v153
  %v1263 = vadd.f32 %v1259, %v158
  %v1264 = vadd.f32 %v1260, %v163
  %v1265 = vadd.f32 %v1261, %v168
  %v1266 = vsub.f32 0.0, %v1262
  %v1267 = vmul.f32 %v1266, 1.442695
  %v1268 = vpow.pop %v1267
  %v1269 = vadd.f32 %v1268, 1.0
  %v1270 = vrcp.pop %v1269
  %v1271 = vsub.f32 0.0, %v1263
  %v1272 = vmul.f32 %v1271, 1.442695
  %v1273 = vpow.pop %v1272
  %v1274 = vadd.f32 %v1273, 1.0
  %v1275 = vrcp.pop %v1274
  %v1276 = vtanh.pop %v1264
  %v1277 = vsub.f32 0.0, %v1265
  %v1278 = vmul.f32 %v1277, 1.442695
  %v1279 = vpow.pop %v1278
  %v1280 = vadd.f32 %v1279, 1.0
  %v1281 = vrcp.pop %v1280
  %v1282 = vmul.f32 %v1275, %v1193
  %v1283 = vmul.f32 %v1270, %v1276
  %v1284 = vadd.f32 %v1282, %v1283
  %v1285 = vtanh.pop %v1284
  %v1286 = vmul.f32 %v1281, %v1285
  %v1287 = vld [vmem:[%s0 + $0xd] sm:$0x1]
  %v1288 = vlaneseq
  %v1289 = vshrl.u32 %v1288, 7
  %v1290 = vsub.s32 0, %v1289
  %v1291 = vrot.slane %v1287, %v1290
  %v1292 = vmul.f32 %v51, %v1291
  %v1293 = vmul.f32 %v56, %v1291
  %v1294 = vmul.f32 %v61, %v1291
  %v1295 = vmul.f32 %v66, %v1291
  %v1296 = vpack.c.bf16 %v1286, %v1286
  %v1298 = vsel %vm93, %v1296, 0
  %1300 = vmatprep.subr.bf16.mxu0 0
  %1301 = vmatpush1.bf16.msra.mxu0 0
  %1302 = vmatprep.subr.bf16.mxu0 0
  %1303 = vmatpush1.bf16.msra.mxu0 0
  %1304 = vmatprep.subr.bf16.mxu0 0
  %1305 = vmatpush1.bf16.msra.mxu0 0
  %1306 = vmatprep.subr.bf16.mxu0 0
  %1307 = vmatpush1.bf16.msra.mxu0 0
  %1308 = vmatprep.subr.bf16.mxu0 0
  %1309 = vmatpush1.bf16.msra.mxu0 0
  %1310 = vmatprep.subr.bf16.mxu0 0
  %1311 = vmatpush1.bf16.msra.mxu0 0
  %1312 = vmatprep.subr.bf16.mxu0 0
  %1313 = vmatpush1.bf16.msra.mxu0 0
  %1314 = vmatprep.subr.bf16.mxu0 0
  %1315 = vmatpush1.bf16.msra.mxu0 %v1298
  %1316 = vmatprep.subr.bf16.mxu0 0
  %1317 = vmatpush2.bf16.msra.mxu0 0
  %1318 = vmatprep.subr.bf16.mxu0 0
  %1319 = vmatpush2.bf16.msra.mxu0 0
  %1320 = vmatprep.subr.bf16.mxu0 0
  %1321 = vmatpush2.bf16.msra.mxu0 0
  %1322 = vmatprep.subr.bf16.mxu0 0
  %1323 = vmatpush2.bf16.msra.mxu0 0
  %1324 = vmatprep.subr.bf16.mxu0 0
  %1325 = vmatpush2.bf16.msra.mxu0 0
  %1326 = vmatprep.subr.bf16.mxu0 0
  %1327 = vmatpush2.bf16.msra.mxu0 0
  %1328 = vmatprep.subr.bf16.mxu0 0
  %1329 = vmatpush2.bf16.msra.mxu0 0
  %1330 = vmatprep.subr.bf16.mxu0 0
  %1331 = vmatpush2.bf16.msra.mxu0 0
  %1332 = vmatprep.mubr.bf16.mxu0 0
  %1333 = vmatmul.mubr.bf16.gmra.mxu0 %v88
  %v1334 = vpop.f32.mrf.mxu0
  %v1335 = vadd.f32 0.0, %v1334
  %v1336 = vpop.f32.mrf.mxu0
  %v1337 = vpop.f32.mrf.mxu0
  %v1338 = vadd.f32 0.0, %v1337
  %v1339 = vpop.f32.mrf.mxu0
  %1340 = vmatprep.mubr.bf16.mxu0 0
  %1341 = vmatmul.mubr.bf16.gmra.mxu0 %v91
  %v1342 = vpop.f32.mrf.mxu0
  %v1343 = vadd.f32 0.0, %v1342
  %v1344 = vpop.f32.mrf.mxu0
  %v1345 = vpop.f32.mrf.mxu0
  %v1346 = vadd.f32 0.0, %v1345
  %v1347 = vpop.f32.mrf.mxu0
  %1348 = vdwg.mxu0
  %v1349 = vadd.f32 %v1292, %v1335
  %v1350 = vadd.f32 %v1293, %v1338
  %v1351 = vadd.f32 %v1294, %v1343
  %v1352 = vadd.f32 %v1295, %v1346
  %v1353 = vadd.f32 %v1349, %v153
  %v1354 = vadd.f32 %v1350, %v158
  %v1355 = vadd.f32 %v1351, %v163
  %v1356 = vadd.f32 %v1352, %v168
  %v1357 = vsub.f32 0.0, %v1353
  %v1358 = vmul.f32 %v1357, 1.442695
  %v1359 = vpow.pop %v1358
  %v1360 = vadd.f32 %v1359, 1.0
  %v1361 = vrcp.pop %v1360
  %v1362 = vsub.f32 0.0, %v1354
  %v1363 = vmul.f32 %v1362, 1.442695
  %v1364 = vpow.pop %v1363
  %v1365 = vadd.f32 %v1364, 1.0
  %v1366 = vrcp.pop %v1365
  %v1367 = vtanh.pop %v1355
  %v1368 = vsub.f32 0.0, %v1356
  %v1369 = vmul.f32 %v1368, 1.442695
  %v1370 = vpow.pop %v1369
  %v1371 = vadd.f32 %v1370, 1.0
  %v1372 = vrcp.pop %v1371
  %v1373 = vmul.f32 %v1366, %v1284
  %v1374 = vmul.f32 %v1361, %v1367
  %v1375 = vadd.f32 %v1373, %v1374
  %v1376 = vtanh.pop %v1375
  %v1377 = vmul.f32 %v1372, %v1376
  %v1378 = vld [vmem:[%s0 + $0xe] sm:$0x1]
  %v1379 = vlaneseq
  %v1380 = vshrl.u32 %v1379, 7
  %v1381 = vsub.s32 0, %v1380
  %v1382 = vrot.slane %v1378, %v1381
  %v1383 = vmul.f32 %v51, %v1382
  %v1384 = vmul.f32 %v56, %v1382
  %v1385 = vmul.f32 %v61, %v1382
  %v1386 = vmul.f32 %v66, %v1382
  %v1387 = vpack.c.bf16 %v1377, %v1377
  %v1389 = vsel %vm93, %v1387, 0
  %1391 = vmatprep.subr.bf16.mxu0 0
  %1392 = vmatpush1.bf16.msra.mxu0 0
  %1393 = vmatprep.subr.bf16.mxu0 0
  %1394 = vmatpush1.bf16.msra.mxu0 0
  %1395 = vmatprep.subr.bf16.mxu0 0
  %1396 = vmatpush1.bf16.msra.mxu0 0
  %1397 = vmatprep.subr.bf16.mxu0 0
  %1398 = vmatpush1.bf16.msra.mxu0 0
  %1399 = vmatprep.subr.bf16.mxu0 0
  %1400 = vmatpush1.bf16.msra.mxu0 0
  %1401 = vmatprep.subr.bf16.mxu0 0
  %1402 = vmatpush1.bf16.msra.mxu0 0
  %1403 = vmatprep.subr.bf16.mxu0 0
  %1404 = vmatpush1.bf16.msra.mxu0 0
  %1405 = vmatprep.subr.bf16.mxu0 0
  %1406 = vmatpush1.bf16.msra.mxu0 %v1389
  %1407 = vmatprep.subr.bf16.mxu0 0
  %1408 = vmatpush2.bf16.msra.mxu0 0
  %1409 = vmatprep.subr.bf16.mxu0 0
  %1410 = vmatpush2.bf16.msra.mxu0 0
  %1411 = vmatprep.subr.bf16.mxu0 0
  %1412 = vmatpush2.bf16.msra.mxu0 0
  %1413 = vmatprep.subr.bf16.mxu0 0
  %1414 = vmatpush2.bf16.msra.mxu0 0
  %1415 = vmatprep.subr.bf16.mxu0 0
  %1416 = vmatpush2.bf16.msra.mxu0 0
  %1417 = vmatprep.subr.bf16.mxu0 0
  %1418 = vmatpush2.bf16.msra.mxu0 0
  %1419 = vmatprep.subr.bf16.mxu0 0
  %1420 = vmatpush2.bf16.msra.mxu0 0
  %1421 = vmatprep.subr.bf16.mxu0 0
  %1422 = vmatpush2.bf16.msra.mxu0 0
  %1423 = vmatprep.mubr.bf16.mxu0 0
  %1424 = vmatmul.mubr.bf16.gmra.mxu0 %v88
  %v1425 = vpop.f32.mrf.mxu0
  %v1426 = vadd.f32 0.0, %v1425
  %v1427 = vpop.f32.mrf.mxu0
  %v1428 = vpop.f32.mrf.mxu0
  %v1429 = vadd.f32 0.0, %v1428
  %v1430 = vpop.f32.mrf.mxu0
  %1431 = vmatprep.mubr.bf16.mxu0 0
  %1432 = vmatmul.mubr.bf16.gmra.mxu0 %v91
  %v1433 = vpop.f32.mrf.mxu0
  %v1434 = vadd.f32 0.0, %v1433
  %v1435 = vpop.f32.mrf.mxu0
  %v1436 = vpop.f32.mrf.mxu0
  %v1437 = vadd.f32 0.0, %v1436
  %v1438 = vpop.f32.mrf.mxu0
  %1439 = vdwg.mxu0
  %v1440 = vadd.f32 %v1383, %v1426
  %v1441 = vadd.f32 %v1384, %v1429
  %v1442 = vadd.f32 %v1385, %v1434
  %v1443 = vadd.f32 %v1386, %v1437
  %v1444 = vadd.f32 %v1440, %v153
  %v1445 = vadd.f32 %v1441, %v158
  %v1446 = vadd.f32 %v1442, %v163
  %v1447 = vadd.f32 %v1443, %v168
  %v1448 = vsub.f32 0.0, %v1444
  %v1449 = vmul.f32 %v1448, 1.442695
  %v1450 = vpow.pop %v1449
  %v1451 = vadd.f32 %v1450, 1.0
  %v1452 = vrcp.pop %v1451
  %v1453 = vsub.f32 0.0, %v1445
  %v1454 = vmul.f32 %v1453, 1.442695
  %v1455 = vpow.pop %v1454
  %v1456 = vadd.f32 %v1455, 1.0
  %v1457 = vrcp.pop %v1456
  %v1458 = vtanh.pop %v1446
  %v1459 = vsub.f32 0.0, %v1447
  %v1460 = vmul.f32 %v1459, 1.442695
  %v1461 = vpow.pop %v1460
  %v1462 = vadd.f32 %v1461, 1.0
  %v1463 = vrcp.pop %v1462
  %v1464 = vmul.f32 %v1457, %v1375
  %v1465 = vmul.f32 %v1452, %v1458
  %v1466 = vadd.f32 %v1464, %v1465
  %v1467 = vtanh.pop %v1466
  %v1468 = vmul.f32 %v1463, %v1467
  %v1469 = vld [vmem:[%s0 + $0xf] sm:$0x1]
  %v1470 = vlaneseq
  %v1471 = vshrl.u32 %v1470, 7
  %v1472 = vsub.s32 0, %v1471
  %v1473 = vrot.slane %v1469, %v1472
  %v1474 = vmul.f32 %v51, %v1473
  %v1475 = vmul.f32 %v56, %v1473
  %v1476 = vmul.f32 %v61, %v1473
  %v1477 = vmul.f32 %v66, %v1473
  %v1478 = vpack.c.bf16 %v1468, %v1468
  %v1480 = vsel %vm93, %v1478, 0
  %1482 = vmatprep.subr.bf16.mxu0 0
  %1483 = vmatpush1.bf16.msra.mxu0 0
  %1484 = vmatprep.subr.bf16.mxu0 0
  %1485 = vmatpush1.bf16.msra.mxu0 0
  %1486 = vmatprep.subr.bf16.mxu0 0
  %1487 = vmatpush1.bf16.msra.mxu0 0
  %1488 = vmatprep.subr.bf16.mxu0 0
  %1489 = vmatpush1.bf16.msra.mxu0 0
  %1490 = vmatprep.subr.bf16.mxu0 0
  %1491 = vmatpush1.bf16.msra.mxu0 0
  %1492 = vmatprep.subr.bf16.mxu0 0
  %1493 = vmatpush1.bf16.msra.mxu0 0
  %1494 = vmatprep.subr.bf16.mxu0 0
  %1495 = vmatpush1.bf16.msra.mxu0 0
  %1496 = vmatprep.subr.bf16.mxu0 0
  %1497 = vmatpush1.bf16.msra.mxu0 %v1480
  %1498 = vmatprep.subr.bf16.mxu0 0
  %1499 = vmatpush2.bf16.msra.mxu0 0
  %1500 = vmatprep.subr.bf16.mxu0 0
  %1501 = vmatpush2.bf16.msra.mxu0 0
  %1502 = vmatprep.subr.bf16.mxu0 0
  %1503 = vmatpush2.bf16.msra.mxu0 0
  %1504 = vmatprep.subr.bf16.mxu0 0
  %1505 = vmatpush2.bf16.msra.mxu0 0
  %1506 = vmatprep.subr.bf16.mxu0 0
  %1507 = vmatpush2.bf16.msra.mxu0 0
  %1508 = vmatprep.subr.bf16.mxu0 0
  %1509 = vmatpush2.bf16.msra.mxu0 0
  %1510 = vmatprep.subr.bf16.mxu0 0
  %1511 = vmatpush2.bf16.msra.mxu0 0
  %1512 = vmatprep.subr.bf16.mxu0 0
  %1513 = vmatpush2.bf16.msra.mxu0 0
  %1514 = vmatprep.mubr.bf16.mxu0 0
  %1515 = vmatmul.mubr.bf16.gmra.mxu0 %v88
  %v1516 = vpop.f32.mrf.mxu0
  %v1517 = vadd.f32 0.0, %v1516
  %v1518 = vpop.f32.mrf.mxu0
  %v1519 = vpop.f32.mrf.mxu0
  %v1520 = vadd.f32 0.0, %v1519
  %v1521 = vpop.f32.mrf.mxu0
  %1522 = vmatprep.mubr.bf16.mxu0 0
  %1523 = vmatmul.mubr.bf16.gmra.mxu0 %v91
  %v1524 = vpop.f32.mrf.mxu0
  %v1525 = vadd.f32 0.0, %v1524
  %v1526 = vpop.f32.mrf.mxu0
  %v1527 = vpop.f32.mrf.mxu0
  %v1528 = vadd.f32 0.0, %v1527
  %v1529 = vpop.f32.mrf.mxu0
  %1530 = vdwg.mxu0
  %v1531 = vadd.f32 %v1474, %v1517
  %v1532 = vadd.f32 %v1475, %v1520
  %v1533 = vadd.f32 %v1476, %v1525
  %v1534 = vadd.f32 %v1477, %v1528
  %v1535 = vadd.f32 %v1531, %v153
  %v1536 = vadd.f32 %v1532, %v158
  %v1537 = vadd.f32 %v1533, %v163
  %v1538 = vadd.f32 %v1534, %v168
  %v1539 = vsub.f32 0.0, %v1535
  %v1540 = vmul.f32 %v1539, 1.442695
  %v1541 = vpow.pop %v1540
  %v1542 = vadd.f32 %v1541, 1.0
  %v1543 = vrcp.pop %v1542
  %v1544 = vsub.f32 0.0, %v1536
  %v1545 = vmul.f32 %v1544, 1.442695
  %v1546 = vpow.pop %v1545
  %v1547 = vadd.f32 %v1546, 1.0
  %v1548 = vrcp.pop %v1547
  %v1549 = vtanh.pop %v1537
  %v1550 = vsub.f32 0.0, %v1538
  %v1551 = vmul.f32 %v1550, 1.442695
  %v1552 = vpow.pop %v1551
  %v1553 = vadd.f32 %v1552, 1.0
  %v1554 = vrcp.pop %v1553
  %v1555 = vmul.f32 %v1548, %v1466
  %v1556 = vmul.f32 %v1543, %v1549
  %v1557 = vadd.f32 %v1555, %v1556
  %v1558 = vtanh.pop %v1557
  %v1559 = vmul.f32 %v1554, %v1558
  %1560 = vxpose.xlu0.b32.start [1/16] %v1559, 128
  %1561 = vxpose.xlu0.b32.cont [2/16] 0.0, 128
  %1562 = vxpose.xlu0.b32.cont [3/16] 0.0, 128
  %1563 = vxpose.xlu0.b32.cont [4/16] 0.0, 128
  %1564 = vxpose.xlu0.b32.cont [5/16] 0.0, 128
  %1565 = vxpose.xlu0.b32.cont [6/16] 0.0, 128
  %1566 = vxpose.xlu0.b32.cont [7/16] 0.0, 128
  %1567 = vxpose.xlu0.b32.cont [8/16] 0.0, 128
  %1568 = vxpose.xlu0.b32.cont [9/16] 0.0, 128
  %1569 = vxpose.xlu0.b32.cont [10/16] 0.0, 128
  %1570 = vxpose.xlu0.b32.cont [11/16] 0.0, 128
  %1571 = vxpose.xlu0.b32.cont [12/16] 0.0, 128
  %1572 = vxpose.xlu0.b32.cont [13/16] 0.0, 128
  %1573 = vxpose.xlu0.b32.cont [14/16] 0.0, 128
  %1574 = vxpose.xlu0.b32.cont [15/16] 0.0, 128
  %1575 = vxpose.xlu0.b32.end [16/16] 0.0, 128
  %v1576 = vpop.trf.xlu0
  %v1577 = vpop.trf.xlu0
  %v1578 = vpop.trf.xlu0
  %v1579 = vpop.trf.xlu0
  %v1580 = vpop.trf.xlu0
  %v1581 = vpop.trf.xlu0
  %v1582 = vpop.trf.xlu0
  %v1583 = vpop.trf.xlu0
  %v1584 = vpop.trf.xlu0
  %v1585 = vpop.trf.xlu0
  %v1586 = vpop.trf.xlu0
  %v1587 = vpop.trf.xlu0
  %v1588 = vpop.trf.xlu0
  %v1589 = vpop.trf.xlu0
  %v1590 = vpop.trf.xlu0
  %v1591 = vpop.trf.xlu0
  %v1592 = vpack.c.bf16 %v1577, %v1576
  %v1593 = vld [vmem:[%s4] sm:$0xff]
  %v1594 = vld [vmem:[%s4 + $0x8] sm:$0xff]
  %v1595 = vld [vmem:[%s6] sm:$0xf]
  %v1597 = vlaneseq
  %v1598 = vshrl.u32 %v1597, 7
  %v1599 = vsub.s32 0, %v1598
  %v1600 = vrot.slane %v1595, %v1599
  %v1601 = vlaneseq
  %v1602 = vshrl.u32 %v1601, 7
  %v1603 = vsub.s32 1, %v1602
  %v1604 = vrot.slane %v1595, %v1603
  %v1605 = vlaneseq
  %v1606 = vshrl.u32 %v1605, 7
  %v1607 = vsub.s32 2, %v1606
  %v1608 = vrot.slane %v1595, %v1607
  %v1609 = vlaneseq
  %v1610 = vshrl.u32 %v1609, 7
  %v1611 = vsub.s32 3, %v1610
  %v1612 = vrot.slane %v1595, %v1611
  %v1619 = vunpack.c.l.b16 %v1593
  %v1620 = vunpack.c.h.b16 %v1593
  %v1621 = vunpack.c.l.b16 %v1594
  %v1622 = vunpack.c.h.b16 %v1594
  %v1623 = vpack.c.b16 %v1619, %v1619
  %v1624 = vpack.c.b16 %v1620, %v1620
  %v1625 = vpack.c.b16 %v1621, %v1621
  %v1626 = vpack.c.b16 %v1622, %v1622
  %v1628 = vsel %vm86, %v1592, 0
  %v1631 = vsel %vm93, %v1623, 0
  %v1634 = vsel %vm93, %v1624, 0
  %v1637 = vsel %vm93, %v1625, 0
  %v1640 = vsel %vm93, %v1626, 0
  %1642 = vmatprep.subr.bf16.mxu0 0
  %1643 = vmatpush1.bf16.msra.mxu0 0
  %1644 = vmatprep.subr.bf16.mxu0 0
  %1645 = vmatpush1.bf16.msra.mxu0 0
  %1646 = vmatprep.subr.bf16.mxu0 0
  %1647 = vmatpush1.bf16.msra.mxu0 0
  %1648 = vmatprep.subr.bf16.mxu0 0
  %1649 = vmatpush1.bf16.msra.mxu0 0
  %1650 = vmatprep.subr.bf16.mxu0 0
  %1651 = vmatpush1.bf16.msra.mxu0 0
  %1652 = vmatprep.subr.bf16.mxu0 0
  %1653 = vmatpush1.bf16.msra.mxu0 0
  %1654 = vmatprep.subr.bf16.mxu0 0
  %1655 = vmatpush1.bf16.msra.mxu0 0
  %1656 = vmatprep.subr.bf16.mxu0 %v1634
  %1657 = vmatpush1.bf16.msra.mxu0 %v1631
  %1658 = vmatprep.subr.bf16.mxu0 0
  %1659 = vmatpush2.bf16.msra.mxu0 0
  %1660 = vmatprep.subr.bf16.mxu0 0
  %1661 = vmatpush2.bf16.msra.mxu0 0
  %1662 = vmatprep.subr.bf16.mxu0 0
  %1663 = vmatpush2.bf16.msra.mxu0 0
  %1664 = vmatprep.subr.bf16.mxu0 0
  %1665 = vmatpush2.bf16.msra.mxu0 0
  %1666 = vmatprep.subr.bf16.mxu0 0
  %1667 = vmatpush2.bf16.msra.mxu0 0
  %1668 = vmatprep.subr.bf16.mxu0 0
  %1669 = vmatpush2.bf16.msra.mxu0 0
  %1670 = vmatprep.subr.bf16.mxu0 0
  %1671 = vmatpush2.bf16.msra.mxu0 0
  %1672 = vmatprep.subr.bf16.mxu0 0
  %1673 = vmatpush2.bf16.msra.mxu0 0
  %1674 = vmatprep.mubr.bf16.mxu0 0
  %1675 = vmatmul.mubr.bf16.gmra.mxu0 %v1628
  %v1676 = vpop.f32.mrf.mxu0
  %v1677 = vadd.f32 %v1600, %v1676
  %v1678 = vpop.f32.mrf.mxu0
  %v1679 = vadd.f32 %v1604, %v1678
  %v1680 = vpop.f32.mrf.mxu0
  %v1681 = vadd.f32 %v1600, %v1680
  %v1682 = vpop.f32.mrf.mxu0
  %v1683 = vadd.f32 %v1604, %v1682
  %1684 = vdwg.mxu0
  %1685 = vmatprep.subr.bf16.mxu0 0
  %1686 = vmatpush1.bf16.msra.mxu0 0
  %1687 = vmatprep.subr.bf16.mxu0 0
  %1688 = vmatpush1.bf16.msra.mxu0 0
  %1689 = vmatprep.subr.bf16.mxu0 0
  %1690 = vmatpush1.bf16.msra.mxu0 0
  %1691 = vmatprep.subr.bf16.mxu0 0
  %1692 = vmatpush1.bf16.msra.mxu0 0
  %1693 = vmatprep.subr.bf16.mxu0 0
  %1694 = vmatpush1.bf16.msra.mxu0 0
  %1695 = vmatprep.subr.bf16.mxu0 0
  %1696 = vmatpush1.bf16.msra.mxu0 0
  %1697 = vmatprep.subr.bf16.mxu0 0
  %1698 = vmatpush1.bf16.msra.mxu0 0
  %1699 = vmatprep.subr.bf16.mxu0 %v1640
  %1700 = vmatpush1.bf16.msra.mxu0 %v1637
  %1701 = vmatprep.subr.bf16.mxu0 0
  %1702 = vmatpush2.bf16.msra.mxu0 0
  %1703 = vmatprep.subr.bf16.mxu0 0
  %1704 = vmatpush2.bf16.msra.mxu0 0
  %1705 = vmatprep.subr.bf16.mxu0 0
  %1706 = vmatpush2.bf16.msra.mxu0 0
  %1707 = vmatprep.subr.bf16.mxu0 0
  %1708 = vmatpush2.bf16.msra.mxu0 0
  %1709 = vmatprep.subr.bf16.mxu0 0
  %1710 = vmatpush2.bf16.msra.mxu0 0
  %1711 = vmatprep.subr.bf16.mxu0 0
  %1712 = vmatpush2.bf16.msra.mxu0 0
  %1713 = vmatprep.subr.bf16.mxu0 0
  %1714 = vmatpush2.bf16.msra.mxu0 0
  %1715 = vmatprep.subr.bf16.mxu0 0
  %1716 = vmatpush2.bf16.msra.mxu0 0
  %1717 = vmatprep.mubr.bf16.mxu0 0
  %1718 = vmatmul.mubr.bf16.gmra.mxu0 %v1628
  %v1719 = vpop.f32.mrf.mxu0
  %v1720 = vadd.f32 %v1608, %v1719
  %v1721 = vpop.f32.mrf.mxu0
  %v1722 = vadd.f32 %v1612, %v1721
  %v1723 = vpop.f32.mrf.mxu0
  %v1724 = vadd.f32 %v1608, %v1723
  %v1725 = vpop.f32.mrf.mxu0
  %v1726 = vadd.f32 %v1612, %v1725
  %1727 = vdwg.mxu0
  %v1732 = vcombine.low %v1677, %v1679
  %v1733 = vcombine.low %v1720, %v1722
  %v1735 = vunpack.c.l.s4 1983009808
  %v1736 = vunpack.c.0.s8 %v1735
  %v1737 = vlaneseq
  %v1738 = vshrl.u32 %v1737, 7
  %v1739 = vsub.s32 %v1736, %v1738
  %v1740 = vrot.slane %v1732, %v1739
  %v1742 = vunpack.c.l.s4 1983009808
  %v1743 = vunpack.c.0.s8 %v1742
  %v1744 = vlaneseq
  %v1745 = vshrl.u32 %v1744, 7
  %v1746 = vsub.s32 %v1743, %v1745
  %v1747 = vrot.slane %v1733, %v1746
  %v1748 = vcombine.low %v1740, %v1747
  %1750 = vst [vmem:[#allocation2] sm:$0xff] %v1748
  %v1751 = vcombine.high %v1740, %v1747
  %s1753 = scalar_lea.vmem [#allocation2], 8
  %1754 = vst [vmem:[%s1753] sm:$0xff] %v1751
  %v1755 = vcombine.high %v1677, %v1679
  %v1756 = vcombine.high %v1720, %v1722
  %v1758 = vunpack.c.l.s4 1983009808
  %v1759 = vunpack.c.0.s8 %v1758
  %v1760 = vlaneseq
  %v1761 = vshrl.u32 %v1760, 7
  %v1762 = vsub.s32 %v1759, %v1761
  %v1763 = vrot.slane %v1755, %v1762
  %v1765 = vunpack.c.l.s4 1983009808
  %v1766 = vunpack.c.0.s8 %v1765
  %v1767 = vlaneseq
  %v1768 = vshrl.u32 %v1767, 7
  %v1769 = vsub.s32 %v1766, %v1768
  %v1770 = vrot.slane %v1756, %v1769
  %v1771 = vcombine.low %v1763, %v1770
  %s1773 = scalar_lea.vmem [#allocation2], 16
  %1774 = vst [vmem:[%s1773] sm:$0xff] %v1771
  %v1775 = vcombine.high %v1763, %v1770
  %s1777 = scalar_lea.vmem [#allocation2], 24
  %1778 = vst [vmem:[%s1777] sm:$0xff] %v1775
  %v1783 = vcombine.low %v1681, %v1683
  %v1784 = vcombine.low %v1724, %v1726
  %v1786 = vunpack.c.l.s4 1983009808
  %v1787 = vunpack.c.0.s8 %v1786
  %v1788 = vlaneseq
  %v1789 = vshrl.u32 %v1788, 7
  %v1790 = vsub.s32 %v1787, %v1789
  %v1791 = vrot.slane %v1783, %v1790
  %v1793 = vunpack.c.l.s4 1983009808
  %v1794 = vunpack.c.0.s8 %v1793
  %v1795 = vlaneseq
  %v1796 = vshrl.u32 %v1795, 7
  %v1797 = vsub.s32 %v1794, %v1796
  %v1798 = vrot.slane %v1784, %v1797
  %v1799 = vcombine.low %v1791, %v1798
  %s1801 = scalar_lea.vmem [#allocation2], 32
  %1802 = vst [vmem:[%s1801] sm:$0xff] %v1799
  %v1803 = vcombine.high %v1791, %v1798
  %s1805 = scalar_lea.vmem [#allocation2], 40
  %1806 = vst [vmem:[%s1805] sm:$0xff] %v1803
  %v1807 = vcombine.high %v1681, %v1683
  %v1808 = vcombine.high %v1724, %v1726
  %v1810 = vunpack.c.l.s4 1983009808
  %v1811 = vunpack.c.0.s8 %v1810
  %v1812 = vlaneseq
  %v1813 = vshrl.u32 %v1812, 7
  %v1814 = vsub.s32 %v1811, %v1813
  %v1815 = vrot.slane %v1807, %v1814
  %v1817 = vunpack.c.l.s4 1983009808
  %v1818 = vunpack.c.0.s8 %v1817
  %v1819 = vlaneseq
  %v1820 = vshrl.u32 %v1819, 7
  %v1821 = vsub.s32 %v1818, %v1820
  %v1822 = vrot.slane %v1808, %v1821
  %v1823 = vcombine.low %v1815, %v1822
  %s1825 = scalar_lea.vmem [#allocation2], 48
  %1826 = vst [vmem:[%s1825] sm:$0xff] %v1823
  %v1827 = vcombine.high %v1815, %v1822
  %s1829 = scalar_lea.vmem [#allocation2], 56
  %1830 = vst [vmem:[%s1829] sm:$0xff] %v1827
  %v1831 = vld [vmem:[%s5] sm:$0xff]
  %v1832 = vld [vmem:[%s5 + $0x8] sm:$0xff]
  %v1833 = vld [vmem:[%s5 + $0x10] sm:$0xff]
  %v1834 = vld [vmem:[%s5 + $0x18] sm:$0xff]
  %v1835 = vld [vmem:[%s5 + $0x20] sm:$0xff]
  %v1836 = vld [vmem:[%s5 + $0x28] sm:$0xff]
  %v1837 = vld [vmem:[%s5 + $0x30] sm:$0xff]
  %v1838 = vld [vmem:[%s5 + $0x38] sm:$0xff]
  %v1839 = vld [vmem:[%s5 + $0x40] sm:$0xff]
  %v1840 = vld [vmem:[%s5 + $0x48] sm:$0xff]
  %v1841 = vld [vmem:[%s5 + $0x50] sm:$0xff]
  %v1842 = vld [vmem:[%s5 + $0x58] sm:$0xff]
  %v1843 = vld [vmem:[%s5 + $0x60] sm:$0xff]
  %v1844 = vld [vmem:[%s5 + $0x68] sm:$0xff]
  %v1845 = vld [vmem:[%s5 + $0x70] sm:$0xff]
  %v1846 = vld [vmem:[%s5 + $0x78] sm:$0xff]
  %v1847 = vld [vmem:[%s5 + $0x80] sm:$0xff]
  %v1848 = vld [vmem:[%s5 + $0x88] sm:$0xff]
  %v1849 = vld [vmem:[%s5 + $0x90] sm:$0xff]
  %v1850 = vld [vmem:[%s5 + $0x98] sm:$0xff]
  %v1851 = vld [vmem:[%s5 + $0xa0] sm:$0xff]
  %v1852 = vld [vmem:[%s5 + $0xa8] sm:$0xff]
  %v1853 = vld [vmem:[%s5 + $0xb0] sm:$0xff]
  %v1854 = vld [vmem:[%s5 + $0xb8] sm:$0xff]
  %v1855 = vld [vmem:[%s5 + $0xc0] sm:$0xff]
  %v1856 = vld [vmem:[%s5 + $0xc8] sm:$0xff]
  %v1857 = vld [vmem:[%s5 + $0xd0] sm:$0xff]
  %v1858 = vld [vmem:[%s5 + $0xd8] sm:$0xff]
  %v1859 = vld [vmem:[%s5 + $0xe0] sm:$0xff]
  %v1860 = vld [vmem:[%s5 + $0xe8] sm:$0xff]
  %v1861 = vld [vmem:[%s5 + $0xf0] sm:$0xff]
  %v1862 = vld [vmem:[%s5 + $0xf8] sm:$0xff]
  %v1863 = vld [vmem:[#allocation2] sm:$0xff]
  %v1896 = vunpack.c.l.b16 %v1831
  %v1897 = vunpack.c.h.b16 %v1831
  %v1898 = vunpack.c.l.b16 %v1832
  %v1899 = vunpack.c.h.b16 %v1832
  %v1900 = vunpack.c.l.b16 %v1833
  %v1901 = vunpack.c.h.b16 %v1833
  %v1902 = vunpack.c.l.b16 %v1834
  %v1903 = vunpack.c.h.b16 %v1834
  %v1904 = vunpack.c.l.b16 %v1835
  %v1905 = vunpack.c.h.b16 %v1835
  %v1906 = vunpack.c.l.b16 %v1836
  %v1907 = vunpack.c.h.b16 %v1836
  %v1908 = vunpack.c.l.b16 %v1837
  %v1909 = vunpack.c.h.b16 %v1837
  %v1910 = vunpack.c.l.b16 %v1838
  %v1911 = vunpack.c.h.b16 %v1838
  %v1912 = vunpack.c.l.b16 %v1839
  %v1913 = vunpack.c.h.b16 %v1839
  %v1914 = vunpack.c.l.b16 %v1840
  %v1915 = vunpack.c.h.b16 %v1840
  %v1916 = vunpack.c.l.b16 %v1841
  %v1917 = vunpack.c.h.b16 %v1841
  %v1918 = vunpack.c.l.b16 %v1842
  %v1919 = vunpack.c.h.b16 %v1842
  %v1920 = vunpack.c.l.b16 %v1843
  %v1921 = vunpack.c.h.b16 %v1843
  %v1922 = vunpack.c.l.b16 %v1844
  %v1923 = vunpack.c.h.b16 %v1844
  %v1924 = vunpack.c.l.b16 %v1845
  %v1925 = vunpack.c.h.b16 %v1845
  %v1926 = vunpack.c.l.b16 %v1846
  %v1927 = vunpack.c.h.b16 %v1846
  %v1928 = vunpack.c.l.b16 %v1847
  %v1929 = vunpack.c.h.b16 %v1847
  %v1930 = vunpack.c.l.b16 %v1848
  %v1931 = vunpack.c.h.b16 %v1848
  %v1932 = vunpack.c.l.b16 %v1849
  %v1933 = vunpack.c.h.b16 %v1849
  %v1934 = vunpack.c.l.b16 %v1850
  %v1935 = vunpack.c.h.b16 %v1850
  %v1936 = vunpack.c.l.b16 %v1851
  %v1937 = vunpack.c.h.b16 %v1851
  %v1938 = vunpack.c.l.b16 %v1852
  %v1939 = vunpack.c.h.b16 %v1852
  %v1940 = vunpack.c.l.b16 %v1853
  %v1941 = vunpack.c.h.b16 %v1853
  %v1942 = vunpack.c.l.b16 %v1854
  %v1943 = vunpack.c.h.b16 %v1854
  %v1944 = vunpack.c.l.b16 %v1855
  %v1945 = vunpack.c.h.b16 %v1855
  %v1946 = vunpack.c.l.b16 %v1856
  %v1947 = vunpack.c.h.b16 %v1856
  %v1948 = vunpack.c.l.b16 %v1857
  %v1949 = vunpack.c.h.b16 %v1857
  %v1950 = vunpack.c.l.b16 %v1858
  %v1951 = vunpack.c.h.b16 %v1858
  %v1952 = vunpack.c.l.b16 %v1859
  %v1953 = vunpack.c.h.b16 %v1859
  %v1954 = vunpack.c.l.b16 %v1860
  %v1955 = vunpack.c.h.b16 %v1860
  %v1956 = vunpack.c.l.b16 %v1861
  %v1957 = vunpack.c.h.b16 %v1861
  %v1958 = vunpack.c.l.b16 %v1862
  %v1959 = vunpack.c.h.b16 %v1862
  %v1960 = vpack.c.b16 %v1900, %v1896
  %v1961 = vpack.c.b16 %v1901, %v1897
  %v1962 = vpack.c.b16 %v1902, %v1898
  %v1963 = vpack.c.b16 %v1903, %v1899
  %v1964 = vpack.c.b16 %v1908, %v1904
  %v1965 = vpack.c.b16 %v1909, %v1905
  %v1966 = vpack.c.b16 %v1910, %v1906
  %v1967 = vpack.c.b16 %v1911, %v1907
  %v1968 = vpack.c.b16 %v1916, %v1912
  %v1969 = vpack.c.b16 %v1917, %v1913
  %v1970 = vpack.c.b16 %v1918, %v1914
  %v1971 = vpack.c.b16 %v1919, %v1915
  %v1972 = vpack.c.b16 %v1924, %v1920
  %v1973 = vpack.c.b16 %v1925, %v1921
  %v1974 = vpack.c.b16 %v1926, %v1922
  %v1975 = vpack.c.b16 %v1927, %v1923
  %v1976 = vpack.c.b16 %v1932, %v1928
  %v1977 = vpack.c.b16 %v1933, %v1929
  %v1978 = vpack.c.b16 %v1934, %v1930
  %v1979 = vpack.c.b16 %v1935, %v1931
  %v1980 = vpack.c.b16 %v1940, %v1936
  %v1981 = vpack.c.b16 %v1941, %v1937
  %v1982 = vpack.c.b16 %v1942, %v1938
  %v1983 = vpack.c.b16 %v1943, %v1939
  %v1984 = vpack.c.b16 %v1948, %v1944
  %v1985 = vpack.c.b16 %v1949, %v1945
  %v1986 = vpack.c.b16 %v1950, %v1946
  %v1987 = vpack.c.b16 %v1951, %v1947
  %v1988 = vpack.c.b16 %v1956, %v1952
  %v1989 = vpack.c.b16 %v1957, %v1953
  %v1990 = vpack.c.b16 %v1958, %v1954
  %v1991 = vpack.c.b16 %v1959, %v1955
  %2024 = vmatprep.subr.bf16.mxu0 %v1989
  %2025 = vmatpush1.bf16.msra.mxu0 %v1988
  %2026 = vmatprep.subr.bf16.mxu0 %v1985
  %2027 = vmatpush1.bf16.msra.mxu0 %v1984
  %2028 = vmatprep.subr.bf16.mxu0 %v1981
  %2029 = vmatpush1.bf16.msra.mxu0 %v1980
  %2030 = vmatprep.subr.bf16.mxu0 %v1977
  %2031 = vmatpush1.bf16.msra.mxu0 %v1976
  %2032 = vmatprep.subr.bf16.mxu0 %v1973
  %2033 = vmatpush1.bf16.msra.mxu0 %v1972
  %2034 = vmatprep.subr.bf16.mxu0 %v1969
  %2035 = vmatpush1.bf16.msra.mxu0 %v1968
  %2036 = vmatprep.subr.bf16.mxu0 %v1965
  %2037 = vmatpush1.bf16.msra.mxu0 %v1964
  %2038 = vmatprep.subr.bf16.mxu0 %v1961
  %2039 = vmatpush1.bf16.msra.mxu0 %v1960
  %2040 = vmatprep.subr.bf16.mxu0 0
  %2041 = vmatpush2.bf16.msra.mxu0 0
  %2042 = vmatprep.subr.bf16.mxu0 0
  %2043 = vmatpush2.bf16.msra.mxu0 0
  %2044 = vmatprep.subr.bf16.mxu0 0
  %2045 = vmatpush2.bf16.msra.mxu0 0
  %2046 = vmatprep.subr.bf16.mxu0 0
  %2047 = vmatpush2.bf16.msra.mxu0 0
  %2048 = vmatprep.subr.bf16.mxu0 0
  %2049 = vmatpush2.bf16.msra.mxu0 0
  %2050 = vmatprep.subr.bf16.mxu0 0
  %2051 = vmatpush2.bf16.msra.mxu0 0
  %2052 = vmatprep.subr.bf16.mxu0 0
  %2053 = vmatpush2.bf16.msra.mxu0 0
  %2054 = vmatprep.subr.bf16.mxu0 0
  %2055 = vmatpush2.bf16.msra.mxu0 0
  %2056 = vmatprep.mubr.bf16.mxu0 0
  %2057 = vmatmul.mubr.bf16.gmra.mxu0 0
  %v2058 = vpop.f32.mrf.mxu0
  %v2059 = vadd.f32 0.0, %v2058
  %v2060 = vpop.f32.mrf.mxu0
  %v2061 = vadd.f32 0.0, %v2060
  %v2062 = vpop.f32.mrf.mxu0
  %v2063 = vpop.f32.mrf.mxu0
  %2064 = vdwg.mxu0
  %2065 = vmatprep.subr.bf16.mxu0 %v1991
  %2066 = vmatpush1.bf16.msra.mxu0 %v1990
  %2067 = vmatprep.subr.bf16.mxu0 %v1987
  %2068 = vmatpush1.bf16.msra.mxu0 %v1986
  %2069 = vmatprep.subr.bf16.mxu0 %v1983
  %2070 = vmatpush1.bf16.msra.mxu0 %v1982
  %2071 = vmatprep.subr.bf16.mxu0 %v1979
  %2072 = vmatpush1.bf16.msra.mxu0 %v1978
  %2073 = vmatprep.subr.bf16.mxu0 %v1975
  %2074 = vmatpush1.bf16.msra.mxu0 %v1974
  %2075 = vmatprep.subr.bf16.mxu0 %v1971
  %2076 = vmatpush1.bf16.msra.mxu0 %v1970
  %2077 = vmatprep.subr.bf16.mxu0 %v1967
  %2078 = vmatpush1.bf16.msra.mxu0 %v1966
  %2079 = vmatprep.subr.bf16.mxu0 %v1963
  %2080 = vmatpush1.bf16.msra.mxu0 %v1962
  %2081 = vmatprep.subr.bf16.mxu0 0
  %2082 = vmatpush2.bf16.msra.mxu0 0
  %2083 = vmatprep.subr.bf16.mxu0 0
  %2084 = vmatpush2.bf16.msra.mxu0 0
  %2085 = vmatprep.subr.bf16.mxu0 0
  %2086 = vmatpush2.bf16.msra.mxu0 0
  %2087 = vmatprep.subr.bf16.mxu0 0
  %2088 = vmatpush2.bf16.msra.mxu0 0
  %2089 = vmatprep.subr.bf16.mxu0 0
  %2090 = vmatpush2.bf16.msra.mxu0 0
  %2091 = vmatprep.subr.bf16.mxu0 0
  %2092 = vmatpush2.bf16.msra.mxu0 0
  %2093 = vmatprep.subr.bf16.mxu0 0
  %2094 = vmatpush2.bf16.msra.mxu0 0
  %2095 = vmatprep.subr.bf16.mxu0 0
  %2096 = vmatpush2.bf16.msra.mxu0 0
  %2097 = vmatprep.mubr.bf16.mxu0 0
  %2098 = vmatmul.mubr.bf16.gmra.mxu0 0
  %v2099 = vpop.f32.mrf.mxu0
  %v2100 = vadd.f32 0.0, %v2099
  %v2101 = vpop.f32.mrf.mxu0
  %v2102 = vadd.f32 0.0, %v2101
  %v2103 = vpop.f32.mrf.mxu0
  %v2104 = vpop.f32.mrf.mxu0
  %2105 = vdwg.mxu0
  %v2110 = vcombine.low %v2059, %v2061
  %v2111 = vcombine.low %v2100, %v2102
  %v2113 = vunpack.c.l.s4 1983009808
  %v2114 = vunpack.c.0.s8 %v2113
  %v2115 = vlaneseq
  %v2116 = vshrl.u32 %v2115, 7
  %v2117 = vsub.s32 %v2114, %v2116
  %v2118 = vrot.slane %v2110, %v2117
  %v2120 = vunpack.c.l.s4 1983009808
  %v2121 = vunpack.c.0.s8 %v2120
  %v2122 = vlaneseq
  %v2123 = vshrl.u32 %v2122, 7
  %v2124 = vsub.s32 %v2121, %v2123
  %v2125 = vrot.slane %v2111, %v2124
  %v2126 = vcombine.low %v2118, %v2125
  %v2128 = vadd.f32 %v1863, %v2126
  %v2129 = vsub.f32 0.0, %v2128
  %v2130 = vmul.f32 %v2129, 1.442695
  %v2131 = vpow.pop %v2130
  %v2132 = vadd.f32 %v2131, 1.0
  %v2133 = vrcp.pop %v2132
  %v2135 = vrot.slane %v2128, 2
  %v2137 = vsub.f32 0.0, %v2135
  %v2138 = vmul.f32 %v2137, 1.442695
  %v2139 = vpow.pop %v2138
  %v2140 = vadd.f32 %v2139, 1.0
  %v2141 = vrcp.pop %v2140
  %v2142 = vrot.slane %v2128, 4
  %v2144 = vtanh.pop %v2142
  %v2145 = vrot.slane %v2128, 6
  %v2147 = vsub.f32 0.0, %v2145
  %v2148 = vmul.f32 %v2147, 1.442695
  %v2149 = vpow.pop %v2148
  %v2150 = vadd.f32 %v2149, 1.0
  %v2151 = vrcp.pop %v2150
  %v2152 = vmul.f32 %v2141, 0.0
  %v2153 = vmul.f32 %v2133, %v2144
  %v2154 = vadd.f32 %v2152, %v2153
  %v2155 = vtanh.pop %v2154
  %v2156 = vmul.f32 %v2151, %v2155
  %v2157 = vld [vmem:[%s1753] sm:$0xff]
  %v2158 = vpack.c.bf16 %v2156, %v2156
  %2159 = vmatprep.subr.bf16.mxu0 %v1989
  %2160 = vmatpush1.bf16.msra.mxu0 %v1988
  %2161 = vmatprep.subr.bf16.mxu0 %v1985
  %2162 = vmatpush1.bf16.msra.mxu0 %v1984
  %2163 = vmatprep.subr.bf16.mxu0 %v1981
  %2164 = vmatpush1.bf16.msra.mxu0 %v1980
  %2165 = vmatprep.subr.bf16.mxu0 %v1977
  %2166 = vmatpush1.bf16.msra.mxu0 %v1976
  %2167 = vmatprep.subr.bf16.mxu0 %v1973
  %2168 = vmatpush1.bf16.msra.mxu0 %v1972
  %2169 = vmatprep.subr.bf16.mxu0 %v1969
  %2170 = vmatpush1.bf16.msra.mxu0 %v1968
  %2171 = vmatprep.subr.bf16.mxu0 %v1965
  %2172 = vmatpush1.bf16.msra.mxu0 %v1964
  %2173 = vmatprep.subr.bf16.mxu0 %v1961
  %2174 = vmatpush1.bf16.msra.mxu0 %v1960
  %2175 = vmatprep.subr.bf16.mxu0 0
  %2176 = vmatpush2.bf16.msra.mxu0 0
  %2177 = vmatprep.subr.bf16.mxu0 0
  %2178 = vmatpush2.bf16.msra.mxu0 0
  %2179 = vmatprep.subr.bf16.mxu0 0
  %2180 = vmatpush2.bf16.msra.mxu0 0
  %2181 = vmatprep.subr.bf16.mxu0 0
  %2182 = vmatpush2.bf16.msra.mxu0 0
  %2183 = vmatprep.subr.bf16.mxu0 0
  %2184 = vmatpush2.bf16.msra.mxu0 0
  %2185 = vmatprep.subr.bf16.mxu0 0
  %2186 = vmatpush2.bf16.msra.mxu0 0
  %2187 = vmatprep.subr.bf16.mxu0 0
  %2188 = vmatpush2.bf16.msra.mxu0 0
  %2189 = vmatprep.subr.bf16.mxu0 0
  %2190 = vmatpush2.bf16.msra.mxu0 0
  %2191 = vmatprep.mubr.bf16.mxu0 0
  %2192 = vmatmul.mubr.bf16.gmra.mxu0 %v2158
  %v2193 = vpop.f32.mrf.mxu0
  %v2194 = vadd.f32 0.0, %v2193
  %v2195 = vpop.f32.mrf.mxu0
  %v2196 = vadd.f32 0.0, %v2195
  %v2197 = vpop.f32.mrf.mxu0
  %v2198 = vpop.f32.mrf.mxu0
  %2199 = vdwg.mxu0
  %2200 = vmatprep.subr.bf16.mxu0 %v1991
  %2201 = vmatpush1.bf16.msra.mxu0 %v1990
  %2202 = vmatprep.subr.bf16.mxu0 %v1987
  %2203 = vmatpush1.bf16.msra.mxu0 %v1986
  %2204 = vmatprep.subr.bf16.mxu0 %v1983
  %2205 = vmatpush1.bf16.msra.mxu0 %v1982
  %2206 = vmatprep.subr.bf16.mxu0 %v1979
  %2207 = vmatpush1.bf16.msra.mxu0 %v1978
  %2208 = vmatprep.subr.bf16.mxu0 %v1975
  %2209 = vmatpush1.bf16.msra.mxu0 %v1974
  %2210 = vmatprep.subr.bf16.mxu0 %v1971
  %2211 = vmatpush1.bf16.msra.mxu0 %v1970
  %2212 = vmatprep.subr.bf16.mxu0 %v1967
  %2213 = vmatpush1.bf16.msra.mxu0 %v1966
  %2214 = vmatprep.subr.bf16.mxu0 %v1963
  %2215 = vmatpush1.bf16.msra.mxu0 %v1962
  %2216 = vmatprep.subr.bf16.mxu0 0
  %2217 = vmatpush2.bf16.msra.mxu0 0
  %2218 = vmatprep.subr.bf16.mxu0 0
  %2219 = vmatpush2.bf16.msra.mxu0 0
  %2220 = vmatprep.subr.bf16.mxu0 0
  %2221 = vmatpush2.bf16.msra.mxu0 0
  %2222 = vmatprep.subr.bf16.mxu0 0
  %2223 = vmatpush2.bf16.msra.mxu0 0
  %2224 = vmatprep.subr.bf16.mxu0 0
  %2225 = vmatpush2.bf16.msra.mxu0 0
  %2226 = vmatprep.subr.bf16.mxu0 0
  %2227 = vmatpush2.bf16.msra.mxu0 0
  %2228 = vmatprep.subr.bf16.mxu0 0
  %2229 = vmatpush2.bf16.msra.mxu0 0
  %2230 = vmatprep.subr.bf16.mxu0 0
  %2231 = vmatpush2.bf16.msra.mxu0 0
  %2232 = vmatprep.mubr.bf16.mxu0 0
  %2233 = vmatmul.mubr.bf16.gmra.mxu0 %v2158
  %v2234 = vpop.f32.mrf.mxu0
  %v2235 = vadd.f32 0.0, %v2234
  %v2236 = vpop.f32.mrf.mxu0
  %v2237 = vadd.f32 0.0, %v2236
  %v2238 = vpop.f32.mrf.mxu0
  %v2239 = vpop.f32.mrf.mxu0
  %2240 = vdwg.mxu0
  %v2245 = vcombine.low %v2194, %v2196
  %v2246 = vcombine.low %v2235, %v2237
  %v2248 = vunpack.c.l.s4 1983009808
  %v2249 = vunpack.c.0.s8 %v2248
  %v2250 = vlaneseq
  %v2251 = vshrl.u32 %v2250, 7
  %v2252 = vsub.s32 %v2249, %v2251
  %v2253 = vrot.slane %v2245, %v2252
  %v2255 = vunpack.c.l.s4 1983009808
  %v2256 = vunpack.c.0.s8 %v2255
  %v2257 = vlaneseq
  %v2258 = vshrl.u32 %v2257, 7
  %v2259 = vsub.s32 %v2256, %v2258
  %v2260 = vrot.slane %v2246, %v2259
  %v2261 = vcombine.low %v2253, %v2260
  %v2263 = vadd.f32 %v2157, %v2261
  %v2264 = vsub.f32 0.0, %v2263
  %v2265 = vmul.f32 %v2264, 1.442695
  %v2266 = vpow.pop %v2265
  %v2267 = vadd.f32 %v2266, 1.0
  %v2268 = vrcp.pop %v2267
  %v2270 = vrot.slane %v2263, 2
  %v2272 = vsub.f32 0.0, %v2270
  %v2273 = vmul.f32 %v2272, 1.442695
  %v2274 = vpow.pop %v2273
  %v2275 = vadd.f32 %v2274, 1.0
  %v2276 = vrcp.pop %v2275
  %v2277 = vrot.slane %v2263, 4
  %v2279 = vtanh.pop %v2277
  %v2280 = vrot.slane %v2263, 6
  %v2282 = vsub.f32 0.0, %v2280
  %v2283 = vmul.f32 %v2282, 1.442695
  %v2284 = vpow.pop %v2283
  %v2285 = vadd.f32 %v2284, 1.0
  %v2286 = vrcp.pop %v2285
  %v2287 = vmul.f32 %v2276, %v2154
  %v2288 = vmul.f32 %v2268, %v2279
  %v2289 = vadd.f32 %v2287, %v2288
  %v2290 = vtanh.pop %v2289
  %v2291 = vmul.f32 %v2286, %v2290
  %v2292 = vld [vmem:[%s1773] sm:$0xff]
  %v2293 = vpack.c.bf16 %v2291, %v2291
  %2294 = vmatprep.subr.bf16.mxu0 %v1989
  %2295 = vmatpush1.bf16.msra.mxu0 %v1988
  %2296 = vmatprep.subr.bf16.mxu0 %v1985
  %2297 = vmatpush1.bf16.msra.mxu0 %v1984
  %2298 = vmatprep.subr.bf16.mxu0 %v1981
  %2299 = vmatpush1.bf16.msra.mxu0 %v1980
  %2300 = vmatprep.subr.bf16.mxu0 %v1977
  %2301 = vmatpush1.bf16.msra.mxu0 %v1976
  %2302 = vmatprep.subr.bf16.mxu0 %v1973
  %2303 = vmatpush1.bf16.msra.mxu0 %v1972
  %2304 = vmatprep.subr.bf16.mxu0 %v1969
  %2305 = vmatpush1.bf16.msra.mxu0 %v1968
  %2306 = vmatprep.subr.bf16.mxu0 %v1965
  %2307 = vmatpush1.bf16.msra.mxu0 %v1964
  %2308 = vmatprep.subr.bf16.mxu0 %v1961
  %2309 = vmatpush1.bf16.msra.mxu0 %v1960
  %2310 = vmatprep.subr.bf16.mxu0 0
  %2311 = vmatpush2.bf16.msra.mxu0 0
  %2312 = vmatprep.subr.bf16.mxu0 0
  %2313 = vmatpush2.bf16.msra.mxu0 0
  %2314 = vmatprep.subr.bf16.mxu0 0
  %2315 = vmatpush2.bf16.msra.mxu0 0
  %2316 = vmatprep.subr.bf16.mxu0 0
  %2317 = vmatpush2.bf16.msra.mxu0 0
  %2318 = vmatprep.subr.bf16.mxu0 0
  %2319 = vmatpush2.bf16.msra.mxu0 0
  %2320 = vmatprep.subr.bf16.mxu0 0
  %2321 = vmatpush2.bf16.msra.mxu0 0
  %2322 = vmatprep.subr.bf16.mxu0 0
  %2323 = vmatpush2.bf16.msra.mxu0 0
  %2324 = vmatprep.subr.bf16.mxu0 0
  %2325 = vmatpush2.bf16.msra.mxu0 0
  %2326 = vmatprep.mubr.bf16.mxu0 0
  %2327 = vmatmul.mubr.bf16.gmra.mxu0 %v2293
  %v2328 = vpop.f32.mrf.mxu0
  %v2329 = vadd.f32 0.0, %v2328
  %v2330 = vpop.f32.mrf.mxu0
  %v2331 = vadd.f32 0.0, %v2330
  %v2332 = vpop.f32.mrf.mxu0
  %v2333 = vpop.f32.mrf.mxu0
  %2334 = vdwg.mxu0
  %2335 = vmatprep.subr.bf16.mxu0 %v1991
  %2336 = vmatpush1.bf16.msra.mxu0 %v1990
  %2337 = vmatprep.subr.bf16.mxu0 %v1987
  %2338 = vmatpush1.bf16.msra.mxu0 %v1986
  %2339 = vmatprep.subr.bf16.mxu0 %v1983
  %2340 = vmatpush1.bf16.msra.mxu0 %v1982
  %2341 = vmatprep.subr.bf16.mxu0 %v1979
  %2342 = vmatpush1.bf16.msra.mxu0 %v1978
  %2343 = vmatprep.subr.bf16.mxu0 %v1975
  %2344 = vmatpush1.bf16.msra.mxu0 %v1974
  %2345 = vmatprep.subr.bf16.mxu0 %v1971
  %2346 = vmatpush1.bf16.msra.mxu0 %v1970
  %2347 = vmatprep.subr.bf16.mxu0 %v1967
  %2348 = vmatpush1.bf16.msra.mxu0 %v1966
  %2349 = vmatprep.subr.bf16.mxu0 %v1963
  %2350 = vmatpush1.bf16.msra.mxu0 %v1962
  %2351 = vmatprep.subr.bf16.mxu0 0
  %2352 = vmatpush2.bf16.msra.mxu0 0
  %2353 = vmatprep.subr.bf16.mxu0 0
  %2354 = vmatpush2.bf16.msra.mxu0 0
  %2355 = vmatprep.subr.bf16.mxu0 0
  %2356 = vmatpush2.bf16.msra.mxu0 0
  %2357 = vmatprep.subr.bf16.mxu0 0
  %2358 = vmatpush2.bf16.msra.mxu0 0
  %2359 = vmatprep.subr.bf16.mxu0 0
  %2360 = vmatpush2.bf16.msra.mxu0 0
  %2361 = vmatprep.subr.bf16.mxu0 0
  %2362 = vmatpush2.bf16.msra.mxu0 0
  %2363 = vmatprep.subr.bf16.mxu0 0
  %2364 = vmatpush2.bf16.msra.mxu0 0
  %2365 = vmatprep.subr.bf16.mxu0 0
  %2366 = vmatpush2.bf16.msra.mxu0 0
  %2367 = vmatprep.mubr.bf16.mxu0 0
  %2368 = vmatmul.mubr.bf16.gmra.mxu0 %v2293
  %v2369 = vpop.f32.mrf.mxu0
  %v2370 = vadd.f32 0.0, %v2369
  %v2371 = vpop.f32.mrf.mxu0
  %v2372 = vadd.f32 0.0, %v2371
  %v2373 = vpop.f32.mrf.mxu0
  %v2374 = vpop.f32.mrf.mxu0
  %2375 = vdwg.mxu0
  %v2380 = vcombine.low %v2329, %v2331
  %v2381 = vcombine.low %v2370, %v2372
  %v2383 = vunpack.c.l.s4 1983009808
  %v2384 = vunpack.c.0.s8 %v2383
  %v2385 = vlaneseq
  %v2386 = vshrl.u32 %v2385, 7
  %v2387 = vsub.s32 %v2384, %v2386
  %v2388 = vrot.slane %v2380, %v2387
  %v2390 = vunpack.c.l.s4 1983009808
  %v2391 = vunpack.c.0.s8 %v2390
  %v2392 = vlaneseq
  %v2393 = vshrl.u32 %v2392, 7
  %v2394 = vsub.s32 %v2391, %v2393
  %v2395 = vrot.slane %v2381, %v2394
  %v2396 = vcombine.low %v2388, %v2395
  %v2398 = vadd.f32 %v2292, %v2396
  %v2399 = vsub.f32 0.0, %v2398
  %v2400 = vmul.f32 %v2399, 1.442695
  %v2401 = vpow.pop %v2400
  %v2402 = vadd.f32 %v2401, 1.0
  %v2403 = vrcp.pop %v2402
  %v2405 = vrot.slane %v2398, 2
  %v2407 = vsub.f32 0.0, %v2405
  %v2408 = vmul.f32 %v2407, 1.442695
  %v2409 = vpow.pop %v2408
  %v2410 = vadd.f32 %v2409, 1.0
  %v2411 = vrcp.pop %v2410
  %v2412 = vrot.slane %v2398, 4
  %v2414 = vtanh.pop %v2412
  %v2415 = vrot.slane %v2398, 6
  %v2417 = vsub.f32 0.0, %v2415
  %v2418 = vmul.f32 %v2417, 1.442695
  %v2419 = vpow.pop %v2418
  %v2420 = vadd.f32 %v2419, 1.0
  %v2421 = vrcp.pop %v2420
  %v2422 = vmul.f32 %v2411, %v2289
  %v2423 = vmul.f32 %v2403, %v2414
  %v2424 = vadd.f32 %v2422, %v2423
  %v2425 = vtanh.pop %v2424
  %v2426 = vmul.f32 %v2421, %v2425
  %v2427 = vld [vmem:[%s1777] sm:$0xff]
  %v2428 = vpack.c.bf16 %v2426, %v2426
  %2429 = vmatprep.subr.bf16.mxu0 %v1989
  %2430 = vmatpush1.bf16.msra.mxu0 %v1988
  %2431 = vmatprep.subr.bf16.mxu0 %v1985
  %2432 = vmatpush1.bf16.msra.mxu0 %v1984
  %2433 = vmatprep.subr.bf16.mxu0 %v1981
  %2434 = vmatpush1.bf16.msra.mxu0 %v1980
  %2435 = vmatprep.subr.bf16.mxu0 %v1977
  %2436 = vmatpush1.bf16.msra.mxu0 %v1976
  %2437 = vmatprep.subr.bf16.mxu0 %v1973
  %2438 = vmatpush1.bf16.msra.mxu0 %v1972
  %2439 = vmatprep.subr.bf16.mxu0 %v1969
  %2440 = vmatpush1.bf16.msra.mxu0 %v1968
  %2441 = vmatprep.subr.bf16.mxu0 %v1965
  %2442 = vmatpush1.bf16.msra.mxu0 %v1964
  %2443 = vmatprep.subr.bf16.mxu0 %v1961
  %2444 = vmatpush1.bf16.msra.mxu0 %v1960
  %2445 = vmatprep.subr.bf16.mxu0 0
  %2446 = vmatpush2.bf16.msra.mxu0 0
  %2447 = vmatprep.subr.bf16.mxu0 0
  %2448 = vmatpush2.bf16.msra.mxu0 0
  %2449 = vmatprep.subr.bf16.mxu0 0
  %2450 = vmatpush2.bf16.msra.mxu0 0
  %2451 = vmatprep.subr.bf16.mxu0 0
  %2452 = vmatpush2.bf16.msra.mxu0 0
  %2453 = vmatprep.subr.bf16.mxu0 0
  %2454 = vmatpush2.bf16.msra.mxu0 0
  %2455 = vmatprep.subr.bf16.mxu0 0
  %2456 = vmatpush2.bf16.msra.mxu0 0
  %2457 = vmatprep.subr.bf16.mxu0 0
  %2458 = vmatpush2.bf16.msra.mxu0 0
  %2459 = vmatprep.subr.bf16.mxu0 0
  %2460 = vmatpush2.bf16.msra.mxu0 0
  %2461 = vmatprep.mubr.bf16.mxu0 0
  %2462 = vmatmul.mubr.bf16.gmra.mxu0 %v2428
  %v2463 = vpop.f32.mrf.mxu0
  %v2464 = vadd.f32 0.0, %v2463
  %v2465 = vpop.f32.mrf.mxu0
  %v2466 = vadd.f32 0.0, %v2465
  %v2467 = vpop.f32.mrf.mxu0
  %v2468 = vpop.f32.mrf.mxu0
  %2469 = vdwg.mxu0
  %2470 = vmatprep.subr.bf16.mxu0 %v1991
  %2471 = vmatpush1.bf16.msra.mxu0 %v1990
  %2472 = vmatprep.subr.bf16.mxu0 %v1987
  %2473 = vmatpush1.bf16.msra.mxu0 %v1986
  %2474 = vmatprep.subr.bf16.mxu0 %v1983
  %2475 = vmatpush1.bf16.msra.mxu0 %v1982
  %2476 = vmatprep.subr.bf16.mxu0 %v1979
  %2477 = vmatpush1.bf16.msra.mxu0 %v1978
  %2478 = vmatprep.subr.bf16.mxu0 %v1975
  %2479 = vmatpush1.bf16.msra.mxu0 %v1974
  %2480 = vmatprep.subr.bf16.mxu0 %v1971
  %2481 = vmatpush1.bf16.msra.mxu0 %v1970
  %2482 = vmatprep.subr.bf16.mxu0 %v1967
  %2483 = vmatpush1.bf16.msra.mxu0 %v1966
  %2484 = vmatprep.subr.bf16.mxu0 %v1963
  %2485 = vmatpush1.bf16.msra.mxu0 %v1962
  %2486 = vmatprep.subr.bf16.mxu0 0
  %2487 = vmatpush2.bf16.msra.mxu0 0
  %2488 = vmatprep.subr.bf16.mxu0 0
  %2489 = vmatpush2.bf16.msra.mxu0 0
  %2490 = vmatprep.subr.bf16.mxu0 0
  %2491 = vmatpush2.bf16.msra.mxu0 0
  %2492 = vmatprep.subr.bf16.mxu0 0
  %2493 = vmatpush2.bf16.msra.mxu0 0
  %2494 = vmatprep.subr.bf16.mxu0 0
  %2495 = vmatpush2.bf16.msra.mxu0 0
  %2496 = vmatprep.subr.bf16.mxu0 0
  %2497 = vmatpush2.bf16.msra.mxu0 0
  %2498 = vmatprep.subr.bf16.mxu0 0
  %2499 = vmatpush2.bf16.msra.mxu0 0
  %2500 = vmatprep.subr.bf16.mxu0 0
  %2501 = vmatpush2.bf16.msra.mxu0 0
  %2502 = vmatprep.mubr.bf16.mxu0 0
  %2503 = vmatmul.mubr.bf16.gmra.mxu0 %v2428
  %v2504 = vpop.f32.mrf.mxu0
  %v2505 = vadd.f32 0.0, %v2504
  %v2506 = vpop.f32.mrf.mxu0
  %v2507 = vadd.f32 0.0, %v2506
  %v2508 = vpop.f32.mrf.mxu0
  %v2509 = vpop.f32.mrf.mxu0
  %2510 = vdwg.mxu0
  %v2515 = vcombine.low %v2464, %v2466
  %v2516 = vcombine.low %v2505, %v2507
  %v2518 = vunpack.c.l.s4 1983009808
  %v2519 = vunpack.c.0.s8 %v2518
  %v2520 = vlaneseq
  %v2521 = vshrl.u32 %v2520, 7
  %v2522 = vsub.s32 %v2519, %v2521
  %v2523 = vrot.slane %v2515, %v2522
  %v2525 = vunpack.c.l.s4 1983009808
  %v2526 = vunpack.c.0.s8 %v2525
  %v2527 = vlaneseq
  %v2528 = vshrl.u32 %v2527, 7
  %v2529 = vsub.s32 %v2526, %v2528
  %v2530 = vrot.slane %v2516, %v2529
  %v2531 = vcombine.low %v2523, %v2530
  %v2533 = vadd.f32 %v2427, %v2531
  %v2534 = vsub.f32 0.0, %v2533
  %v2535 = vmul.f32 %v2534, 1.442695
  %v2536 = vpow.pop %v2535
  %v2537 = vadd.f32 %v2536, 1.0
  %v2538 = vrcp.pop %v2537
  %v2540 = vrot.slane %v2533, 2
  %v2542 = vsub.f32 0.0, %v2540
  %v2543 = vmul.f32 %v2542, 1.442695
  %v2544 = vpow.pop %v2543
  %v2545 = vadd.f32 %v2544, 1.0
  %v2546 = vrcp.pop %v2545
  %v2547 = vrot.slane %v2533, 4
  %v2549 = vtanh.pop %v2547
  %v2550 = vrot.slane %v2533, 6
  %v2552 = vsub.f32 0.0, %v2550
  %v2553 = vmul.f32 %v2552, 1.442695
  %v2554 = vpow.pop %v2553
  %v2555 = vadd.f32 %v2554, 1.0
  %v2556 = vrcp.pop %v2555
  %v2557 = vmul.f32 %v2546, %v2424
  %v2558 = vmul.f32 %v2538, %v2549
  %v2559 = vadd.f32 %v2557, %v2558
  %v2560 = vtanh.pop %v2559
  %v2561 = vmul.f32 %v2556, %v2560
  %v2562 = vld [vmem:[%s1801] sm:$0xff]
  %v2563 = vpack.c.bf16 %v2561, %v2561
  %2564 = vmatprep.subr.bf16.mxu0 %v1989
  %2565 = vmatpush1.bf16.msra.mxu0 %v1988
  %2566 = vmatprep.subr.bf16.mxu0 %v1985
  %2567 = vmatpush1.bf16.msra.mxu0 %v1984
  %2568 = vmatprep.subr.bf16.mxu0 %v1981
  %2569 = vmatpush1.bf16.msra.mxu0 %v1980
  %2570 = vmatprep.subr.bf16.mxu0 %v1977
  %2571 = vmatpush1.bf16.msra.mxu0 %v1976
  %2572 = vmatprep.subr.bf16.mxu0 %v1973
  %2573 = vmatpush1.bf16.msra.mxu0 %v1972
  %2574 = vmatprep.subr.bf16.mxu0 %v1969
  %2575 = vmatpush1.bf16.msra.mxu0 %v1968
  %2576 = vmatprep.subr.bf16.mxu0 %v1965
  %2577 = vmatpush1.bf16.msra.mxu0 %v1964
  %2578 = vmatprep.subr.bf16.mxu0 %v1961
  %2579 = vmatpush1.bf16.msra.mxu0 %v1960
  %2580 = vmatprep.subr.bf16.mxu0 0
  %2581 = vmatpush2.bf16.msra.mxu0 0
  %2582 = vmatprep.subr.bf16.mxu0 0
  %2583 = vmatpush2.bf16.msra.mxu0 0
  %2584 = vmatprep.subr.bf16.mxu0 0
  %2585 = vmatpush2.bf16.msra.mxu0 0
  %2586 = vmatprep.subr.bf16.mxu0 0
  %2587 = vmatpush2.bf16.msra.mxu0 0
  %2588 = vmatprep.subr.bf16.mxu0 0
  %2589 = vmatpush2.bf16.msra.mxu0 0
  %2590 = vmatprep.subr.bf16.mxu0 0
  %2591 = vmatpush2.bf16.msra.mxu0 0
  %2592 = vmatprep.subr.bf16.mxu0 0
  %2593 = vmatpush2.bf16.msra.mxu0 0
  %2594 = vmatprep.subr.bf16.mxu0 0
  %2595 = vmatpush2.bf16.msra.mxu0 0
  %2596 = vmatprep.mubr.bf16.mxu0 0
  %2597 = vmatmul.mubr.bf16.gmra.mxu0 %v2563
  %v2598 = vpop.f32.mrf.mxu0
  %v2599 = vadd.f32 0.0, %v2598
  %v2600 = vpop.f32.mrf.mxu0
  %v2601 = vadd.f32 0.0, %v2600
  %v2602 = vpop.f32.mrf.mxu0
  %v2603 = vpop.f32.mrf.mxu0
  %2604 = vdwg.mxu0
  %2605 = vmatprep.subr.bf16.mxu0 %v1991
  %2606 = vmatpush1.bf16.msra.mxu0 %v1990
  %2607 = vmatprep.subr.bf16.mxu0 %v1987
  %2608 = vmatpush1.bf16.msra.mxu0 %v1986
  %2609 = vmatprep.subr.bf16.mxu0 %v1983
  %2610 = vmatpush1.bf16.msra.mxu0 %v1982
  %2611 = vmatprep.subr.bf16.mxu0 %v1979
  %2612 = vmatpush1.bf16.msra.mxu0 %v1978
  %2613 = vmatprep.subr.bf16.mxu0 %v1975
  %2614 = vmatpush1.bf16.msra.mxu0 %v1974
  %2615 = vmatprep.subr.bf16.mxu0 %v1971
  %2616 = vmatpush1.bf16.msra.mxu0 %v1970
  %2617 = vmatprep.subr.bf16.mxu0 %v1967
  %2618 = vmatpush1.bf16.msra.mxu0 %v1966
  %2619 = vmatprep.subr.bf16.mxu0 %v1963
  %2620 = vmatpush1.bf16.msra.mxu0 %v1962
  %2621 = vmatprep.subr.bf16.mxu0 0
  %2622 = vmatpush2.bf16.msra.mxu0 0
  %2623 = vmatprep.subr.bf16.mxu0 0
  %2624 = vmatpush2.bf16.msra.mxu0 0
  %2625 = vmatprep.subr.bf16.mxu0 0
  %2626 = vmatpush2.bf16.msra.mxu0 0
  %2627 = vmatprep.subr.bf16.mxu0 0
  %2628 = vmatpush2.bf16.msra.mxu0 0
  %2629 = vmatprep.subr.bf16.mxu0 0
  %2630 = vmatpush2.bf16.msra.mxu0 0
  %2631 = vmatprep.subr.bf16.mxu0 0
  %2632 = vmatpush2.bf16.msra.mxu0 0
  %2633 = vmatprep.subr.bf16.mxu0 0
  %2634 = vmatpush2.bf16.msra.mxu0 0
  %2635 = vmatprep.subr.bf16.mxu0 0
  %2636 = vmatpush2.bf16.msra.mxu0 0
  %2637 = vmatprep.mubr.bf16.mxu0 0
  %2638 = vmatmul.mubr.bf16.gmra.mxu0 %v2563
  %v2639 = vpop.f32.mrf.mxu0
  %v2640 = vadd.f32 0.0, %v2639
  %v2641 = vpop.f32.mrf.mxu0
  %v2642 = vadd.f32 0.0, %v2641
  %v2643 = vpop.f32.mrf.mxu0
  %v2644 = vpop.f32.mrf.mxu0
  %2645 = vdwg.mxu0
  %v2650 = vcombine.low %v2599, %v2601
  %v2651 = vcombine.low %v2640, %v2642
  %v2653 = vunpack.c.l.s4 1983009808
  %v2654 = vunpack.c.0.s8 %v2653
  %v2655 = vlaneseq
  %v2656 = vshrl.u32 %v2655, 7
  %v2657 = vsub.s32 %v2654, %v2656
  %v2658 = vrot.slane %v2650, %v2657
  %v2660 = vunpack.c.l.s4 1983009808
  %v2661 = vunpack.c.0.s8 %v2660
  %v2662 = vlaneseq
  %v2663 = vshrl.u32 %v2662, 7
  %v2664 = vsub.s32 %v2661, %v2663
  %v2665 = vrot.slane %v2651, %v2664
  %v2666 = vcombine.low %v2658, %v2665
  %v2668 = vadd.f32 %v2562, %v2666
  %v2669 = vsub.f32 0.0, %v2668
  %v2670 = vmul.f32 %v2669, 1.442695
  %v2671 = vpow.pop %v2670
  %v2672 = vadd.f32 %v2671, 1.0
  %v2673 = vrcp.pop %v2672
  %v2675 = vrot.slane %v2668, 2
  %v2677 = vsub.f32 0.0, %v2675
  %v2678 = vmul.f32 %v2677, 1.442695
  %v2679 = vpow.pop %v2678
  %v2680 = vadd.f32 %v2679, 1.0
  %v2681 = vrcp.pop %v2680
  %v2682 = vrot.slane %v2668, 4
  %v2684 = vtanh.pop %v2682
  %v2685 = vrot.slane %v2668, 6
  %v2687 = vsub.f32 0.0, %v2685
  %v2688 = vmul.f32 %v2687, 1.442695
  %v2689 = vpow.pop %v2688
  %v2690 = vadd.f32 %v2689, 1.0
  %v2691 = vrcp.pop %v2690
  %v2692 = vmul.f32 %v2681, %v2559
  %v2693 = vmul.f32 %v2673, %v2684
  %v2694 = vadd.f32 %v2692, %v2693
  %v2695 = vtanh.pop %v2694
  %v2696 = vmul.f32 %v2691, %v2695
  %v2697 = vld [vmem:[%s1805] sm:$0xff]
  %v2698 = vpack.c.bf16 %v2696, %v2696
  %2699 = vmatprep.subr.bf16.mxu0 %v1989
  %2700 = vmatpush1.bf16.msra.mxu0 %v1988
  %2701 = vmatprep.subr.bf16.mxu0 %v1985
  %2702 = vmatpush1.bf16.msra.mxu0 %v1984
  %2703 = vmatprep.subr.bf16.mxu0 %v1981
  %2704 = vmatpush1.bf16.msra.mxu0 %v1980
  %2705 = vmatprep.subr.bf16.mxu0 %v1977
  %2706 = vmatpush1.bf16.msra.mxu0 %v1976
  %2707 = vmatprep.subr.bf16.mxu0 %v1973
  %2708 = vmatpush1.bf16.msra.mxu0 %v1972
  %2709 = vmatprep.subr.bf16.mxu0 %v1969
  %2710 = vmatpush1.bf16.msra.mxu0 %v1968
  %2711 = vmatprep.subr.bf16.mxu0 %v1965
  %2712 = vmatpush1.bf16.msra.mxu0 %v1964
  %2713 = vmatprep.subr.bf16.mxu0 %v1961
  %2714 = vmatpush1.bf16.msra.mxu0 %v1960
  %2715 = vmatprep.subr.bf16.mxu0 0
  %2716 = vmatpush2.bf16.msra.mxu0 0
  %2717 = vmatprep.subr.bf16.mxu0 0
  %2718 = vmatpush2.bf16.msra.mxu0 0
  %2719 = vmatprep.subr.bf16.mxu0 0
  %2720 = vmatpush2.bf16.msra.mxu0 0
  %2721 = vmatprep.subr.bf16.mxu0 0
  %2722 = vmatpush2.bf16.msra.mxu0 0
  %2723 = vmatprep.subr.bf16.mxu0 0
  %2724 = vmatpush2.bf16.msra.mxu0 0
  %2725 = vmatprep.subr.bf16.mxu0 0
  %2726 = vmatpush2.bf16.msra.mxu0 0
  %2727 = vmatprep.subr.bf16.mxu0 0
  %2728 = vmatpush2.bf16.msra.mxu0 0
  %2729 = vmatprep.subr.bf16.mxu0 0
  %2730 = vmatpush2.bf16.msra.mxu0 0
  %2731 = vmatprep.mubr.bf16.mxu0 0
  %2732 = vmatmul.mubr.bf16.gmra.mxu0 %v2698
  %v2733 = vpop.f32.mrf.mxu0
  %v2734 = vadd.f32 0.0, %v2733
  %v2735 = vpop.f32.mrf.mxu0
  %v2736 = vadd.f32 0.0, %v2735
  %v2737 = vpop.f32.mrf.mxu0
  %v2738 = vpop.f32.mrf.mxu0
  %2739 = vdwg.mxu0
  %2740 = vmatprep.subr.bf16.mxu0 %v1991
  %2741 = vmatpush1.bf16.msra.mxu0 %v1990
  %2742 = vmatprep.subr.bf16.mxu0 %v1987
  %2743 = vmatpush1.bf16.msra.mxu0 %v1986
  %2744 = vmatprep.subr.bf16.mxu0 %v1983
  %2745 = vmatpush1.bf16.msra.mxu0 %v1982
  %2746 = vmatprep.subr.bf16.mxu0 %v1979
  %2747 = vmatpush1.bf16.msra.mxu0 %v1978
  %2748 = vmatprep.subr.bf16.mxu0 %v1975
  %2749 = vmatpush1.bf16.msra.mxu0 %v1974
  %2750 = vmatprep.subr.bf16.mxu0 %v1971
  %2751 = vmatpush1.bf16.msra.mxu0 %v1970
  %2752 = vmatprep.subr.bf16.mxu0 %v1967
  %2753 = vmatpush1.bf16.msra.mxu0 %v1966
  %2754 = vmatprep.subr.bf16.mxu0 %v1963
  %2755 = vmatpush1.bf16.msra.mxu0 %v1962
  %2756 = vmatprep.subr.bf16.mxu0 0
  %2757 = vmatpush2.bf16.msra.mxu0 0
  %2758 = vmatprep.subr.bf16.mxu0 0
  %2759 = vmatpush2.bf16.msra.mxu0 0
  %2760 = vmatprep.subr.bf16.mxu0 0
  %2761 = vmatpush2.bf16.msra.mxu0 0
  %2762 = vmatprep.subr.bf16.mxu0 0
  %2763 = vmatpush2.bf16.msra.mxu0 0
  %2764 = vmatprep.subr.bf16.mxu0 0
  %2765 = vmatpush2.bf16.msra.mxu0 0
  %2766 = vmatprep.subr.bf16.mxu0 0
  %2767 = vmatpush2.bf16.msra.mxu0 0
  %2768 = vmatprep.subr.bf16.mxu0 0
  %2769 = vmatpush2.bf16.msra.mxu0 0
  %2770 = vmatprep.subr.bf16.mxu0 0
  %2771 = vmatpush2.bf16.msra.mxu0 0
  %2772 = vmatprep.mubr.bf16.mxu0 0
  %2773 = vmatmul.mubr.bf16.gmra.mxu0 %v2698
  %v2774 = vpop.f32.mrf.mxu0
  %v2775 = vadd.f32 0.0, %v2774
  %v2776 = vpop.f32.mrf.mxu0
  %v2777 = vadd.f32 0.0, %v2776
  %v2778 = vpop.f32.mrf.mxu0
  %v2779 = vpop.f32.mrf.mxu0
  %2780 = vdwg.mxu0
  %v2785 = vcombine.low %v2734, %v2736
  %v2786 = vcombine.low %v2775, %v2777
  %v2788 = vunpack.c.l.s4 1983009808
  %v2789 = vunpack.c.0.s8 %v2788
  %v2790 = vlaneseq
  %v2791 = vshrl.u32 %v2790, 7
  %v2792 = vsub.s32 %v2789, %v2791
  %v2793 = vrot.slane %v2785, %v2792
  %v2795 = vunpack.c.l.s4 1983009808
  %v2796 = vunpack.c.0.s8 %v2795
  %v2797 = vlaneseq
  %v2798 = vshrl.u32 %v2797, 7
  %v2799 = vsub.s32 %v2796, %v2798
  %v2800 = vrot.slane %v2786, %v2799
  %v2801 = vcombine.low %v2793, %v2800
  %v2803 = vadd.f32 %v2697, %v2801
  %v2804 = vsub.f32 0.0, %v2803
  %v2805 = vmul.f32 %v2804, 1.442695
  %v2806 = vpow.pop %v2805
  %v2807 = vadd.f32 %v2806, 1.0
  %v2808 = vrcp.pop %v2807
  %v2810 = vrot.slane %v2803, 2
  %v2812 = vsub.f32 0.0, %v2810
  %v2813 = vmul.f32 %v2812, 1.442695
  %v2814 = vpow.pop %v2813
  %v2815 = vadd.f32 %v2814, 1.0
  %v2816 = vrcp.pop %v2815
  %v2817 = vrot.slane %v2803, 4
  %v2819 = vtanh.pop %v2817
  %v2820 = vrot.slane %v2803, 6
  %v2822 = vsub.f32 0.0, %v2820
  %v2823 = vmul.f32 %v2822, 1.442695
  %v2824 = vpow.pop %v2823
  %v2825 = vadd.f32 %v2824, 1.0
  %v2826 = vrcp.pop %v2825
  %v2827 = vmul.f32 %v2816, %v2694
  %v2828 = vmul.f32 %v2808, %v2819
  %v2829 = vadd.f32 %v2827, %v2828
  %v2830 = vtanh.pop %v2829
  %v2831 = vmul.f32 %v2826, %v2830
  %v2832 = vld [vmem:[%s1825] sm:$0xff]
  %v2833 = vpack.c.bf16 %v2831, %v2831
  %2834 = vmatprep.subr.bf16.mxu0 %v1989
  %2835 = vmatpush1.bf16.msra.mxu0 %v1988
  %2836 = vmatprep.subr.bf16.mxu0 %v1985
  %2837 = vmatpush1.bf16.msra.mxu0 %v1984
  %2838 = vmatprep.subr.bf16.mxu0 %v1981
  %2839 = vmatpush1.bf16.msra.mxu0 %v1980
  %2840 = vmatprep.subr.bf16.mxu0 %v1977
  %2841 = vmatpush1.bf16.msra.mxu0 %v1976
  %2842 = vmatprep.subr.bf16.mxu0 %v1973
  %2843 = vmatpush1.bf16.msra.mxu0 %v1972
  %2844 = vmatprep.subr.bf16.mxu0 %v1969
  %2845 = vmatpush1.bf16.msra.mxu0 %v1968
  %2846 = vmatprep.subr.bf16.mxu0 %v1965
  %2847 = vmatpush1.bf16.msra.mxu0 %v1964
  %2848 = vmatprep.subr.bf16.mxu0 %v1961
  %2849 = vmatpush1.bf16.msra.mxu0 %v1960
  %2850 = vmatprep.subr.bf16.mxu0 0
  %2851 = vmatpush2.bf16.msra.mxu0 0
  %2852 = vmatprep.subr.bf16.mxu0 0
  %2853 = vmatpush2.bf16.msra.mxu0 0
  %2854 = vmatprep.subr.bf16.mxu0 0
  %2855 = vmatpush2.bf16.msra.mxu0 0
  %2856 = vmatprep.subr.bf16.mxu0 0
  %2857 = vmatpush2.bf16.msra.mxu0 0
  %2858 = vmatprep.subr.bf16.mxu0 0
  %2859 = vmatpush2.bf16.msra.mxu0 0
  %2860 = vmatprep.subr.bf16.mxu0 0
  %2861 = vmatpush2.bf16.msra.mxu0 0
  %2862 = vmatprep.subr.bf16.mxu0 0
  %2863 = vmatpush2.bf16.msra.mxu0 0
  %2864 = vmatprep.subr.bf16.mxu0 0
  %2865 = vmatpush2.bf16.msra.mxu0 0
  %2866 = vmatprep.mubr.bf16.mxu0 0
  %2867 = vmatmul.mubr.bf16.gmra.mxu0 %v2833
  %v2868 = vpop.f32.mrf.mxu0
  %v2869 = vadd.f32 0.0, %v2868
  %v2870 = vpop.f32.mrf.mxu0
  %v2871 = vadd.f32 0.0, %v2870
  %v2872 = vpop.f32.mrf.mxu0
  %v2873 = vpop.f32.mrf.mxu0
  %2874 = vdwg.mxu0
  %2875 = vmatprep.subr.bf16.mxu0 %v1991
  %2876 = vmatpush1.bf16.msra.mxu0 %v1990
  %2877 = vmatprep.subr.bf16.mxu0 %v1987
  %2878 = vmatpush1.bf16.msra.mxu0 %v1986
  %2879 = vmatprep.subr.bf16.mxu0 %v1983
  %2880 = vmatpush1.bf16.msra.mxu0 %v1982
  %2881 = vmatprep.subr.bf16.mxu0 %v1979
  %2882 = vmatpush1.bf16.msra.mxu0 %v1978
  %2883 = vmatprep.subr.bf16.mxu0 %v1975
  %2884 = vmatpush1.bf16.msra.mxu0 %v1974
  %2885 = vmatprep.subr.bf16.mxu0 %v1971
  %2886 = vmatpush1.bf16.msra.mxu0 %v1970
  %2887 = vmatprep.subr.bf16.mxu0 %v1967
  %2888 = vmatpush1.bf16.msra.mxu0 %v1966
  %2889 = vmatprep.subr.bf16.mxu0 %v1963
  %2890 = vmatpush1.bf16.msra.mxu0 %v1962
  %2891 = vmatprep.subr.bf16.mxu0 0
  %2892 = vmatpush2.bf16.msra.mxu0 0
  %2893 = vmatprep.subr.bf16.mxu0 0
  %2894 = vmatpush2.bf16.msra.mxu0 0
  %2895 = vmatprep.subr.bf16.mxu0 0
  %2896 = vmatpush2.bf16.msra.mxu0 0
  %2897 = vmatprep.subr.bf16.mxu0 0
  %2898 = vmatpush2.bf16.msra.mxu0 0
  %2899 = vmatprep.subr.bf16.mxu0 0
  %2900 = vmatpush2.bf16.msra.mxu0 0
  %2901 = vmatprep.subr.bf16.mxu0 0
  %2902 = vmatpush2.bf16.msra.mxu0 0
  %2903 = vmatprep.subr.bf16.mxu0 0
  %2904 = vmatpush2.bf16.msra.mxu0 0
  %2905 = vmatprep.subr.bf16.mxu0 0
  %2906 = vmatpush2.bf16.msra.mxu0 0
  %2907 = vmatprep.mubr.bf16.mxu0 0
  %2908 = vmatmul.mubr.bf16.gmra.mxu0 %v2833
  %v2909 = vpop.f32.mrf.mxu0
  %v2910 = vadd.f32 0.0, %v2909
  %v2911 = vpop.f32.mrf.mxu0
  %v2912 = vadd.f32 0.0, %v2911
  %v2913 = vpop.f32.mrf.mxu0
  %v2914 = vpop.f32.mrf.mxu0
  %2915 = vdwg.mxu0
  %v2920 = vcombine.low %v2869, %v2871
  %v2921 = vcombine.low %v2910, %v2912
  %v2923 = vunpack.c.l.s4 1983009808
  %v2924 = vunpack.c.0.s8 %v2923
  %v2925 = vlaneseq
  %v2926 = vshrl.u32 %v2925, 7
  %v2927 = vsub.s32 %v2924, %v2926
  %v2928 = vrot.slane %v2920, %v2927
  %v2930 = vunpack.c.l.s4 1983009808
  %v2931 = vunpack.c.0.s8 %v2930
  %v2932 = vlaneseq
  %v2933 = vshrl.u32 %v2932, 7
  %v2934 = vsub.s32 %v2931, %v2933
  %v2935 = vrot.slane %v2921, %v2934
  %v2936 = vcombine.low %v2928, %v2935
  %v2938 = vadd.f32 %v2832, %v2936
  %v2939 = vsub.f32 0.0, %v2938
  %v2940 = vmul.f32 %v2939, 1.442695
  %v2941 = vpow.pop %v2940
  %v2942 = vadd.f32 %v2941, 1.0
  %v2943 = vrcp.pop %v2942
  %v2945 = vrot.slane %v2938, 2
  %v2947 = vsub.f32 0.0, %v2945
  %v2948 = vmul.f32 %v2947, 1.442695
  %v2949 = vpow.pop %v2948
  %v2950 = vadd.f32 %v2949, 1.0
  %v2951 = vrcp.pop %v2950
  %v2952 = vrot.slane %v2938, 4
  %v2954 = vtanh.pop %v2952
  %v2955 = vrot.slane %v2938, 6
  %v2957 = vsub.f32 0.0, %v2955
  %v2958 = vmul.f32 %v2957, 1.442695
  %v2959 = vpow.pop %v2958
  %v2960 = vadd.f32 %v2959, 1.0
  %v2961 = vrcp.pop %v2960
  %v2962 = vmul.f32 %v2951, %v2829
  %v2963 = vmul.f32 %v2943, %v2954
  %v2964 = vadd.f32 %v2962, %v2963
  %v2965 = vtanh.pop %v2964
  %v2966 = vmul.f32 %v2961, %v2965
  %v2967 = vld [vmem:[%s1829] sm:$0xff]
  %v2968 = vpack.c.bf16 %v2966, %v2966
  %2969 = vmatprep.subr.bf16.mxu0 %v1989
  %2970 = vmatpush1.bf16.msra.mxu0 %v1988
  %2971 = vmatprep.subr.bf16.mxu0 %v1985
  %2972 = vmatpush1.bf16.msra.mxu0 %v1984
  %2973 = vmatprep.subr.bf16.mxu0 %v1981
  %2974 = vmatpush1.bf16.msra.mxu0 %v1980
  %2975 = vmatprep.subr.bf16.mxu0 %v1977
  %2976 = vmatpush1.bf16.msra.mxu0 %v1976
  %2977 = vmatprep.subr.bf16.mxu0 %v1973
  %2978 = vmatpush1.bf16.msra.mxu0 %v1972
  %2979 = vmatprep.subr.bf16.mxu0 %v1969
  %2980 = vmatpush1.bf16.msra.mxu0 %v1968
  %2981 = vmatprep.subr.bf16.mxu0 %v1965
  %2982 = vmatpush1.bf16.msra.mxu0 %v1964
  %2983 = vmatprep.subr.bf16.mxu0 %v1961
  %2984 = vmatpush1.bf16.msra.mxu0 %v1960
  %2985 = vmatprep.subr.bf16.mxu0 0
  %2986 = vmatpush2.bf16.msra.mxu0 0
  %2987 = vmatprep.subr.bf16.mxu0 0
  %2988 = vmatpush2.bf16.msra.mxu0 0
  %2989 = vmatprep.subr.bf16.mxu0 0
  %2990 = vmatpush2.bf16.msra.mxu0 0
  %2991 = vmatprep.subr.bf16.mxu0 0
  %2992 = vmatpush2.bf16.msra.mxu0 0
  %2993 = vmatprep.subr.bf16.mxu0 0
  %2994 = vmatpush2.bf16.msra.mxu0 0
  %2995 = vmatprep.subr.bf16.mxu0 0
  %2996 = vmatpush2.bf16.msra.mxu0 0
  %2997 = vmatprep.subr.bf16.mxu0 0
  %2998 = vmatpush2.bf16.msra.mxu0 0
  %2999 = vmatprep.subr.bf16.mxu0 0
  %3000 = vmatpush2.bf16.msra.mxu0 0
  %3001 = vmatprep.mubr.bf16.mxu0 0
  %3002 = vmatmul.mubr.bf16.gmra.mxu0 %v2968
  %v3003 = vpop.f32.mrf.mxu0
  %v3004 = vadd.f32 0.0, %v3003
  %v3005 = vpop.f32.mrf.mxu0
  %v3006 = vadd.f32 0.0, %v3005
  %v3007 = vpop.f32.mrf.mxu0
  %v3008 = vpop.f32.mrf.mxu0
  %3009 = vdwg.mxu0
  %3010 = vmatprep.subr.bf16.mxu0 %v1991
  %3011 = vmatpush1.bf16.msra.mxu0 %v1990
  %3012 = vmatprep.subr.bf16.mxu0 %v1987
  %3013 = vmatpush1.bf16.msra.mxu0 %v1986
  %3014 = vmatprep.subr.bf16.mxu0 %v1983
  %3015 = vmatpush1.bf16.msra.mxu0 %v1982
  %3016 = vmatprep.subr.bf16.mxu0 %v1979
  %3017 = vmatpush1.bf16.msra.mxu0 %v1978
  %3018 = vmatprep.subr.bf16.mxu0 %v1975
  %3019 = vmatpush1.bf16.msra.mxu0 %v1974
  %3020 = vmatprep.subr.bf16.mxu0 %v1971
  %3021 = vmatpush1.bf16.msra.mxu0 %v1970
  %3022 = vmatprep.subr.bf16.mxu0 %v1967
  %3023 = vmatpush1.bf16.msra.mxu0 %v1966
  %3024 = vmatprep.subr.bf16.mxu0 %v1963
  %3025 = vmatpush1.bf16.msra.mxu0 %v1962
  %3026 = vmatprep.subr.bf16.mxu0 0
  %3027 = vmatpush2.bf16.msra.mxu0 0
  %3028 = vmatprep.subr.bf16.mxu0 0
  %3029 = vmatpush2.bf16.msra.mxu0 0
  %3030 = vmatprep.subr.bf16.mxu0 0
  %3031 = vmatpush2.bf16.msra.mxu0 0
  %3032 = vmatprep.subr.bf16.mxu0 0
  %3033 = vmatpush2.bf16.msra.mxu0 0
  %3034 = vmatprep.subr.bf16.mxu0 0
  %3035 = vmatpush2.bf16.msra.mxu0 0
  %3036 = vmatprep.subr.bf16.mxu0 0
  %3037 = vmatpush2.bf16.msra.mxu0 0
  %3038 = vmatprep.subr.bf16.mxu0 0
  %3039 = vmatpush2.bf16.msra.mxu0 0
  %3040 = vmatprep.subr.bf16.mxu0 0
  %3041 = vmatpush2.bf16.msra.mxu0 0
  %3042 = vmatprep.mubr.bf16.mxu0 0
  %3043 = vmatmul.mubr.bf16.gmra.mxu0 %v2968
  %v3044 = vpop.f32.mrf.mxu0
  %v3045 = vadd.f32 0.0, %v3044
  %v3046 = vpop.f32.mrf.mxu0
  %v3047 = vadd.f32 0.0, %v3046
  %v3048 = vpop.f32.mrf.mxu0
  %v3049 = vpop.f32.mrf.mxu0
  %3050 = vdwg.mxu0
  %v3055 = vcombine.low %v3004, %v3006
  %v3056 = vcombine.low %v3045, %v3047
  %v3058 = vunpack.c.l.s4 1983009808
  %v3059 = vunpack.c.0.s8 %v3058
  %v3060 = vlaneseq
  %v3061 = vshrl.u32 %v3060, 7
  %v3062 = vsub.s32 %v3059, %v3061
  %v3063 = vrot.slane %v3055, %v3062
  %v3065 = vunpack.c.l.s4 1983009808
  %v3066 = vunpack.c.0.s8 %v3065
  %v3067 = vlaneseq
  %v3068 = vshrl.u32 %v3067, 7
  %v3069 = vsub.s32 %v3066, %v3068
  %v3070 = vrot.slane %v3056, %v3069
  %v3071 = vcombine.low %v3063, %v3070
  %v3073 = vadd.f32 %v2967, %v3071
  %v3074 = vsub.f32 0.0, %v3073
  %v3075 = vmul.f32 %v3074, 1.442695
  %v3076 = vpow.pop %v3075
  %v3077 = vadd.f32 %v3076, 1.0
  %v3078 = vrcp.pop %v3077
  %v3080 = vrot.slane %v3073, 2
  %v3082 = vsub.f32 0.0, %v3080
  %v3083 = vmul.f32 %v3082, 1.442695
  %v3084 = vpow.pop %v3083
  %v3085 = vadd.f32 %v3084, 1.0
  %v3086 = vrcp.pop %v3085
  %v3087 = vrot.slane %v3073, 4
  %v3089 = vtanh.pop %v3087
  %v3090 = vrot.slane %v3073, 6
  %v3092 = vsub.f32 0.0, %v3090
  %v3093 = vmul.f32 %v3092, 1.442695
  %v3094 = vpow.pop %v3093
  %v3095 = vadd.f32 %v3094, 1.0
  %v3096 = vrcp.pop %v3095
  %v3097 = vmul.f32 %v3086, %v2964
  %v3098 = vmul.f32 %v3078, %v3089
  %v3099 = vadd.f32 %v3097, %v3098
  %v3100 = vtanh.pop %v3099
  %v3101 = vmul.f32 %v3096, %v3100
  %v3102 = vpack.c.bf16 %v3101, %v3101
  %v3103 = vld [vmem:[%s7] sm:$0xf]
  %v3104 = vld [vmem:[%s7 + $0x4] sm:$0xf]
  %v3105 = vld [vmem:[%s7 + $0x8] sm:$0xf]
  %v3106 = vld [vmem:[%s7 + $0xc] sm:$0xf]
  %v3107 = vld [vmem:[%s7 + $0x10] sm:$0xf]
  %v3108 = vld [vmem:[%s7 + $0x14] sm:$0xf]
  %v3109 = vld [vmem:[%s7 + $0x18] sm:$0xf]
  %v3110 = vld [vmem:[%s7 + $0x1c] sm:$0xf]
  %v3111 = vld [vmem:[%s7 + $0x20] sm:$0xf]
  %v3112 = vld [vmem:[%s7 + $0x24] sm:$0xf]
  %v3113 = vld [vmem:[%s7 + $0x28] sm:$0xf]
  %v3114 = vld [vmem:[%s7 + $0x2c] sm:$0xf]
  %v3115 = vld [vmem:[%s7 + $0x30] sm:$0xf]
  %v3116 = vld [vmem:[%s7 + $0x34] sm:$0xf]
  %v3117 = vld [vmem:[%s7 + $0x38] sm:$0xf]
  %v3118 = vld [vmem:[%s7 + $0x3c] sm:$0xf]
  %v3119 = vld [vmem:[#allocation3] sm:$0x1]
  %v3121 = vlaneseq
  %v3122 = vshrl.u32 %v3121, 7
  %v3123 = vsub.s32 0, %v3122
  %v3124 = vrot.slane %v3119, %v3123
  %v3142 = vunpack.c.l.b16 %v3103
  %v3143 = vunpack.c.l.b16 %v3104
  %v3144 = vunpack.c.l.b16 %v3105
  %v3145 = vunpack.c.l.b16 %v3106
  %v3146 = vunpack.c.l.b16 %v3107
  %v3147 = vunpack.c.l.b16 %v3108
  %v3148 = vunpack.c.l.b16 %v3109
  %v3149 = vunpack.c.l.b16 %v3110
  %v3150 = vunpack.c.l.b16 %v3111
  %v3151 = vunpack.c.l.b16 %v3112
  %v3152 = vunpack.c.l.b16 %v3113
  %v3153 = vunpack.c.l.b16 %v3114
  %v3154 = vunpack.c.l.b16 %v3115
  %v3155 = vunpack.c.l.b16 %v3116
  %v3156 = vunpack.c.l.b16 %v3117
  %v3157 = vunpack.c.l.b16 %v3118
  %v3158 = vpack.c.b16 %v3143, %v3142
  %v3159 = vpack.c.b16 %v3145, %v3144
  %v3160 = vpack.c.b16 %v3147, %v3146
  %v3161 = vpack.c.b16 %v3149, %v3148
  %v3162 = vpack.c.b16 %v3151, %v3150
  %v3163 = vpack.c.b16 %v3153, %v3152
  %v3164 = vpack.c.b16 %v3155, %v3154
  %v3165 = vpack.c.b16 %v3157, %v3156
  %3174 = vmatprep.subr.bf16.mxu0 0
  %3175 = vmatpush1.bf16.msra.mxu0 %v3165
  %3176 = vmatprep.subr.bf16.mxu0 0
  %3177 = vmatpush1.bf16.msra.mxu0 %v3164
  %3178 = vmatprep.subr.bf16.mxu0 0
  %3179 = vmatpush1.bf16.msra.mxu0 %v3163
  %3180 = vmatprep.subr.bf16.mxu0 0
  %3181 = vmatpush1.bf16.msra.mxu0 %v3162
  %3182 = vmatprep.subr.bf16.mxu0 0
  %3183 = vmatpush1.bf16.msra.mxu0 %v3161
  %3184 = vmatprep.subr.bf16.mxu0 0
  %3185 = vmatpush1.bf16.msra.mxu0 %v3160
  %3186 = vmatprep.subr.bf16.mxu0 0
  %3187 = vmatpush1.bf16.msra.mxu0 %v3159
  %3188 = vmatprep.subr.bf16.mxu0 0
  %3189 = vmatpush1.bf16.msra.mxu0 %v3158
  %3190 = vmatprep.subr.bf16.mxu0 0
  %3191 = vmatpush2.bf16.msra.mxu0 0
  %3192 = vmatprep.subr.bf16.mxu0 0
  %3193 = vmatpush2.bf16.msra.mxu0 0
  %3194 = vmatprep.subr.bf16.mxu0 0
  %3195 = vmatpush2.bf16.msra.mxu0 0
  %3196 = vmatprep.subr.bf16.mxu0 0
  %3197 = vmatpush2.bf16.msra.mxu0 0
  %3198 = vmatprep.subr.bf16.mxu0 0
  %3199 = vmatpush2.bf16.msra.mxu0 0
  %3200 = vmatprep.subr.bf16.mxu0 0
  %3201 = vmatpush2.bf16.msra.mxu0 0
  %3202 = vmatprep.subr.bf16.mxu0 0
  %3203 = vmatpush2.bf16.msra.mxu0 0
  %3204 = vmatprep.subr.bf16.mxu0 0
  %3205 = vmatpush2.bf16.msra.mxu0 0
  %3206 = vmatprep.mubr.bf16.mxu0 0
  %3207 = vmatmul.mubr.bf16.gmra.mxu0 %v3102
  %v3208 = vpop.f32.mrf.mxu0
  %v3209 = vadd.f32 %v3124, %v3208
  %v3210 = vpop.f32.mrf.mxu0
  %v3211 = vpop.f32.mrf.mxu0
  %v3212 = vpop.f32.mrf.mxu0
  %3213 = vdwg.mxu0
  %vm3214 = vcmask 1024
  %3215 = vst.msk [vmem:[%s9] sm:$0x3] %vm3214, %v3209
  // Predicated region
  $region38: #{nnn_forward.1} parent=0 // pred_check
    _
  $region39: #{nnn_forward.1} parent=0 // pred_check_branch
    %3217 = sbr.rel (0) target = $region41
  $region40: #{nnn_forward.1} parent=0 // pred_region
    _
  $region41: #{nnn_forward.1} parent=0 // pred_fallthru
    _
  // Predicated region
  $region42: #{nnn_forward.1} parent=0 // pred_check
    _
  $region43: #{nnn_forward.1} parent=0 // pred_check_branch
    %3219 = sbr.rel (0) target = $region45
  $region44: #{nnn_forward.1} parent=0 // pred_region
    _
  $region45: #{nnn_forward.1} parent=0 // pred_fallthru
    _

</llo_original>
